<compile_context>
chip_gen: v7x
topology: tpu7x:2x2x1
jax: 0.10.0
libtpu: 0.0.40
codegen_flags: <defaults>
</compile_context>

<pallas_src>
import functools

import jax
import jax.numpy as jnp
from jax.experimental import pallas as pl
from jax.experimental.pallas import tpu as pltpu

EPS_BN = 1e-5        # PyTorch BatchNorm2d default eps
EPS_NORM = 1e-12     # PyTorch F.normalize default eps
C_IN = 32            # fixed by the module: Conv2d(32, dim_in, 3, 1, 1, bias=False)


def _round_up(x, m):
    return (x + m - 1) // m * m


# ---------------------------------------------------------------------------
# Kernel bodies
# ---------------------------------------------------------------------------
def _conv3x3_tile(x_ref, w3_ref, *, trh, w_img, c_in):
    """In-VMEM im2col of one (trh, W) row tile + a single lane-dense MXU matmul.

    x_ref : (trh+2, W+2, C_IN) bf16  (padded input rows of this tile)
    w3_ref: (KPAD, dim_pad)    bf16  (flattened 3x3 weights, K zero-padded)
    returns (trh*W, dim_pad) f32
    """
    xt = x_ref[...]
    # dx neighbours: 3 shifted slices along the W (sublane) axis, lane concat.
    pw = jnp.concatenate([xt[:, dx:dx + w_img, :] for dx in range(3)], axis=-1)
    # dy neighbours: slices along the leading row axis (addressing only).
    patches = jnp.concatenate([pw[dy:dy + trh] for dy in range(3)], axis=-1)
    k, kpad = 9 * c_in, w3_ref.shape[0]
    if kpad > k:  # pad K 288 -> 384 in VMEM only: lane-dense MXU K passes.
        patches = jnp.concatenate(
            [patches, jnp.zeros((trh, w_img, kpad - k), patches.dtype)], axis=-1)
    patches = patches.reshape(trh * w_img, kpad)
    return jnp.dot(patches, w3_ref[...], preferred_element_type=jnp.float32)


def _conv1x1(h, w_ref, b_ref):
    """(BN-folded) 1x1 conv: bf16 MXU operands, f32 accumulation, f32 bias."""
    z = jnp.dot(h.astype(jnp.bfloat16), w_ref[...],
                preferred_element_type=jnp.float32)
    return z + b_ref[...]


def _tile_stats(h):
    """Per-tile partial (sum, sum-of-squares) over rows -> (2, C) f32."""
    return jnp.concatenate([jnp.sum(h, axis=0, keepdims=True),
                            jnp.sum(h * h, axis=0, keepdims=True)], axis=0)


def _stats1_kernel(x_ref, w3_ref, s_ref, *, trh, w_img, c_in):
    h1 = _conv3x3_tile(x_ref, w3_ref, trh=trh, w_img=w_img, c_in=c_in)
    s_ref[...] = _tile_stats(h1)


def _stats2_kernel(x_ref, w3_ref, w1_ref, b1_ref, s_ref, *, trh, w_img, c_in):
    h1 = _conv3x3_tile(x_ref, w3_ref, trh=trh, w_img=w_img, c_in=c_in)
    h2 = _conv1x1(h1, w1_ref, b1_ref)
    s_ref[...] = _tile_stats(h2)


def _apply_kernel(x_ref, w3_ref, w1_ref, b1_ref, w2_ref, b2_ref, o_ref, *,
                  trh, w_img, c_in):
    h1 = _conv3x3_tile(x_ref, w3_ref, trh=trh, w_img=w_img, c_in=c_in)
    h2 = _conv1x1(h1, w1_ref, b1_ref)
    y = _conv1x1(h2, w2_ref, b2_ref)
    # F.normalize(p=2, dim=channel); padded channels are exactly zero, so they
    # do not perturb the norm.  rsqrt goes to the EUP slot (free next to MXU).
    ssq = jnp.sum(y * y, axis=-1, keepdims=True)
    y = y * jax.lax.rsqrt(jnp.maximum(ssq, EPS_NORM * EPS_NORM))
    o_ref[...] = y.astype(o_ref.dtype)            # lane-dense (trh*W, proj_pad)


# ---------------------------------------------------------------------------
# Pass runner / sizing / BN fold (wrapper side)
# ---------------------------------------------------------------------------
def _run_pass(kernel, xh, weights, out_shape, out_block, out_map, vmem_limit):
    """One tiled pass over the pixel-row tiles.  Weights stay VMEM-resident."""
    n_tiles, trh_p2, w2_img, c_in = xh.shape
    x_spec = pl.BlockSpec((None, trh_p2, w2_img, c_in), lambda t: (t, 0, 0, 0))
    w_specs = [pl.BlockSpec(w.shape, lambda t: (0, 0)) for w in weights]
    return pl.pallas_call(
        kernel,
        out_shape=out_shape,
        grid_spec=pltpu.PrefetchScalarGridSpec(
            num_scalar_prefetch=0,
            grid=(n_tiles,),
            in_specs=[x_spec] + w_specs,
            out_specs=pl.BlockSpec(out_block, out_map)),
        compiler_params=pltpu.CompilerParams(
            dimension_semantics=("parallel",),     # megacore-splittable (v7x)
            vmem_limit_bytes=vmem_limit),
    )(xh, *weights)


def _vmem_caps():
    """Per-generation VMEM sizing (v7x: 64 MiB, v5e/v6e: 128 MiB physical)."""
    cap = 64 * 1024 * 1024            # conservative fallback (v7x-sized)
    try:
        cap = int(getattr(pltpu.get_tpu_info(), "vmem_capacity_bytes", cap))
    except Exception:
        pass
    budget = min(int(cap * 0.45), 56 * 1024 * 1024)     # per-tile working set
    limit = min(int(cap * 3 // 4), 100 * 1024 * 1024)   # scoped VMEM limit
    return budget, limit


def _pick_trh(h_img, w_img, c_in, kpad, dim_pad, proj_pad, budget, max_rows):
    """Largest whole-image-row tile height that fits the VMEM budget."""
    def tile_bytes(trh):
        rows = trh * w_img
        x_blk = 2 * (trh + 2) * _round_up(w_img + 2, 8) * 128 * 2   # bf16, 2 bufs
        patches = rows * kpad * 2                                   # bf16 scratch
        acts = rows * (2 * dim_pad + proj_pad) * 4                  # h1, h2, y f32
        out_blk = 2 * rows * proj_pad * 4                           # f32, 2 bufs
        return x_blk + patches + acts + out_blk

    legal = [t for t in range(1, h_img + 1)
             if h_img % t == 0 and (t * w_img) % 8 == 0]
    if not legal:
        # TODO(synk): pad the pixel-row count when H*W is not a multiple of 8.
        raise ValueError("H*W must be a multiple of 8 for this tiling")
    fit = [t for t in legal
           if tile_bytes(t) <= budget
           and (max_rows is None or t * w_img <= max_rows)]
    return max(fit) if fit else min(legal)


def _bn_fold_into_conv(stats, inv_rows, gamma, beta, w, b):
    """Fold training-mode BatchNorm (biased batch var) into the NEXT 1x1 conv.

    Computed once per pass in the wrapper (hoisted out of the per-tile loop).
    stats: (2, C) = reduced (sum, sumsq) over all N*H*W rows.
    """
    mu = stats[0] * inv_rows
    var = jnp.maximum(stats[1] * inv_rows - mu * mu, 0.0)
    scale = gamma[0] * jax.lax.rsqrt(var + EPS_BN)           # (C,)
    shift = beta[0] - mu * scale                             # (C,)
    w_fold = (w * scale[:, None]).astype(jnp.bfloat16)       # scale input rows
    b_fold = (b + shift[None, :] @ w).astype(jnp.float32)    # tiny matvec
    return w_fold, b_fold


# ---------------------------------------------------------------------------
# Forward
# ---------------------------------------------------------------------------
@functools.partial(jax.jit, static_argnames=("max_rows_per_tile", "channels_last"))
def projection_head_forward(x_nchw, params, *, max_rows_per_tile=None,
                            channels_last=False):
    """x_nchw: (N, 32, H, W) f32 -> (N, proj_dim, H, W) f32 (NCHW, like PyTorch)."""
    n, c_in, h_img, w_img = x_nchw.shape
    assert c_in == C_IN, "module fixes the conv3x3 input channels at 32"
    dim_in = params["w1"].shape[0]
    proj_dim = params["w2"].shape[1]
    dim_pad = _round_up(dim_in, 128)
    proj_pad = _round_up(proj_dim, 128)
    kpad = _round_up(9 * c_in, 128)                 # 288 -> 384
    rows = n * h_img * w_img

    budget, vmem_limit = _vmem_caps()
    trh = _pick_trh(h_img, w_img, c_in, kpad, dim_pad, proj_pad, budget,
                    max_rows_per_tile)
    num_r = h_img // trh
    n_tiles = n * num_r

    def pad_to(a, shape):
        return jnp.pad(a, [(0, t - s) for s, t in zip(a.shape, shape)])

    # ---- input prep: NHWC + 1px zero halo + overlapping row-window tiles ----
    # Only a (trh+2)/trh duplication of the raw bf16 input reaches HBM instead
    # of a 4.5x-inflated im2col patch array (im2col now runs in VMEM).
    x = jnp.transpose(x_nchw, (0, 2, 3, 1))
    xpad = jnp.pad(x, ((0, 0), (1, 1), (1, 1), (0, 0)))
    xh = jnp.stack([xpad[:, r * trh:r * trh + trh + 2] for r in range(num_r)],
                   axis=1)
    xh = xh.reshape(n_tiles, trh + 2, w_img + 2, c_in).astype(jnp.bfloat16)

    # ---- weights: zero-pad channel dims to 128 lanes (padded chans stay 0) ---
    w3 = pad_to(params["w3"].reshape(9 * c_in, dim_in),
                (kpad, dim_pad)).astype(jnp.bfloat16)
    g1 = pad_to(params["g1"], (1, dim_pad))
    be1 = pad_to(params["be1"], (1, dim_pad))
    w1 = pad_to(params["w1"], (dim_pad, dim_pad))
    b1 = pad_to(params["b1"], (1, dim_pad))
    g2 = pad_to(params["g2"], (1, dim_pad))
    be2 = pad_to(params["be2"], (1, dim_pad))
    w2 = pad_to(params["w2"], (dim_pad, proj_pad))
    b2 = pad_to(params["b2"], (1, proj_pad))

    kargs = dict(trh=trh, w_img=w_img, c_in=c_in)
    stats_shape = jax.ShapeDtypeStruct((n_tiles, 2, dim_pad), jnp.float32)
    stats_block = (None, 2, dim_pad)
    stats_map = lambda t: (t, 0, 0)

    # ---- pass 1: conv3x3 -> per-tile BN1 partial stats -----------------------
    s1 = _run_pass(functools.partial(_stats1_kernel, **kargs), xh, [w3],
                   stats_shape, stats_block, stats_map, vmem_limit)
    w1f, b1f = _bn_fold_into_conv(jnp.sum(s1, axis=0), 1.0 / rows,
                                  g1, be1, w1, b1)

    # ---- pass 2: conv3x3 -> folded BN1*conv1x1 -> per-tile BN2 partial stats -
    s2 = _run_pass(functools.partial(_stats2_kernel, **kargs), xh,
                   [w3, w1f, b1f], stats_shape, stats_block, stats_map,
                   vmem_limit)
    w2f, b2f = _bn_fold_into_conv(jnp.sum(s2, axis=0), 1.0 / rows,
                                  g2, be2, w2, b2)

    # ---- pass 3: full apply + L2 normalize, lane-dense (rows, proj_pad) out --
    out2d = _run_pass(
        functools.partial(_apply_kernel, **kargs), xh,
        [w3, w1f, b1f, w2f, b2f],
        jax.ShapeDtypeStruct((rows, proj_pad), jnp.float32),
        (trh * w_img, proj_pad), lambda t: (t, 0), vmem_limit)

    # Strip lane padding.  XLA fuses strip + reshape (+ transpose) into a
    # single copy; channels_last=True skips the NHWC->NCHW transpose entirely.
    out = out2d[:, :proj_dim].reshape(n, h_img, w_img, proj_dim)
    if channels_last:
        return out
    return jnp.transpose(out, (0, 3, 1, 2))


# ---------------------------------------------------------------------------
# Params / reference / demo
# ---------------------------------------------------------------------------
def init_params(key, dim_in, proj_dim, c_in=C_IN):
    k3, k1, kb1, k2, kb2 = jax.random.split(key, 5)

    def uniform(k, shape, fan_in):
        bound = 1.0 / jnp.sqrt(jnp.float32(fan_in))
        return jax.random.uniform(k, shape, jnp.float32, -bound, bound)

    return {
        # Conv2d(32, dim_in, 3) weight, stored as (kh, kw, C_in, dim_in)
        "w3": uniform(k3, (3, 3, c_in, dim_in), c_in * 9),
        # BatchNorm2d(dim_in) affine (PyTorch default init)
        "g1": jnp.ones((1, dim_in), jnp.float32),
        "be1": jnp.zeros((1, dim_in), jnp.float32),
        # Conv2d(dim_in, dim_in, 1) weight/bias, stored as (C_in, C_out)
        "w1": uniform(k1, (dim_in, dim_in), dim_in),
        "b1": uniform(kb1, (1, dim_in), dim_in),
        "g2": jnp.ones((1, dim_in), jnp.float32),
        "be2": jnp.zeros((1, dim_in), jnp.float32),
        # Conv2d(dim_in, proj_dim, 1) weight/bias
        "w2": uniform(k2, (dim_in, proj_dim), dim_in),
        "b2": uniform(kb2, (1, proj_dim), dim_in),
    }


def _reference_forward(x_nchw, params):
    """Pure-JAX reference of the module (same bf16 operand rounding)."""
    q = lambda a: a.astype(jnp.bfloat16).astype(jnp.float32)
    x = q(jnp.transpose(x_nchw, (0, 2, 3, 1)))
    h1 = jax.lax.conv_general_dilated(
        x, q(params["w3"]), window_strides=(1, 1), padding="SAME",
        dimension_numbers=("NHWC", "HWIO", "NHWC"))

    def bn(t, g, b):
        mu = jnp.mean(t, axis=(0, 1, 2))
        var = jnp.mean(jnp.square(t - mu), axis=(0, 1, 2))
        return (t - mu) * jax.lax.rsqrt(var + EPS_BN) * g[0] + b[0]

    h2 = q(bn(h1, params["g1"], params["be1"])) @ q(params["w1"]) + params["b1"][0]
    y = q(bn(h2, params["g2"], params["be2"])) @ q(params["w2"]) + params["b2"][0]
    nrm = jnp.sqrt(jnp.sum(y * y, axis=-1, keepdims=True))
    y = y / jnp.maximum(nrm, EPS_NORM)
    return jnp.transpose(y, (0, 3, 1, 2))


if __name__ == "__main__":
    # Small shapes: batch=2, in-channels=32 (fixed by the module), 16x16
    # spatial, dim_in=32, proj_dim=64.  max_rows_per_tile=128 caps the row tile
    # so the demo exercises the multi-tile grid and cross-tile BN reduction.
    N, H, W = 2, 16, 16
    DIM_IN, PROJ_DIM = 32, 64

    key = jax.random.PRNGKey(0)
    kx, kp = jax.random.split(key)
    x = jax.random.normal(kx, (N, C_IN, H, W), jnp.float32)
    params = init_params(kp, DIM_IN, PROJ_DIM)

    out = projection_head_forward(x, params, max_rows_per_tile=128)
    out = jax.block_until_ready(out)
    assert out.shape == (N, PROJ_DIM, H, W)

    # Per-pixel channel vectors must be unit-norm after F.normalize.
    norms = jnp.sqrt(jnp.sum(out * out, axis=1))
    assert bool(jnp.all(jnp.abs(norms - 1.0) < 1e-3)), "norms off"

    # Cross-check the whole module against a pure-JAX reference.
    ref = _reference_forward(x, params)
    max_err = float(jnp.max(jnp.abs(out - ref)))
    assert max_err < 2e-2, f"max |kernel - reference| = {max_err}"

    print("KERNEL_OK")
</pallas_src>

<mosaic_0001>
module attributes {stable_mosaic.version = 11 : i64} {
  func.func @_stats1_kernel(%arg0: i32, %arg1: memref<1x10x18x32xbf16, #tpu.memory_space<vmem>>, %arg2: memref<384x128xbf16, #tpu.memory_space<vmem>>, %arg3: memref<1x2x128xf32, #tpu.memory_space<vmem>>) attributes {dimension_semantics = [#tpu.dimension_semantics<parallel>], iteration_bounds = array<i64: 4>, scalar_prefetch = 0 : i64, scratch_operands = 0 : i64, tpu.core_type = #tpu.core_type<tc>, window_params = [{transform_indices = @transform_0, window_bounds = array<i64: 1, 10, 18, 32>}, {pipeline_mode = #tpu.pipeline_mode<synchronous>, transform_indices = @transform_1, window_bounds = array<i64: 384, 128>}, {transform_indices = @transform_2, window_bounds = array<i64: 1, 2, 128>}]} {
    %c0 = arith.constant 0 : index
    %c0_0 = arith.constant 0 : index
    %c0_1 = arith.constant 0 : index
    %c0_2 = arith.constant 0 : index
    %0 = vector.load %arg1[%c0, %c0_0, %c0_1, %c0_2] : memref<1x10x18x32xbf16, #tpu.memory_space<vmem>>, vector<1x10x18x32xbf16>
    %1 = vector.shape_cast %0 : vector<1x10x18x32xbf16> to vector<10x18x32xbf16>
    %2 = vector.extract_strided_slice %1 {offsets = [0, 0, 0], sizes = [10, 16, 32], strides = [1, 1, 1]} : vector<10x18x32xbf16> to vector<10x16x32xbf16>
    %3 = vector.extract_strided_slice %1 {offsets = [0, 1, 0], sizes = [10, 16, 32], strides = [1, 1, 1]} : vector<10x18x32xbf16> to vector<10x16x32xbf16>
    %4 = vector.extract_strided_slice %1 {offsets = [0, 2, 0], sizes = [10, 16, 32], strides = [1, 1, 1]} : vector<10x18x32xbf16> to vector<10x16x32xbf16>
    %5 = tpu.concatenate %2, %3, %4 in 2 : vector<10x16x32xbf16>, vector<10x16x32xbf16>, vector<10x16x32xbf16> -> vector<10x16x96xbf16>
    %6 = vector.extract_strided_slice %5 {offsets = [0, 0, 0], sizes = [8, 16, 96], strides = [1, 1, 1]} : vector<10x16x96xbf16> to vector<8x16x96xbf16>
    %7 = vector.extract_strided_slice %5 {offsets = [1, 0, 0], sizes = [8, 16, 96], strides = [1, 1, 1]} : vector<10x16x96xbf16> to vector<8x16x96xbf16>
    %8 = vector.extract_strided_slice %5 {offsets = [2, 0, 0], sizes = [8, 16, 96], strides = [1, 1, 1]} : vector<10x16x96xbf16> to vector<8x16x96xbf16>
    %9 = tpu.concatenate %6, %7, %8 in 2 : vector<8x16x96xbf16>, vector<8x16x96xbf16>, vector<8x16x96xbf16> -> vector<8x16x288xbf16>
    %cst = arith.constant 0.000000e+00 : bf16
    %10 = vector.broadcast %cst : bf16 to vector<8x16x96xbf16>
    %11 = tpu.concatenate %9, %10 in 2 : vector<8x16x288xbf16>, vector<8x16x96xbf16> -> vector<8x16x384xbf16>
    %12 = vector.shape_cast %11 : vector<8x16x384xbf16> to vector<128x384xbf16>
    %c0_3 = arith.constant 0 : index
    %c0_4 = arith.constant 0 : index
    %13 = vector.load %arg2[%c0_3, %c0_4] : memref<384x128xbf16, #tpu.memory_space<vmem>>, vector<384x128xbf16>
    %cst_5 = arith.constant dense<0.000000e+00> : vector<128x128xf32>
    %14 = tpu.matmul %12, %13, %cst_5 {dimension_numbers = #tpu.dot_dimension_numbers<[1], [0], [0], [1], [0, 0, 1, 1], [], []>} : vector<128x384xbf16>, vector<384x128xbf16>, vector<128x128xf32> -> vector<128x128xf32>
    %cst_6 = arith.constant dense<0.000000e+00> : vector<128xf32>
    %15 = vector.multi_reduction <add>, %14, %cst_6 [0] : vector<128x128xf32> to vector<128xf32>
    %16 = vector.shape_cast %15 : vector<128xf32> to vector<1x128xf32>
    %17 = arith.mulf %14, %14 : vector<128x128xf32>
    %cst_7 = arith.constant dense<0.000000e+00> : vector<128xf32>
    %18 = vector.multi_reduction <add>, %17, %cst_7 [0] : vector<128x128xf32> to vector<128xf32>
    %19 = vector.shape_cast %18 : vector<128xf32> to vector<1x128xf32>
    %20 = tpu.concatenate %16, %19 in 0 : vector<1x128xf32>, vector<1x128xf32> -> vector<2x128xf32>
    %c0_8 = arith.constant 0 : index
    %c0_9 = arith.constant 0 : index
    %c0_10 = arith.constant 0 : index
    %21 = vector.load %arg3[%c0_8, %c0_9, %c0_10] : memref<1x2x128xf32, #tpu.memory_space<vmem>>, vector<1x2x128xf32>
    %22 = vector.shape_cast %21 : vector<1x2x128xf32> to vector<2x128xf32>
    %23 = vector.shape_cast %20 : vector<2x128xf32> to vector<1x2x128xf32>
    tpu.vector_store %arg3[%c0_8, %c0_9, %c0_10], %23 {strides = array<i32>} : memref<1x2x128xf32, #tpu.memory_space<vmem>>, vector<1x2x128xf32>,
    return
  }
  func.func @transform_0(%arg0: i32) -> (i32, i32, i32, i32) {
    %c0_i32 = arith.constant 0 : i32
    %c0_i32_0 = arith.constant 0 : i32
    %c0_i32_1 = arith.constant 0 : i32
    %c0_i32_2 = arith.constant 0 : i32
    return %arg0, %c0_i32, %c0_i32_0, %c0_i32_1 : i32, i32, i32, i32
  }
  func.func @transform_1(%arg0: i32) -> (i32, i32) {
    %c0_i32 = arith.constant 0 : i32
    %c0_i32_0 = arith.constant 0 : i32
    %c0_i32_1 = arith.constant 0 : i32
    return %c0_i32, %c0_i32_0 : i32, i32
  }
  func.func @transform_2(%arg0: i32) -> (i32, i32, i32) {
    %c0_i32 = arith.constant 0 : i32
    %c0_i32_0 = arith.constant 0 : i32
    %c0_i32_1 = arith.constant 0 : i32
    return %arg0, %c0_i32, %c0_i32_0 : i32, i32, i32
  }
}

module attributes {stable_mosaic.version = 11 : i64} {
  func.func @_stats2_kernel(%arg0: i32, %arg1: memref<1x10x18x32xbf16, #tpu.memory_space<vmem>>, %arg2: memref<384x128xbf16, #tpu.memory_space<vmem>>, %arg3: memref<128x128xbf16, #tpu.memory_space<vmem>>, %arg4: memref<1x128xf32, #tpu.memory_space<vmem>>, %arg5: memref<1x2x128xf32, #tpu.memory_space<vmem>>) attributes {dimension_semantics = [#tpu.dimension_semantics<parallel>], iteration_bounds = array<i64: 4>, scalar_prefetch = 0 : i64, scratch_operands = 0 : i64, tpu.core_type = #tpu.core_type<tc>, window_params = [{transform_indices = @transform_0, window_bounds = array<i64: 1, 10, 18, 32>}, {pipeline_mode = #tpu.pipeline_mode<synchronous>, transform_indices = @transform_1, window_bounds = array<i64: 384, 128>}, {pipeline_mode = #tpu.pipeline_mode<synchronous>, transform_indices = @transform_2, window_bounds = array<i64: 128, 128>}, {pipeline_mode = #tpu.pipeline_mode<synchronous>, transform_indices = @transform_3, window_bounds = array<i64: 1, 128>}, {transform_indices = @transform_4, window_bounds = array<i64: 1, 2, 128>}]} {
    %c0 = arith.constant 0 : index
    %c0_0 = arith.constant 0 : index
    %c0_1 = arith.constant 0 : index
    %c0_2 = arith.constant 0 : index
    %0 = vector.load %arg1[%c0, %c0_0, %c0_1, %c0_2] : memref<1x10x18x32xbf16, #tpu.memory_space<vmem>>, vector<1x10x18x32xbf16>
    %1 = vector.shape_cast %0 : vector<1x10x18x32xbf16> to vector<10x18x32xbf16>
    %2 = vector.extract_strided_slice %1 {offsets = [0, 0, 0], sizes = [10, 16, 32], strides = [1, 1, 1]} : vector<10x18x32xbf16> to vector<10x16x32xbf16>
    %3 = vector.extract_strided_slice %1 {offsets = [0, 1, 0], sizes = [10, 16, 32], strides = [1, 1, 1]} : vector<10x18x32xbf16> to vector<10x16x32xbf16>
    %4 = vector.extract_strided_slice %1 {offsets = [0, 2, 0], sizes = [10, 16, 32], strides = [1, 1, 1]} : vector<10x18x32xbf16> to vector<10x16x32xbf16>
    %5 = tpu.concatenate %2, %3, %4 in 2 : vector<10x16x32xbf16>, vector<10x16x32xbf16>, vector<10x16x32xbf16> -> vector<10x16x96xbf16>
    %6 = vector.extract_strided_slice %5 {offsets = [0, 0, 0], sizes = [8, 16, 96], strides = [1, 1, 1]} : vector<10x16x96xbf16> to vector<8x16x96xbf16>
    %7 = vector.extract_strided_slice %5 {offsets = [1, 0, 0], sizes = [8, 16, 96], strides = [1, 1, 1]} : vector<10x16x96xbf16> to vector<8x16x96xbf16>
    %8 = vector.extract_strided_slice %5 {offsets = [2, 0, 0], sizes = [8, 16, 96], strides = [1, 1, 1]} : vector<10x16x96xbf16> to vector<8x16x96xbf16>
    %9 = tpu.concatenate %6, %7, %8 in 2 : vector<8x16x96xbf16>, vector<8x16x96xbf16>, vector<8x16x96xbf16> -> vector<8x16x288xbf16>
    %cst = arith.constant 0.000000e+00 : bf16
    %10 = vector.broadcast %cst : bf16 to vector<8x16x96xbf16>
    %11 = tpu.concatenate %9, %10 in 2 : vector<8x16x288xbf16>, vector<8x16x96xbf16> -> vector<8x16x384xbf16>
    %12 = vector.shape_cast %11 : vector<8x16x384xbf16> to vector<128x384xbf16>
    %c0_3 = arith.constant 0 : index
    %c0_4 = arith.constant 0 : index
    %13 = vector.load %arg2[%c0_3, %c0_4] : memref<384x128xbf16, #tpu.memory_space<vmem>>, vector<384x128xbf16>
    %cst_5 = arith.constant dense<0.000000e+00> : vector<128x128xf32>
    %14 = tpu.matmul %12, %13, %cst_5 {dimension_numbers = #tpu.dot_dimension_numbers<[1], [0], [0], [1], [0, 0, 1, 1], [], []>} : vector<128x384xbf16>, vector<384x128xbf16>, vector<128x128xf32> -> vector<128x128xf32>
    %15 = arith.truncf %14 : vector<128x128xf32> to vector<128x128xbf16>
    %c0_6 = arith.constant 0 : index
    %c0_7 = arith.constant 0 : index
    %16 = vector.load %arg3[%c0_6, %c0_7] : memref<128x128xbf16, #tpu.memory_space<vmem>>, vector<128x128xbf16>
    %cst_8 = arith.constant dense<0.000000e+00> : vector<128x128xf32>
    %17 = tpu.matmul %15, %16, %cst_8 {dimension_numbers = #tpu.dot_dimension_numbers<[1], [0], [0], [1], [0, 0, 1, 1], [], []>} : vector<128x128xbf16>, vector<128x128xbf16>, vector<128x128xf32> -> vector<128x128xf32>
    %c0_9 = arith.constant 0 : index
    %c0_10 = arith.constant 0 : index
    %18 = vector.load %arg4[%c0_9, %c0_10] : memref<1x128xf32, #tpu.memory_space<vmem>>, vector<1x128xf32>
    %19 = vector.broadcast %18 : vector<1x128xf32> to vector<128x128xf32>
    %20 = arith.addf %17, %19 : vector<128x128xf32>
    %cst_11 = arith.constant dense<0.000000e+00> : vector<128xf32>
    %21 = vector.multi_reduction <add>, %20, %cst_11 [0] : vector<128x128xf32> to vector<128xf32>
    %22 = vector.shape_cast %21 : vector<128xf32> to vector<1x128xf32>
    %23 = arith.mulf %20, %20 : vector<128x128xf32>
    %cst_12 = arith.constant dense<0.000000e+00> : vector<128xf32>
    %24 = vector.multi_reduction <add>, %23, %cst_12 [0] : vector<128x128xf32> to vector<128xf32>
    %25 = vector.shape_cast %24 : vector<128xf32> to vector<1x128xf32>
    %26 = tpu.concatenate %22, %25 in 0 : vector<1x128xf32>, vector<1x128xf32> -> vector<2x128xf32>
    %c0_13 = arith.constant 0 : index
    %c0_14 = arith.constant 0 : index
    %c0_15 = arith.constant 0 : index
    %27 = vector.load %arg5[%c0_13, %c0_14, %c0_15] : memref<1x2x128xf32, #tpu.memory_space<vmem>>, vector<1x2x128xf32>
    %28 = vector.shape_cast %27 : vector<1x2x128xf32> to vector<2x128xf32>
    %29 = vector.shape_cast %26 : vector<2x128xf32> to vector<1x2x128xf32>
    tpu.vector_store %arg5[%c0_13, %c0_14, %c0_15], %29 {strides = array<i32>} : memref<1x2x128xf32, #tpu.memory_space<vmem>>, vector<1x2x128xf32>,
    return
  }
  func.func @transform_0(%arg0: i32) -> (i32, i32, i32, i32) {
    %c0_i32 = arith.constant 0 : i32
    %c0_i32_0 = arith.constant 0 : i32
    %c0_i32_1 = arith.constant 0 : i32
    %c0_i32_2 = arith.constant 0 : i32
    return %arg0, %c0_i32, %c0_i32_0, %c0_i32_1 : i32, i32, i32, i32
  }
  func.func @transform_1(%arg0: i32) -> (i32, i32) {
    %c0_i32 = arith.constant 0 : i32
    %c0_i32_0 = arith.constant 0 : i32
    %c0_i32_1 = arith.constant 0 : i32
    return %c0_i32, %c0_i32_0 : i32, i32
  }
  func.func @transform_2(%arg0: i32) -> (i32, i32) {
    %c0_i32 = arith.constant 0 : i32
    %c0_i32_0 = arith.constant 0 : i32
    %c0_i32_1 = arith.constant 0 : i32
    return %c0_i32, %c0_i32_0 : i32, i32
  }
  func.func @transform_3(%arg0: i32) -> (i32, i32) {
    %c0_i32 = arith.constant 0 : i32
    %c0_i32_0 = arith.constant 0 : i32
    %c0_i32_1 = arith.constant 0 : i32
    return %c0_i32, %c0_i32_0 : i32, i32
  }
  func.func @transform_4(%arg0: i32) -> (i32, i32, i32) {
    %c0_i32 = arith.constant 0 : i32
    %c0_i32_0 = arith.constant 0 : i32
    %c0_i32_1 = arith.constant 0 : i32
    return %arg0, %c0_i32, %c0_i32_0 : i32, i32, i32
  }
}

module attributes {stable_mosaic.version = 11 : i64} {
  func.func @_apply_kernel(%arg0: i32, %arg1: memref<1x10x18x32xbf16, #tpu.memory_space<vmem>>, %arg2: memref<384x128xbf16, #tpu.memory_space<vmem>>, %arg3: memref<128x128xbf16, #tpu.memory_space<vmem>>, %arg4: memref<1x128xf32, #tpu.memory_space<vmem>>, %arg5: memref<128x128xbf16, #tpu.memory_space<vmem>>, %arg6: memref<1x128xf32, #tpu.memory_space<vmem>>, %arg7: memref<128x128xf32, #tpu.memory_space<vmem>>) attributes {dimension_semantics = [#tpu.dimension_semantics<parallel>], iteration_bounds = array<i64: 4>, scalar_prefetch = 0 : i64, scratch_operands = 0 : i64, tpu.core_type = #tpu.core_type<tc>, window_params = [{transform_indices = @transform_0, window_bounds = array<i64: 1, 10, 18, 32>}, {pipeline_mode = #tpu.pipeline_mode<synchronous>, transform_indices = @transform_1, window_bounds = array<i64: 384, 128>}, {pipeline_mode = #tpu.pipeline_mode<synchronous>, transform_indices = @transform_2, window_bounds = array<i64: 128, 128>}, {pipeline_mode = #tpu.pipeline_mode<synchronous>, transform_indices = @transform_3, window_bounds = array<i64: 1, 128>}, {pipeline_mode = #tpu.pipeline_mode<synchronous>, transform_indices = @transform_4, window_bounds = array<i64: 128, 128>}, {pipeline_mode = #tpu.pipeline_mode<synchronous>, transform_indices = @transform_5, window_bounds = array<i64: 1, 128>}, {transform_indices = @transform_6, window_bounds = array<i64: 128, 128>}]} {
    %c0 = arith.constant 0 : index
    %c0_0 = arith.constant 0 : index
    %c0_1 = arith.constant 0 : index
    %c0_2 = arith.constant 0 : index
    %0 = vector.load %arg1[%c0, %c0_0, %c0_1, %c0_2] : memref<1x10x18x32xbf16, #tpu.memory_space<vmem>>, vector<1x10x18x32xbf16>
    %1 = vector.shape_cast %0 : vector<1x10x18x32xbf16> to vector<10x18x32xbf16>
    %2 = vector.extract_strided_slice %1 {offsets = [0, 0, 0], sizes = [10, 16, 32], strides = [1, 1, 1]} : vector<10x18x32xbf16> to vector<10x16x32xbf16>
    %3 = vector.extract_strided_slice %1 {offsets = [0, 1, 0], sizes = [10, 16, 32], strides = [1, 1, 1]} : vector<10x18x32xbf16> to vector<10x16x32xbf16>
    %4 = vector.extract_strided_slice %1 {offsets = [0, 2, 0], sizes = [10, 16, 32], strides = [1, 1, 1]} : vector<10x18x32xbf16> to vector<10x16x32xbf16>
    %5 = tpu.concatenate %2, %3, %4 in 2 : vector<10x16x32xbf16>, vector<10x16x32xbf16>, vector<10x16x32xbf16> -> vector<10x16x96xbf16>
    %6 = vector.extract_strided_slice %5 {offsets = [0, 0, 0], sizes = [8, 16, 96], strides = [1, 1, 1]} : vector<10x16x96xbf16> to vector<8x16x96xbf16>
    %7 = vector.extract_strided_slice %5 {offsets = [1, 0, 0], sizes = [8, 16, 96], strides = [1, 1, 1]} : vector<10x16x96xbf16> to vector<8x16x96xbf16>
    %8 = vector.extract_strided_slice %5 {offsets = [2, 0, 0], sizes = [8, 16, 96], strides = [1, 1, 1]} : vector<10x16x96xbf16> to vector<8x16x96xbf16>
    %9 = tpu.concatenate %6, %7, %8 in 2 : vector<8x16x96xbf16>, vector<8x16x96xbf16>, vector<8x16x96xbf16> -> vector<8x16x288xbf16>
    %cst = arith.constant 0.000000e+00 : bf16
    %10 = vector.broadcast %cst : bf16 to vector<8x16x96xbf16>
    %11 = tpu.concatenate %9, %10 in 2 : vector<8x16x288xbf16>, vector<8x16x96xbf16> -> vector<8x16x384xbf16>
    %12 = vector.shape_cast %11 : vector<8x16x384xbf16> to vector<128x384xbf16>
    %c0_3 = arith.constant 0 : index
    %c0_4 = arith.constant 0 : index
    %13 = vector.load %arg2[%c0_3, %c0_4] : memref<384x128xbf16, #tpu.memory_space<vmem>>, vector<384x128xbf16>
    %cst_5 = arith.constant dense<0.000000e+00> : vector<128x128xf32>
    %14 = tpu.matmul %12, %13, %cst_5 {dimension_numbers = #tpu.dot_dimension_numbers<[1], [0], [0], [1], [0, 0, 1, 1], [], []>} : vector<128x384xbf16>, vector<384x128xbf16>, vector<128x128xf32> -> vector<128x128xf32>
    %15 = arith.truncf %14 : vector<128x128xf32> to vector<128x128xbf16>
    %c0_6 = arith.constant 0 : index
    %c0_7 = arith.constant 0 : index
    %16 = vector.load %arg3[%c0_6, %c0_7] : memref<128x128xbf16, #tpu.memory_space<vmem>>, vector<128x128xbf16>
    %cst_8 = arith.constant dense<0.000000e+00> : vector<128x128xf32>
    %17 = tpu.matmul %15, %16, %cst_8 {dimension_numbers = #tpu.dot_dimension_numbers<[1], [0], [0], [1], [0, 0, 1, 1], [], []>} : vector<128x128xbf16>, vector<128x128xbf16>, vector<128x128xf32> -> vector<128x128xf32>
    %c0_9 = arith.constant 0 : index
    %c0_10 = arith.constant 0 : index
    %18 = vector.load %arg4[%c0_9, %c0_10] : memref<1x128xf32, #tpu.memory_space<vmem>>, vector<1x128xf32>
    %19 = vector.broadcast %18 : vector<1x128xf32> to vector<128x128xf32>
    %20 = arith.addf %17, %19 : vector<128x128xf32>
    %21 = arith.truncf %20 : vector<128x128xf32> to vector<128x128xbf16>
    %c0_11 = arith.constant 0 : index
    %c0_12 = arith.constant 0 : index
    %22 = vector.load %arg5[%c0_11, %c0_12] : memref<128x128xbf16, #tpu.memory_space<vmem>>, vector<128x128xbf16>
    %cst_13 = arith.constant dense<0.000000e+00> : vector<128x128xf32>
    %23 = tpu.matmul %21, %22, %cst_13 {dimension_numbers = #tpu.dot_dimension_numbers<[1], [0], [0], [1], [0, 0, 1, 1], [], []>} : vector<128x128xbf16>, vector<128x128xbf16>, vector<128x128xf32> -> vector<128x128xf32>
    %c0_14 = arith.constant 0 : index
    %c0_15 = arith.constant 0 : index
    %24 = vector.load %arg6[%c0_14, %c0_15] : memref<1x128xf32, #tpu.memory_space<vmem>>, vector<1x128xf32>
    %25 = vector.broadcast %24 : vector<1x128xf32> to vector<128x128xf32>
    %26 = arith.addf %23, %25 : vector<128x128xf32>
    %27 = arith.mulf %26, %26 : vector<128x128xf32>
    %cst_16 = arith.constant dense<0.000000e+00> : vector<128xf32>
    %28 = vector.multi_reduction <add>, %27, %cst_16 [1] : vector<128x128xf32> to vector<128xf32>
    %29 = vector.shape_cast %28 : vector<128xf32> to vector<128x1xf32>
    %cst_17 = arith.constant 1.000000e-24 : f32
    %30 = vector.broadcast %cst_17 : f32 to vector<128x1xf32>
    %31 = arith.maximumf %29, %30 : vector<128x1xf32>
    %32 = math.rsqrt %31 : vector<128x1xf32>
    %33 = vector.broadcast %32 : vector<128x1xf32> to vector<128x128xf32>
    %34 = arith.mulf %26, %33 : vector<128x128xf32>
    %c0_18 = arith.constant 0 : index
    %c0_19 = arith.constant 0 : index
    %35 = vector.load %arg7[%c0_18, %c0_19] : memref<128x128xf32, #tpu.memory_space<vmem>>, vector<128x128xf32>
    tpu.vector_store %arg7[%c0_18, %c0_19], %34 {strides = array<i32>} : memref<128x128xf32, #tpu.memory_space<vmem>>, vector<128x128xf32>,
    return
  }
  func.func @transform_0(%arg0: i32) -> (i32, i32, i32, i32) {
    %c0_i32 = arith.constant 0 : i32
    %c0_i32_0 = arith.constant 0 : i32
    %c0_i32_1 = arith.constant 0 : i32
    %c0_i32_2 = arith.constant 0 : i32
    return %arg0, %c0_i32, %c0_i32_0, %c0_i32_1 : i32, i32, i32, i32
  }
  func.func @transform_1(%arg0: i32) -> (i32, i32) {
    %c0_i32 = arith.constant 0 : i32
    %c0_i32_0 = arith.constant 0 : i32
    %c0_i32_1 = arith.constant 0 : i32
    return %c0_i32, %c0_i32_0 : i32, i32
  }
  func.func @transform_2(%arg0: i32) -> (i32, i32) {
    %c0_i32 = arith.constant 0 : i32
    %c0_i32_0 = arith.constant 0 : i32
    %c0_i32_1 = arith.constant 0 : i32
    return %c0_i32, %c0_i32_0 : i32, i32
  }
  func.func @transform_3(%arg0: i32) -> (i32, i32) {
    %c0_i32 = arith.constant 0 : i32
    %c0_i32_0 = arith.constant 0 : i32
    %c0_i32_1 = arith.constant 0 : i32
    return %c0_i32, %c0_i32_0 : i32, i32
  }
  func.func @transform_4(%arg0: i32) -> (i32, i32) {
    %c0_i32 = arith.constant 0 : i32
    %c0_i32_0 = arith.constant 0 : i32
    %c0_i32_1 = arith.constant 0 : i32
    return %c0_i32, %c0_i32_0 : i32, i32
  }
  func.func @transform_5(%arg0: i32) -> (i32, i32) {
    %c0_i32 = arith.constant 0 : i32
    %c0_i32_0 = arith.constant 0 : i32
    %c0_i32_1 = arith.constant 0 : i32
    return %c0_i32, %c0_i32_0 : i32, i32
  }
  func.func @transform_6(%arg0: i32) -> (i32, i32) {
    %c0_i32 = arith.constant 0 : i32
    %c0_i32_0 = arith.constant 0 : i32
    return %arg0, %c0_i32 : i32, i32
  }
}

</mosaic_0001>

<llo_original>
// kernel: projection_head_forward.3
$region0: #{projection_head_forward.3}
  #allocation0 [shape = 'u32[]', space=smem, size = 0x4, offset = 0x4, fixed_abs, tag = 'smem constant byte address 0x4 - core index']
  #allocation1 [shape = 'u32[144,128]{1,0:T(1,128)}', space=vmem, size = 0x12000, scoped, tag = 'internal scratch']
  %s0 = inlined_call_operand.vmem [shape: bf16[4,10,18,32], index: 0, kind: input, shape index: {}]
  %s1 = inlined_call_operand.vmem [shape: bf16[384,128], index: 1, kind: input, shape index: {}]
  %s2 = inlined_call_operand.vmem [shape: f32[4,2,128], index: 2, kind: output, shape index: {}]
  %s3 = sld [smem:[#allocation0]]
  $region41: #{projection_head_forward.3} parent=0
    _
  %s5 = ssub.s32 1, %s3
  %s6 = scalar_select 0, %s5, %s3
  loop: start=0, step=1, limit=6
  $region2: #{projection_head_forward.3} parent=0 // loop_pre_header
    _
  $region3: #{projection_head_forward.3} parent=0 // loop_header
    %s8 = sphi 0, %s12
    %p9 = scmp.ge.s32.totalorder %s8, 6
    %s18 = sphi 0, %s20
    %s21 = sphi 0, %s18
    %s22 = sphi 0, %s21
    %s38 = sphi 0, %s22
    %s42 = sphi 0, %s42
    %s44 = sphi 0, %s42
    %s45 = sphi 0, %s44
    %s59 = sphi 0, %s45
    %s65 = sphi 0, %s67
    %s68 = sphi 0, %s65
    %s69 = sphi 0, %s68
    %s85 = sphi 0, %s69
  $region4: #{projection_head_forward.3} parent=0 // loop_header_branch
    %11 = sbr.rel (%p9) target = $region8
  $region5: #{projection_head_forward.3} parent=0 // loop_body
    %s13 = ssub.s32 %s8, 1
    %s14 = ssub.s32 %s8, 2
    %s15 = sadd.s32 %s8, 1
    %s16 = ssub.s32 %s8, %s15
    %p17 = scmp.eq.s32.totalorder %s16, 0
    %s19 = sadd.s32 %s18, 1
    %s20 = scalar_select %p17, %s18, %s19
    %p23 = pneg %p17
    %p24 = scmp.eq.s32.totalorder %s8, 3
    %p25 = por %p23, %p24
    %p26 = scmp.ne.s32.totalorder %s18, %s21
    %p27 = scmp.eq.s32.totalorder %s8, 0
    %p28 = por %p26, %p27
    %p29 = scmp.ne.s32.totalorder %s18, %s21
    %p30 = scmp.eq.s32.totalorder %s13, 3
    %p31 = por %p29, %p30
    %p32 = scmp.ne.s32.totalorder %s21, %s22
    %p33 = scmp.eq.s32.totalorder %s13, 0
    %p34 = por %p32, %p33
    %p35 = scmp.ne.s32.totalorder %s21, %s22
    %p36 = scmp.eq.s32.totalorder %s14, 3
    %p37 = por %p35, %p36
    %p39 = scmp.ne.s32.totalorder %s22, %s38
    %p40 = scmp.eq.s32.totalorder %s14, 0
    %p41 = por %p39, %p40
    %s43 = sadd.s32 %s42, 1
    %p46 = scmp.eq.s32.totalorder %s8, 3
    %p47 = scmp.ne.s32.totalorder %s42, %s44
    %p48 = scmp.eq.s32.totalorder %s8, 0
    %p49 = por %p47, %p48
    %p50 = scmp.ne.s32.totalorder %s42, %s44
    %p51 = scmp.eq.s32.totalorder %s13, 3
    %p52 = por %p50, %p51
    %p53 = scmp.ne.s32.totalorder %s44, %s45
    %p54 = scmp.eq.s32.totalorder %s13, 0
    %p55 = por %p53, %p54
    %p56 = scmp.ne.s32.totalorder %s44, %s45
    %p57 = scmp.eq.s32.totalorder %s14, 3
    %p58 = por %p56, %p57
    %p60 = scmp.ne.s32.totalorder %s45, %s59
    %p61 = scmp.eq.s32.totalorder %s14, 0
    %p62 = por %p60, %p61
    %s63 = ssub.s32 %s8, %s15
    %p64 = scmp.eq.s32.totalorder %s63, 0
    %s66 = sadd.s32 %s65, 1
    %s67 = scalar_select %p64, %s65, %s66
    %p70 = pneg %p64
    %p71 = scmp.eq.s32.totalorder %s8, 3
    %p72 = por %p70, %p71
    %p73 = scmp.ne.s32.totalorder %s65, %s68
    %p74 = scmp.eq.s32.totalorder %s8, 0
    %p75 = por %p73, %p74
    %p76 = scmp.ne.s32.totalorder %s65, %s68
    %p77 = scmp.eq.s32.totalorder %s13, 3
    %p78 = por %p76, %p77
    %p79 = scmp.ne.s32.totalorder %s68, %s69
    %p80 = scmp.eq.s32.totalorder %s13, 0
    %p81 = por %p79, %p80
    %p82 = scmp.ne.s32.totalorder %s68, %s69
    %p83 = scmp.eq.s32.totalorder %s14, 3
    %p84 = por %p82, %p83
    %p86 = scmp.ne.s32.totalorder %s69, %s85
    %p87 = scmp.eq.s32.totalorder %s14, 0
    %p88 = por %p86, %p87
    %p89 = scmp.le.s32.totalorder 1, %s8
    %p90 = scmp.lt.s32.totalorder %s8, 5
    %p91 = pnand %p89, %p90
    %p92 = pneg %p91
    // Predicated region
    $region9: #{projection_head_forward.3} parent=5 // pred_check
      _
    $region10: #{projection_head_forward.3} parent=5 // pred_check_branch
      %94 = sbr.rel (%p91) target = $region12
    $region11: #{projection_head_forward.3} parent=5 // pred_region
      %s95 = ssub.s32 %s8, 1
      // Predicated region
      $region13: #{projection_head_forward.3} parent=11 // pred_check
        %p96 = pneg %p55
      $region14: #{projection_head_forward.3} parent=11 // pred_check_branch
        %98 = sbr.rel (%p96) target = $region16
      $region15: #{projection_head_forward.3} parent=11 // pred_region
        _
      $region16: #{projection_head_forward.3} parent=11 // pred_fallthru
        _
    $region12: #{projection_head_forward.3} parent=5 // pred_fallthru
      _
    %p99 = scmp.lt.s32.totalorder %s8, 4
    // Predicated region
    $region17: #{projection_head_forward.3} parent=5 // pred_check
      %p100 = pneg %p99
    $region18: #{projection_head_forward.3} parent=5 // pred_check_branch
      %102 = sbr.rel (%p100) target = $region20
    $region19: #{projection_head_forward.3} parent=5 // pred_region
      // Predicated region
      $region21: #{projection_head_forward.3} parent=19 // pred_check
        %p103 = pneg %p28
      $region22: #{projection_head_forward.3} parent=19 // pred_check_branch
        %105 = sbr.rel (%p103) target = $region24
      $region23: #{projection_head_forward.3} parent=19 // pred_region
        %p106 = scmp.lt.s32.totalorder %s8, 3
        %s107 = scalar_select %p106, %s8, 3
        %s108 = smul.addr %s107, 30
        %s109 = smul.addr %s108, 4
        %s110 = scalar_lea.vmem %s0, %s109
      $region24: #{projection_head_forward.3} parent=19 // pred_fallthru
        _
    $region20: #{projection_head_forward.3} parent=5 // pred_fallthru
      _
    %p111 = scmp.le.s32.totalorder 1, %s8
    %p112 = scmp.lt.s32.totalorder %s8, 5
    %p113 = pnand %p111, %p112
    %p114 = pneg %p113
    // Predicated region
    $region25: #{projection_head_forward.3} parent=5 // pred_check
      _
    $region26: #{projection_head_forward.3} parent=5 // pred_check_branch
      %116 = sbr.rel (%p113) target = $region28
    $region27: #{projection_head_forward.3} parent=5 // pred_region
      %s117 = ssub.s32 %s8, 1
      %p118 = scmp.lt.s32.totalorder %s13, 3
      %s119 = scalar_select %p118, %s13, 3
      %s120 = smul.addr %s119, 30
      %s121 = smul.addr %s120, 4
      %s122 = scalar_lea.vmem %s0, %s121
      %p123 = pneg %p34
      %p124 = pneg %p31
      %p125 = pneg %p55
      %p126 = pneg %p52
      %p127 = pneg %p81
      %p128 = pneg %p78
      %p129 = scmp.lt.s32.totalorder %s13, 3
      %s130 = scalar_select %p129, %s13, 3
      %s131 = smul.addr %s130, 2
      %s132 = scalar_lea.vmem %s2, %s131
      %p133 = scmp.lt.s32.totalorder %s13, 3
      %s134 = scalar_select %p133, %s13, 3
      %s135 = smul.addr %s134, 30
      %s136 = smul.addr %s135, 4
      %s137 = scalar_lea.vmem %s0, %s136
      %p138 = scmp.lt.s32.totalorder %s13, 3
      %s139 = scalar_select %p138, %s13, 3
      %s140 = smul.addr %s139, 2
      %s141 = scalar_lea.vmem %s2, %s140
      %v143 = vld [vmem:[%s137] sm:$0xf]
      %v144 = vld [vmem:[%s137 + $0x4] sm:$0xf]
      %v145 = vld [vmem:[%s137 + $0x8] sm:$0x1]
      %v146 = vld [vmem:[%s137 + $0xc] sm:$0xf]
      %v147 = vld [vmem:[%s137 + $0x10] sm:$0xf]
      %v148 = vld [vmem:[%s137 + $0x14] sm:$0x1]
      %v149 = vld [vmem:[%s137 + $0x18] sm:$0xf]
      %v150 = vld [vmem:[%s137 + $0x1c] sm:$0xf]
      %v151 = vld [vmem:[%s137 + $0x20] sm:$0x1]
      %v152 = vld [vmem:[%s137 + $0x24] sm:$0xf]
      %v153 = vld [vmem:[%s137 + $0x28] sm:$0xf]
      %v154 = vld [vmem:[%s137 + $0x2c] sm:$0x1]
      %v155 = vld [vmem:[%s137 + $0x30] sm:$0xf]
      %v156 = vld [vmem:[%s137 + $0x34] sm:$0xf]
      %v157 = vld [vmem:[%s137 + $0x38] sm:$0x1]
      %v158 = vld [vmem:[%s137 + $0x3c] sm:$0xf]
      %v159 = vld [vmem:[%s137 + $0x40] sm:$0xf]
      %v160 = vld [vmem:[%s137 + $0x44] sm:$0x1]
      %v161 = vld [vmem:[%s137 + $0x48] sm:$0xf]
      %v162 = vld [vmem:[%s137 + $0x4c] sm:$0xf]
      %v163 = vld [vmem:[%s137 + $0x50] sm:$0x1]
      %v164 = vld [vmem:[%s137 + $0x54] sm:$0xf]
      %v165 = vld [vmem:[%s137 + $0x58] sm:$0xf]
      %v166 = vld [vmem:[%s137 + $0x5c] sm:$0x1]
      %v167 = vld [vmem:[%s137 + $0x60] sm:$0xf]
      %v168 = vld [vmem:[%s137 + $0x64] sm:$0xf]
      %v169 = vld [vmem:[%s137 + $0x68] sm:$0x1]
      %v170 = vld [vmem:[%s137 + $0x6c] sm:$0xf]
      %v171 = vld [vmem:[%s137 + $0x70] sm:$0xf]
      %v172 = vld [vmem:[%s137 + $0x74] sm:$0x1]
      %v193 = vunpack.c.l.b16 %v143
      %v194 = vunpack.c.l.b16 %v144
      %v195 = vunpack.c.l.b16 %v146
      %v196 = vunpack.c.l.b16 %v147
      %v197 = vunpack.c.l.b16 %v149
      %v198 = vunpack.c.l.b16 %v150
      %v199 = vunpack.c.l.b16 %v152
      %v200 = vunpack.c.l.b16 %v153
      %v201 = vunpack.c.l.b16 %v155
      %v202 = vunpack.c.l.b16 %v156
      %v203 = vunpack.c.l.b16 %v158
      %v204 = vunpack.c.l.b16 %v159
      %v205 = vunpack.c.l.b16 %v161
      %v206 = vunpack.c.l.b16 %v162
      %v207 = vunpack.c.l.b16 %v164
      %v208 = vunpack.c.l.b16 %v165
      %v209 = vunpack.c.l.b16 %v167
      %v210 = vunpack.c.l.b16 %v168
      %v211 = vunpack.c.l.b16 %v170
      %v212 = vunpack.c.l.b16 %v171
      %v213 = vpack.c.b16 %v194, %v193
      %v214 = vpack.c.b16 %v196, %v195
      %v215 = vpack.c.b16 %v198, %v197
      %v216 = vpack.c.b16 %v200, %v199
      %v217 = vpack.c.b16 %v202, %v201
      %v218 = vpack.c.b16 %v204, %v203
      %v219 = vpack.c.b16 %v206, %v205
      %v220 = vpack.c.b16 %v208, %v207
      %v221 = vpack.c.b16 %v210, %v209
      %v222 = vpack.c.b16 %v212, %v211
      %v233 = vunpack.c.l.b16 %v145
      %v234 = vunpack.c.l.b16 %v148
      %v235 = vunpack.c.l.b16 %v151
      %v236 = vunpack.c.l.b16 %v154
      %v237 = vunpack.c.l.b16 %v157
      %v238 = vunpack.c.l.b16 %v160
      %v239 = vunpack.c.l.b16 %v163
      %v240 = vunpack.c.l.b16 %v166
      %v241 = vunpack.c.l.b16 %v169
      %v242 = vunpack.c.l.b16 %v172
      %v243 = vpack.c.b16 %v233, %v233
      %v244 = vpack.c.b16 %v234, %v234
      %v245 = vpack.c.b16 %v235, %v235
      %v246 = vpack.c.b16 %v236, %v236
      %v247 = vpack.c.b16 %v237, %v237
      %v248 = vpack.c.b16 %v238, %v238
      %v249 = vpack.c.b16 %v239, %v239
      %v250 = vpack.c.b16 %v240, %v240
      %v251 = vpack.c.b16 %v241, %v241
      %v252 = vpack.c.b16 %v242, %v242
      %vm253 = vsmask.f32 7424
      %v255 = vshrl.u32 %v213, 16
      %v257 = vshll.u32 %v213, 16
      %v259 = vrot.slane %v257, 1
      %v260 = vor.u32 %v255, %v259
      %v262 = vshll.u32 %v243, 16
      %v264 = vrot.slane %v262, 1
      %v265 = vsel %vm253, %v260, %v264
      %v267 = vshrl.u32 %v214, 16
      %v269 = vshll.u32 %v214, 16
      %v271 = vrot.slane %v269, 1
      %v272 = vor.u32 %v267, %v271
      %v274 = vshll.u32 %v244, 16
      %v276 = vrot.slane %v274, 1
      %v277 = vsel %vm253, %v272, %v276
      %v279 = vshrl.u32 %v215, 16
      %v281 = vshll.u32 %v215, 16
      %v283 = vrot.slane %v281, 1
      %v284 = vor.u32 %v279, %v283
      %v286 = vshll.u32 %v245, 16
      %v288 = vrot.slane %v286, 1
      %v289 = vsel %vm253, %v284, %v288
      %v291 = vshrl.u32 %v216, 16
      %v293 = vshll.u32 %v216, 16
      %v295 = vrot.slane %v293, 1
      %v296 = vor.u32 %v291, %v295
      %v298 = vshll.u32 %v246, 16
      %v300 = vrot.slane %v298, 1
      %v301 = vsel %vm253, %v296, %v300
      %v303 = vshrl.u32 %v217, 16
      %v305 = vshll.u32 %v217, 16
      %v307 = vrot.slane %v305, 1
      %v308 = vor.u32 %v303, %v307
      %v310 = vshll.u32 %v247, 16
      %v312 = vrot.slane %v310, 1
      %v313 = vsel %vm253, %v308, %v312
      %v315 = vshrl.u32 %v218, 16
      %v317 = vshll.u32 %v218, 16
      %v319 = vrot.slane %v317, 1
      %v320 = vor.u32 %v315, %v319
      %v322 = vshll.u32 %v248, 16
      %v324 = vrot.slane %v322, 1
      %v325 = vsel %vm253, %v320, %v324
      %v327 = vshrl.u32 %v219, 16
      %v329 = vshll.u32 %v219, 16
      %v331 = vrot.slane %v329, 1
      %v332 = vor.u32 %v327, %v331
      %v334 = vshll.u32 %v249, 16
      %v336 = vrot.slane %v334, 1
      %v337 = vsel %vm253, %v332, %v336
      %v339 = vshrl.u32 %v220, 16
      %v341 = vshll.u32 %v220, 16
      %v343 = vrot.slane %v341, 1
      %v344 = vor.u32 %v339, %v343
      %v346 = vshll.u32 %v250, 16
      %v348 = vrot.slane %v346, 1
      %v349 = vsel %vm253, %v344, %v348
      %v351 = vshrl.u32 %v221, 16
      %v353 = vshll.u32 %v221, 16
      %v355 = vrot.slane %v353, 1
      %v356 = vor.u32 %v351, %v355
      %v358 = vshll.u32 %v251, 16
      %v360 = vrot.slane %v358, 1
      %v361 = vsel %vm253, %v356, %v360
      %v363 = vshrl.u32 %v222, 16
      %v365 = vshll.u32 %v222, 16
      %v367 = vrot.slane %v365, 1
      %v368 = vor.u32 %v363, %v367
      %v370 = vshll.u32 %v252, 16
      %v372 = vrot.slane %v370, 1
      %v373 = vsel %vm253, %v368, %v372
      %374 = vrot.lane.b32.xlu0 %v265, 32
      %v375 = vpop.permute.xlu0 %374
      %376 = vrot.lane.b32.xlu0 %v277, 32
      %v377 = vpop.permute.xlu0 %376
      %378 = vrot.lane.b32.xlu0 %v289, 32
      %v379 = vpop.permute.xlu0 %378
      %380 = vrot.lane.b32.xlu0 %v301, 32
      %v381 = vpop.permute.xlu0 %380
      %382 = vrot.lane.b32.xlu0 %v313, 32
      %v383 = vpop.permute.xlu0 %382
      %384 = vrot.lane.b32.xlu0 %v325, 32
      %v385 = vpop.permute.xlu0 %384
      %386 = vrot.lane.b32.xlu0 %v337, 32
      %v387 = vpop.permute.xlu0 %386
      %388 = vrot.lane.b32.xlu0 %v349, 32
      %v389 = vpop.permute.xlu0 %388
      %390 = vrot.lane.b32.xlu0 %v361, 32
      %v391 = vpop.permute.xlu0 %390
      %392 = vrot.lane.b32.xlu0 %v373, 32
      %v393 = vpop.permute.xlu0 %392
      %vm394 = vcmask 1046528
      %v395 = vrot.slane %v213, 1
      %v396 = vrot.slane %v243, 1
      %v397 = vsel %vm394, %v395, %v396
      %v398 = vrot.slane %v214, 1
      %v399 = vrot.slane %v244, 1
      %v400 = vsel %vm394, %v398, %v399
      %v401 = vrot.slane %v215, 1
      %v402 = vrot.slane %v245, 1
      %v403 = vsel %vm394, %v401, %v402
      %v404 = vrot.slane %v216, 1
      %v405 = vrot.slane %v246, 1
      %v406 = vsel %vm394, %v404, %v405
      %v407 = vrot.slane %v217, 1
      %v408 = vrot.slane %v247, 1
      %v409 = vsel %vm394, %v407, %v408
      %v410 = vrot.slane %v218, 1
      %v411 = vrot.slane %v248, 1
      %v412 = vsel %vm394, %v410, %v411
      %v413 = vrot.slane %v219, 1
      %v414 = vrot.slane %v249, 1
      %v415 = vsel %vm394, %v413, %v414
      %v416 = vrot.slane %v220, 1
      %v417 = vrot.slane %v250, 1
      %v418 = vsel %vm394, %v416, %v417
      %v419 = vrot.slane %v221, 1
      %v420 = vrot.slane %v251, 1
      %v421 = vsel %vm394, %v419, %v420
      %v422 = vrot.slane %v222, 1
      %v423 = vrot.slane %v252, 1
      %v424 = vsel %vm394, %v422, %v423
      %425 = vrot.lane.b32.xlu0 %v397, 64
      %v426 = vpop.permute.xlu0 %425
      %427 = vrot.lane.b32.xlu0 %v400, 64
      %v428 = vpop.permute.xlu0 %427
      %429 = vrot.lane.b32.xlu0 %v403, 64
      %v430 = vpop.permute.xlu0 %429
      %431 = vrot.lane.b32.xlu0 %v406, 64
      %v432 = vpop.permute.xlu0 %431
      %433 = vrot.lane.b32.xlu0 %v409, 64
      %v434 = vpop.permute.xlu0 %433
      %435 = vrot.lane.b32.xlu0 %v412, 64
      %v436 = vpop.permute.xlu0 %435
      %437 = vrot.lane.b32.xlu0 %v415, 64
      %v438 = vpop.permute.xlu0 %437
      %439 = vrot.lane.b32.xlu0 %v418, 64
      %v440 = vpop.permute.xlu0 %439
      %441 = vrot.lane.b32.xlu0 %v421, 64
      %v442 = vpop.permute.xlu0 %441
      %443 = vrot.lane.b32.xlu0 %v424, 64
      %v444 = vpop.permute.xlu0 %443
      %vm445 = vcmask 261120
      %v447 = vsel %vm445, %v213, %v375
      %v449 = vsel %vm445, %v214, %v377
      %v451 = vsel %vm445, %v215, %v379
      %v453 = vsel %vm445, %v216, %v381
      %v455 = vsel %vm445, %v217, %v383
      %v457 = vsel %vm445, %v218, %v385
      %v459 = vsel %vm445, %v219, %v387
      %v461 = vsel %vm445, %v220, %v389
      %v463 = vsel %vm445, %v221, %v391
      %v465 = vsel %vm445, %v222, %v393
      %vm466 = vcmask 523264
      %v468 = vsel %vm466, %v447, %v426
      %v470 = vsel %vm466, %v449, %v428
      %v472 = vsel %vm466, %v451, %v430
      %v474 = vsel %vm466, %v453, %v432
      %v476 = vsel %vm466, %v455, %v434
      %v478 = vsel %vm466, %v457, %v436
      %v480 = vsel %vm466, %v459, %v438
      %v482 = vsel %vm466, %v461, %v440
      %v484 = vsel %vm466, %v463, %v442
      %v486 = vsel %vm466, %v465, %v444
      %495 = vrot.lane.b32.xlu0 %v470, 96
      %v496 = vpop.permute.xlu0 %495
      %497 = vrot.lane.b32.xlu0 %v472, 96
      %v498 = vpop.permute.xlu0 %497
      %499 = vrot.lane.b32.xlu0 %v474, 96
      %v500 = vpop.permute.xlu0 %499
      %501 = vrot.lane.b32.xlu0 %v476, 96
      %v502 = vpop.permute.xlu0 %501
      %503 = vrot.lane.b32.xlu0 %v478, 96
      %v504 = vpop.permute.xlu0 %503
      %505 = vrot.lane.b32.xlu0 %v480, 96
      %v506 = vpop.permute.xlu0 %505
      %507 = vrot.lane.b32.xlu0 %v482, 96
      %v508 = vpop.permute.xlu0 %507
      %509 = vrot.lane.b32.xlu0 %v484, 96
      %v510 = vpop.permute.xlu0 %509
      %512 = vrot.lane.b32.xlu0 %v472, 64
      %v513 = vpop.permute.xlu0 %512
      %514 = vrot.lane.b32.xlu0 %v474, 64
      %v515 = vpop.permute.xlu0 %514
      %516 = vrot.lane.b32.xlu0 %v476, 64
      %v517 = vpop.permute.xlu0 %516
      %518 = vrot.lane.b32.xlu0 %v478, 64
      %v519 = vpop.permute.xlu0 %518
      %520 = vrot.lane.b32.xlu0 %v480, 64
      %v521 = vpop.permute.xlu0 %520
      %522 = vrot.lane.b32.xlu0 %v482, 64
      %v523 = vpop.permute.xlu0 %522
      %524 = vrot.lane.b32.xlu0 %v484, 64
      %v525 = vpop.permute.xlu0 %524
      %526 = vrot.lane.b32.xlu0 %v486, 64
      %v527 = vpop.permute.xlu0 %526
      %vm528 = vcmask 785408
      %v530 = vsel %vm528, %v468, %v496
      %v533 = vsel %vm528, %v470, %v498
      %v536 = vsel %vm528, %v472, %v500
      %v539 = vsel %vm528, %v474, %v502
      %v542 = vsel %vm528, %v476, %v504
      %v545 = vsel %vm528, %v478, %v506
      %v548 = vsel %vm528, %v480, %v508
      %v551 = vsel %vm528, %v482, %v510
      %v554 = vsel %vm466, %v496, %v513
      %v557 = vsel %vm466, %v498, %v515
      %v560 = vsel %vm466, %v500, %v517
      %v563 = vsel %vm466, %v502, %v519
      %v566 = vsel %vm466, %v504, %v521
      %v569 = vsel %vm466, %v506, %v523
      %v572 = vsel %vm466, %v508, %v525
      %v575 = vsel %vm466, %v510, %v527
      %v578 = vsel %vm445, %v513, 0
      %v580 = vsel %vm445, %v515, 0
      %v582 = vsel %vm445, %v517, 0
      %v584 = vsel %vm445, %v519, 0
      %v586 = vsel %vm445, %v521, 0
      %v588 = vsel %vm445, %v523, 0
      %v590 = vsel %vm445, %v525, 0
      %v592 = vsel %vm445, %v527, 0
      %v594 = vld [vmem:[%s1] sm:$0xf]
      %v595 = vld [vmem:[%s1 + $0x4] sm:$0xf]
      %v596 = vld [vmem:[%s1 + $0x8] sm:$0xf]
      %v597 = vld [vmem:[%s1 + $0xc] sm:$0xf]
      %v598 = vld [vmem:[%s1 + $0x10] sm:$0xf]
      %v599 = vld [vmem:[%s1 + $0x14] sm:$0xf]
      %v600 = vld [vmem:[%s1 + $0x18] sm:$0xf]
      %v601 = vld [vmem:[%s1 + $0x1c] sm:$0xf]
      %v602 = vld [vmem:[%s1 + $0x20] sm:$0xf]
      %v603 = vld [vmem:[%s1 + $0x24] sm:$0xf]
      %v604 = vld [vmem:[%s1 + $0x28] sm:$0xf]
      %v605 = vld [vmem:[%s1 + $0x2c] sm:$0xf]
      %v606 = vld [vmem:[%s1 + $0x30] sm:$0xf]
      %v607 = vld [vmem:[%s1 + $0x34] sm:$0xf]
      %v608 = vld [vmem:[%s1 + $0x38] sm:$0xf]
      %v609 = vld [vmem:[%s1 + $0x3c] sm:$0xf]
      %v610 = vld [vmem:[%s1 + $0x40] sm:$0xf]
      %v611 = vld [vmem:[%s1 + $0x44] sm:$0xf]
      %v612 = vld [vmem:[%s1 + $0x48] sm:$0xf]
      %v613 = vld [vmem:[%s1 + $0x4c] sm:$0xf]
      %v614 = vld [vmem:[%s1 + $0x50] sm:$0xf]
      %v615 = vld [vmem:[%s1 + $0x54] sm:$0xf]
      %v616 = vld [vmem:[%s1 + $0x58] sm:$0xf]
      %v617 = vld [vmem:[%s1 + $0x5c] sm:$0xf]
      %v618 = vld [vmem:[%s1 + $0x60] sm:$0xf]
      %v619 = vld [vmem:[%s1 + $0x64] sm:$0xf]
      %v620 = vld [vmem:[%s1 + $0x68] sm:$0xf]
      %v621 = vld [vmem:[%s1 + $0x6c] sm:$0xf]
      %v622 = vld [vmem:[%s1 + $0x70] sm:$0xf]
      %v623 = vld [vmem:[%s1 + $0x74] sm:$0xf]
      %v624 = vld [vmem:[%s1 + $0x78] sm:$0xf]
      %v625 = vld [vmem:[%s1 + $0x7c] sm:$0xf]
      %v626 = vld [vmem:[%s1 + $0x80] sm:$0xf]
      %v627 = vld [vmem:[%s1 + $0x84] sm:$0xf]
      %v628 = vld [vmem:[%s1 + $0x88] sm:$0xf]
      %v629 = vld [vmem:[%s1 + $0x8c] sm:$0xf]
      %v630 = vld [vmem:[%s1 + $0x90] sm:$0xf]
      %v631 = vld [vmem:[%s1 + $0x94] sm:$0xf]
      %v632 = vld [vmem:[%s1 + $0x98] sm:$0xf]
      %v633 = vld [vmem:[%s1 + $0x9c] sm:$0xf]
      %v634 = vld [vmem:[%s1 + $0xa0] sm:$0xf]
      %v635 = vld [vmem:[%s1 + $0xa4] sm:$0xf]
      %v636 = vld [vmem:[%s1 + $0xa8] sm:$0xf]
      %v637 = vld [vmem:[%s1 + $0xac] sm:$0xf]
      %v638 = vld [vmem:[%s1 + $0xb0] sm:$0xf]
      %v639 = vld [vmem:[%s1 + $0xb4] sm:$0xf]
      %v640 = vld [vmem:[%s1 + $0xb8] sm:$0xf]
      %v641 = vld [vmem:[%s1 + $0xbc] sm:$0xf]
      %v690 = vunpack.c.l.b16 %v594
      %v691 = vunpack.c.l.b16 %v595
      %v692 = vunpack.c.l.b16 %v596
      %v693 = vunpack.c.l.b16 %v597
      %v694 = vunpack.c.l.b16 %v598
      %v695 = vunpack.c.l.b16 %v599
      %v696 = vunpack.c.l.b16 %v600
      %v697 = vunpack.c.l.b16 %v601
      %v698 = vunpack.c.l.b16 %v602
      %v699 = vunpack.c.l.b16 %v603
      %v700 = vunpack.c.l.b16 %v604
      %v701 = vunpack.c.l.b16 %v605
      %v702 = vunpack.c.l.b16 %v606
      %v703 = vunpack.c.l.b16 %v607
      %v704 = vunpack.c.l.b16 %v608
      %v705 = vunpack.c.l.b16 %v609
      %v706 = vunpack.c.l.b16 %v610
      %v707 = vunpack.c.l.b16 %v611
      %v708 = vunpack.c.l.b16 %v612
      %v709 = vunpack.c.l.b16 %v613
      %v710 = vunpack.c.l.b16 %v614
      %v711 = vunpack.c.l.b16 %v615
      %v712 = vunpack.c.l.b16 %v616
      %v713 = vunpack.c.l.b16 %v617
      %v714 = vunpack.c.l.b16 %v618
      %v715 = vunpack.c.l.b16 %v619
      %v716 = vunpack.c.l.b16 %v620
      %v717 = vunpack.c.l.b16 %v621
      %v718 = vunpack.c.l.b16 %v622
      %v719 = vunpack.c.l.b16 %v623
      %v720 = vunpack.c.l.b16 %v624
      %v721 = vunpack.c.l.b16 %v625
      %v722 = vunpack.c.l.b16 %v626
      %v723 = vunpack.c.l.b16 %v627
      %v724 = vunpack.c.l.b16 %v628
      %v725 = vunpack.c.l.b16 %v629
      %v726 = vunpack.c.l.b16 %v630
      %v727 = vunpack.c.l.b16 %v631
      %v728 = vunpack.c.l.b16 %v632
      %v729 = vunpack.c.l.b16 %v633
      %v730 = vunpack.c.l.b16 %v634
      %v731 = vunpack.c.l.b16 %v635
      %v732 = vunpack.c.l.b16 %v636
      %v733 = vunpack.c.l.b16 %v637
      %v734 = vunpack.c.l.b16 %v638
      %v735 = vunpack.c.l.b16 %v639
      %v736 = vunpack.c.l.b16 %v640
      %v737 = vunpack.c.l.b16 %v641
      %v738 = vpack.c.b16 %v691, %v690
      %v739 = vpack.c.b16 %v693, %v692
      %v740 = vpack.c.b16 %v695, %v694
      %v741 = vpack.c.b16 %v697, %v696
      %v742 = vpack.c.b16 %v699, %v698
      %v743 = vpack.c.b16 %v701, %v700
      %v744 = vpack.c.b16 %v703, %v702
      %v745 = vpack.c.b16 %v705, %v704
      %v746 = vpack.c.b16 %v707, %v706
      %v747 = vpack.c.b16 %v709, %v708
      %v748 = vpack.c.b16 %v711, %v710
      %v749 = vpack.c.b16 %v713, %v712
      %v750 = vpack.c.b16 %v715, %v714
      %v751 = vpack.c.b16 %v717, %v716
      %v752 = vpack.c.b16 %v719, %v718
      %v753 = vpack.c.b16 %v721, %v720
      %v754 = vpack.c.b16 %v723, %v722
      %v755 = vpack.c.b16 %v725, %v724
      %v756 = vpack.c.b16 %v727, %v726
      %v757 = vpack.c.b16 %v729, %v728
      %v758 = vpack.c.b16 %v731, %v730
      %v759 = vpack.c.b16 %v733, %v732
      %v760 = vpack.c.b16 %v735, %v734
      %v761 = vpack.c.b16 %v737, %v736
      %786 = vmatprep.subr.bf16.mxu0 0
      %787 = vmatpush1.bf16.msra.mxu0 %v738
      %788 = vmatprep.subr.bf16.mxu0 0
      %789 = vmatpush1.bf16.msra.mxu0 %v739
      %790 = vmatprep.subr.bf16.mxu0 0
      %791 = vmatpush1.bf16.msra.mxu0 %v740
      %792 = vmatprep.subr.bf16.mxu0 0
      %793 = vmatpush1.bf16.msra.mxu0 %v741
      %794 = vmatprep.subr.bf16.mxu0 0
      %795 = vmatpush1.bf16.msra.mxu0 %v742
      %796 = vmatprep.subr.bf16.mxu0 0
      %797 = vmatpush1.bf16.msra.mxu0 %v743
      %798 = vmatprep.subr.bf16.mxu0 0
      %799 = vmatpush1.bf16.msra.mxu0 %v744
      %800 = vmatprep.subr.bf16.mxu0 0
      %801 = vmatpush1.bf16.msra.mxu0 %v745
      %802 = vmatprep.subr.bf16.mxu0 0
      %803 = vmatpush1.bf16.msra.mxu0 %v746
      %804 = vmatprep.subr.bf16.mxu0 0
      %805 = vmatpush1.bf16.msra.mxu0 %v747
      %806 = vmatprep.subr.bf16.mxu0 0
      %807 = vmatpush1.bf16.msra.mxu0 %v748
      %808 = vmatprep.subr.bf16.mxu0 0
      %809 = vmatpush1.bf16.msra.mxu0 %v749
      %810 = vmatprep.subr.bf16.mxu0 0
      %811 = vmatpush1.bf16.msra.mxu0 %v750
      %812 = vmatprep.subr.bf16.mxu0 0
      %813 = vmatpush1.bf16.msra.mxu0 %v751
      %814 = vmatprep.subr.bf16.mxu0 0
      %815 = vmatpush1.bf16.msra.mxu0 %v752
      %816 = vmatprep.subr.bf16.mxu0 0
      %817 = vmatpush1.bf16.msra.mxu0 %v753
      %818 = vmatprep.mubr.bf16.mxu0 %v554
      %819 = vmatmul.mubr.bf16.gmra.mrb[0].mxu0 %v530
      %v820 = vpop.f32.mrb[0].mxu0
      %v821 = vadd.f32 0.0, %v820
      %v822 = vpop.f32.mrb[0].mxu0
      %v823 = vpop.f32.mrb[0].mxu0
      %v824 = vadd.f32 0.0, %v823
      %v825 = vpop.f32.mrb[0].mxu0
      %826 = vmatprep.mubr.bf16.mxu0 %v557
      %827 = vmatmul.mubr.bf16.gmra.mrb[0].mxu0 %v533
      %v828 = vpop.f32.mrb[0].mxu0
      %v829 = vadd.f32 0.0, %v828
      %v830 = vpop.f32.mrb[0].mxu0
      %v831 = vpop.f32.mrb[0].mxu0
      %v832 = vadd.f32 0.0, %v831
      %v833 = vpop.f32.mrb[0].mxu0
      %834 = vmatprep.mubr.bf16.mxu0 %v560
      %835 = vmatmul.mubr.bf16.gmra.mrb[0].mxu0 %v536
      %v836 = vpop.f32.mrb[0].mxu0
      %v837 = vadd.f32 0.0, %v836
      %v838 = vpop.f32.mrb[0].mxu0
      %v839 = vpop.f32.mrb[0].mxu0
      %v840 = vadd.f32 0.0, %v839
      %v841 = vpop.f32.mrb[0].mxu0
      %842 = vmatprep.mubr.bf16.mxu0 %v563
      %843 = vmatmul.mubr.bf16.gmra.mrb[0].mxu0 %v539
      %v844 = vpop.f32.mrb[0].mxu0
      %v845 = vadd.f32 0.0, %v844
      %v846 = vpop.f32.mrb[0].mxu0
      %v847 = vpop.f32.mrb[0].mxu0
      %v848 = vadd.f32 0.0, %v847
      %v849 = vpop.f32.mrb[0].mxu0
      %850 = vmatprep.mubr.bf16.mxu0 %v566
      %851 = vmatmul.mubr.bf16.gmra.mrb[0].mxu0 %v542
      %v852 = vpop.f32.mrb[0].mxu0
      %v853 = vadd.f32 0.0, %v852
      %v854 = vpop.f32.mrb[0].mxu0
      %v855 = vpop.f32.mrb[0].mxu0
      %v856 = vadd.f32 0.0, %v855
      %v857 = vpop.f32.mrb[0].mxu0
      %858 = vmatprep.mubr.bf16.mxu0 %v569
      %859 = vmatmul.mubr.bf16.gmra.mrb[0].mxu0 %v545
      %v860 = vpop.f32.mrb[0].mxu0
      %v861 = vadd.f32 0.0, %v860
      %v862 = vpop.f32.mrb[0].mxu0
      %v863 = vpop.f32.mrb[0].mxu0
      %v864 = vadd.f32 0.0, %v863
      %v865 = vpop.f32.mrb[0].mxu0
      %866 = vmatprep.mubr.bf16.mxu0 %v572
      %867 = vmatmul.mubr.bf16.gmra.mrb[0].mxu0 %v548
      %v868 = vpop.f32.mrb[0].mxu0
      %v869 = vadd.f32 0.0, %v868
      %v870 = vpop.f32.mrb[0].mxu0
      %v871 = vpop.f32.mrb[0].mxu0
      %v872 = vadd.f32 0.0, %v871
      %v873 = vpop.f32.mrb[0].mxu0
      %874 = vmatprep.mubr.bf16.mxu0 %v575
      %875 = vmatmul.mubr.bf16.gmra.mrb[0].mxu0 %v551
      %v876 = vpop.f32.mrb[0].mxu0
      %v877 = vadd.f32 0.0, %v876
      %v878 = vpop.f32.mrb[0].mxu0
      %v879 = vpop.f32.mrb[0].mxu0
      %v880 = vadd.f32 0.0, %v879
      %v881 = vpop.f32.mrb[0].mxu0
      %882 = vdwg.mxu0
      %883 = vmatprep.subr.bf16.mxu0 0
      %884 = vmatpush1.bf16.msra.mxu0 %v754
      %885 = vmatprep.subr.bf16.mxu0 0
      %886 = vmatpush1.bf16.msra.mxu0 %v755
      %887 = vmatprep.subr.bf16.mxu0 0
      %888 = vmatpush1.bf16.msra.mxu0 %v756
      %889 = vmatprep.subr.bf16.mxu0 0
      %890 = vmatpush1.bf16.msra.mxu0 %v757
      %891 = vmatprep.subr.bf16.mxu0 0
      %892 = vmatpush1.bf16.msra.mxu0 %v758
      %893 = vmatprep.subr.bf16.mxu0 0
      %894 = vmatpush1.bf16.msra.mxu0 %v759
      %895 = vmatprep.subr.bf16.mxu0 0
      %896 = vmatpush1.bf16.msra.mxu0 %v760
      %897 = vmatprep.subr.bf16.mxu0 0
      %898 = vmatpush1.bf16.msra.mxu0 %v761
      %899 = vmatprep.subr.bf16.mxu0 0
      %900 = vmatpush1.bf16.msra.mxu0 0
      %901 = vmatprep.subr.bf16.mxu0 0
      %902 = vmatpush1.bf16.msra.mxu0 0
      %903 = vmatprep.subr.bf16.mxu0 0
      %904 = vmatpush1.bf16.msra.mxu0 0
      %905 = vmatprep.subr.bf16.mxu0 0
      %906 = vmatpush1.bf16.msra.mxu0 0
      %907 = vmatprep.subr.bf16.mxu0 0
      %908 = vmatpush1.bf16.msra.mxu0 0
      %909 = vmatprep.subr.bf16.mxu0 0
      %910 = vmatpush1.bf16.msra.mxu0 0
      %911 = vmatprep.subr.bf16.mxu0 0
      %912 = vmatpush1.bf16.msra.mxu0 0
      %913 = vmatprep.subr.bf16.mxu0 0
      %914 = vmatpush1.bf16.msra.mxu0 0
      %915 = vmatprep.mubr.bf16.mxu0 0
      %916 = vmatmul.mubr.bf16.gmra.mrb[0].mxu0 %v578
      %v917 = vpop.f32.mrb[0].mxu0
      %v918 = vadd.f32 %v821, %v917
      %v919 = vpop.f32.mrb[0].mxu0
      %v920 = vpop.f32.mrb[0].mxu0
      %v921 = vadd.f32 %v824, %v920
      %v922 = vpop.f32.mrb[0].mxu0
      %923 = vmatprep.mubr.bf16.mxu0 0
      %924 = vmatmul.mubr.bf16.gmra.mrb[0].mxu0 %v580
      %v925 = vpop.f32.mrb[0].mxu0
      %v926 = vadd.f32 %v829, %v925
      %v927 = vpop.f32.mrb[0].mxu0
      %v928 = vpop.f32.mrb[0].mxu0
      %v929 = vadd.f32 %v832, %v928
      %v930 = vpop.f32.mrb[0].mxu0
      %931 = vmatprep.mubr.bf16.mxu0 0
      %932 = vmatmul.mubr.bf16.gmra.mrb[0].mxu0 %v582
      %v933 = vpop.f32.mrb[0].mxu0
      %v934 = vadd.f32 %v837, %v933
      %v935 = vpop.f32.mrb[0].mxu0
      %v936 = vpop.f32.mrb[0].mxu0
      %v937 = vadd.f32 %v840, %v936
      %v938 = vpop.f32.mrb[0].mxu0
      %939 = vmatprep.mubr.bf16.mxu0 0
      %940 = vmatmul.mubr.bf16.gmra.mrb[0].mxu0 %v584
      %v941 = vpop.f32.mrb[0].mxu0
      %v942 = vadd.f32 %v845, %v941
      %v943 = vpop.f32.mrb[0].mxu0
      %v944 = vpop.f32.mrb[0].mxu0
      %v945 = vadd.f32 %v848, %v944
      %v946 = vpop.f32.mrb[0].mxu0
      %947 = vmatprep.mubr.bf16.mxu0 0
      %948 = vmatmul.mubr.bf16.gmra.mrb[0].mxu0 %v586
      %v949 = vpop.f32.mrb[0].mxu0
      %v950 = vadd.f32 %v853, %v949
      %v951 = vpop.f32.mrb[0].mxu0
      %v952 = vpop.f32.mrb[0].mxu0
      %v953 = vadd.f32 %v856, %v952
      %v954 = vpop.f32.mrb[0].mxu0
      %955 = vmatprep.mubr.bf16.mxu0 0
      %956 = vmatmul.mubr.bf16.gmra.mrb[0].mxu0 %v588
      %v957 = vpop.f32.mrb[0].mxu0
      %v958 = vadd.f32 %v861, %v957
      %v959 = vpop.f32.mrb[0].mxu0
      %v960 = vpop.f32.mrb[0].mxu0
      %v961 = vadd.f32 %v864, %v960
      %v962 = vpop.f32.mrb[0].mxu0
      %963 = vmatprep.mubr.bf16.mxu0 0
      %964 = vmatmul.mubr.bf16.gmra.mrb[0].mxu0 %v590
      %v965 = vpop.f32.mrb[0].mxu0
      %v966 = vadd.f32 %v869, %v965
      %v967 = vpop.f32.mrb[0].mxu0
      %v968 = vpop.f32.mrb[0].mxu0
      %v969 = vadd.f32 %v872, %v968
      %v970 = vpop.f32.mrb[0].mxu0
      %971 = vmatprep.mubr.bf16.mxu0 0
      %972 = vmatmul.mubr.bf16.gmra.mrb[0].mxu0 %v592
      %v973 = vpop.f32.mrb[0].mxu0
      %v974 = vadd.f32 %v877, %v973
      %v975 = vpop.f32.mrb[0].mxu0
      %v976 = vpop.f32.mrb[0].mxu0
      %v977 = vadd.f32 %v880, %v976
      %v978 = vpop.f32.mrb[0].mxu0
      %979 = vdwg.mxu0
      %v980 = vadd.f32 %v918, %v921
      %v981 = vadd.f32 %v980, %v926
      %v982 = vadd.f32 %v981, %v929
      %v983 = vadd.f32 %v982, %v934
      %v984 = vadd.f32 %v983, %v937
      %v985 = vadd.f32 %v984, %v942
      %v986 = vadd.f32 %v985, %v945
      %v987 = vadd.f32 %v986, %v950
      %v988 = vadd.f32 %v987, %v953
      %v989 = vadd.f32 %v988, %v958
      %v990 = vadd.f32 %v989, %v961
      %v991 = vadd.f32 %v990, %v966
      %v992 = vadd.f32 %v991, %v969
      %v993 = vadd.f32 %v992, %v974
      %v994 = vadd.f32 %v993, %v977
      %v995 = vrot.slane %v994, 4
      %v996 = vadd.f32 %v994, %v995
      %v997 = vrot.slane %v996, 2
      %v998 = vadd.f32 %v996, %v997
      %v999 = vrot.slane %v998, 1
      %v1000 = vadd.f32 %v998, %v999
      %v1001 = vmul.f32 %v918, %v918
      %v1002 = vmul.f32 %v921, %v921
      %v1003 = vmul.f32 %v926, %v926
      %v1004 = vmul.f32 %v929, %v929
      %v1005 = vmul.f32 %v934, %v934
      %v1006 = vmul.f32 %v937, %v937
      %v1007 = vmul.f32 %v942, %v942
      %v1008 = vmul.f32 %v945, %v945
      %v1009 = vmul.f32 %v950, %v950
      %v1010 = vmul.f32 %v953, %v953
      %v1011 = vmul.f32 %v958, %v958
      %v1012 = vmul.f32 %v961, %v961
      %v1013 = vmul.f32 %v966, %v966
      %v1014 = vmul.f32 %v969, %v969
      %v1015 = vmul.f32 %v974, %v974
      %v1016 = vmul.f32 %v977, %v977
      %v1017 = vadd.f32 %v1001, %v1002
      %v1018 = vadd.f32 %v1017, %v1003
      %v1019 = vadd.f32 %v1018, %v1004
      %v1020 = vadd.f32 %v1019, %v1005
      %v1021 = vadd.f32 %v1020, %v1006
      %v1022 = vadd.f32 %v1021, %v1007
      %v1023 = vadd.f32 %v1022, %v1008
      %v1024 = vadd.f32 %v1023, %v1009
      %v1025 = vadd.f32 %v1024, %v1010
      %v1026 = vadd.f32 %v1025, %v1011
      %v1027 = vadd.f32 %v1026, %v1012
      %v1028 = vadd.f32 %v1027, %v1013
      %v1029 = vadd.f32 %v1028, %v1014
      %v1030 = vadd.f32 %v1029, %v1015
      %v1031 = vadd.f32 %v1030, %v1016
      %v1032 = vrot.slane %v1031, 4
      %v1033 = vadd.f32 %v1031, %v1032
      %v1034 = vrot.slane %v1033, 2
      %v1035 = vadd.f32 %v1033, %v1034
      %v1036 = vrot.slane %v1035, 1
      %v1037 = vadd.f32 %v1035, %v1036
      %vm1038 = vcmask 1040384
      %v1039 = vsel %vm1038, %v1000, %v1037
      %1040 = vst [vmem:[%s141] sm:$0x3] %v1039
      %p1041 = scmp.lt.s32.totalorder %s13, 3
      %s1042 = scalar_select %p1041, %s13, 3
      %s1043 = smul.addr %s1042, 2
      %s1044 = scalar_lea.vmem %s2, %s1043
      // Predicated region
      $region29: #{projection_head_forward.3} parent=27 // pred_check
        %p1045 = pneg %p78
      $region30: #{projection_head_forward.3} parent=27 // pred_check_branch
        %1047 = sbr.rel (%p1045) target = $region32
      $region31: #{projection_head_forward.3} parent=27 // pred_region
        _
      $region32: #{projection_head_forward.3} parent=27 // pred_fallthru
        _
    $region28: #{projection_head_forward.3} parent=5 // pred_fallthru
      _
    %p1048 = scmp.le.s32.totalorder 2, %s8
    // Predicated region
    $region33: #{projection_head_forward.3} parent=5 // pred_check
      %p1049 = pneg %p1048
    $region34: #{projection_head_forward.3} parent=5 // pred_check_branch
      %1051 = sbr.rel (%p1049) target = $region36
    $region35: #{projection_head_forward.3} parent=5 // pred_region
      %s1052 = ssub.s32 %s8, 2
      // Predicated region
      $region37: #{projection_head_forward.3} parent=35 // pred_check
        %p1053 = pneg %p84
      $region38: #{projection_head_forward.3} parent=35 // pred_check_branch
        %1055 = sbr.rel (%p1053) target = $region40
      $region39: #{projection_head_forward.3} parent=35 // pred_region
        %p1056 = scmp.lt.s32.totalorder %s14, 3
        %s1057 = scalar_select %p1056, %s14, 3
        %s1058 = smul.addr %s1057, 2
        %s1059 = scalar_lea.vmem %s2, %s1058
      $region40: #{projection_head_forward.3} parent=35 // pred_fallthru
        _
    $region36: #{projection_head_forward.3} parent=5 // pred_fallthru
      _
  $region6: #{projection_head_forward.3} parent=0 // loop_footer
    %s12 = sadd.s32 1, %s8
  $region7: #{projection_head_forward.3} parent=0 // loop_footer_branch
    %7 = sbr.rel target = $region3
  $region8: #{projection_head_forward.3} parent=0 // loop_exit
    _

// kernel: projection_head_forward.4
$region0: #{projection_head_forward.4}
  #allocation0 [shape = 'u32[]', space=smem, size = 0x4, offset = 0x4, fixed_abs, tag = 'smem constant byte address 0x4 - core index']
  #allocation1 [shape = 'u32[144,128]{1,0:T(1,128)}', space=vmem, size = 0x12000, scoped, tag = 'internal scratch']
  %s0 = inlined_call_operand.vmem [shape: bf16[4,10,18,32], index: 0, kind: input, shape index: {}]
  %s1 = inlined_call_operand.vmem [shape: bf16[384,128], index: 1, kind: input, shape index: {}]
  %s2 = inlined_call_operand.vmem [shape: bf16[128,128], index: 2, kind: input, shape index: {}]
  %s3 = inlined_call_operand.vmem [shape: f32[1,128], index: 3, kind: input, shape index: {}]
  %s4 = inlined_call_operand.vmem [shape: f32[4,2,128], index: 4, kind: output, shape index: {}]
  %s5 = sld [smem:[#allocation0]]
  $region49: #{projection_head_forward.4} parent=0
    _
  %s7 = ssub.s32 1, %s5
  %s8 = scalar_select 0, %s7, %s5
  loop: start=0, step=1, limit=6
  $region2: #{projection_head_forward.4} parent=0 // loop_pre_header
    _
  $region3: #{projection_head_forward.4} parent=0 // loop_header
    %s10 = sphi 0, %s14
    %p11 = scmp.ge.s32.totalorder %s10, 6
    %s20 = sphi 0, %s22
    %s23 = sphi 0, %s20
    %s24 = sphi 0, %s23
    %s40 = sphi 0, %s24
    %s44 = sphi 0, %s44
    %s46 = sphi 0, %s44
    %s47 = sphi 0, %s46
    %s61 = sphi 0, %s47
    %s65 = sphi 0, %s65
    %s67 = sphi 0, %s65
    %s68 = sphi 0, %s67
    %s82 = sphi 0, %s68
    %s86 = sphi 0, %s86
    %s88 = sphi 0, %s86
    %s89 = sphi 0, %s88
    %s103 = sphi 0, %s89
    %s109 = sphi 0, %s111
    %s112 = sphi 0, %s109
    %s113 = sphi 0, %s112
    %s129 = sphi 0, %s113
  $region4: #{projection_head_forward.4} parent=0 // loop_header_branch
    %13 = sbr.rel (%p11) target = $region8
  $region5: #{projection_head_forward.4} parent=0 // loop_body
    %s15 = ssub.s32 %s10, 1
    %s16 = ssub.s32 %s10, 2
    %s17 = sadd.s32 %s10, 1
    %s18 = ssub.s32 %s10, %s17
    %p19 = scmp.eq.s32.totalorder %s18, 0
    %s21 = sadd.s32 %s20, 1
    %s22 = scalar_select %p19, %s20, %s21
    %p25 = pneg %p19
    %p26 = scmp.eq.s32.totalorder %s10, 3
    %p27 = por %p25, %p26
    %p28 = scmp.ne.s32.totalorder %s20, %s23
    %p29 = scmp.eq.s32.totalorder %s10, 0
    %p30 = por %p28, %p29
    %p31 = scmp.ne.s32.totalorder %s20, %s23
    %p32 = scmp.eq.s32.totalorder %s15, 3
    %p33 = por %p31, %p32
    %p34 = scmp.ne.s32.totalorder %s23, %s24
    %p35 = scmp.eq.s32.totalorder %s15, 0
    %p36 = por %p34, %p35
    %p37 = scmp.ne.s32.totalorder %s23, %s24
    %p38 = scmp.eq.s32.totalorder %s16, 3
    %p39 = por %p37, %p38
    %p41 = scmp.ne.s32.totalorder %s24, %s40
    %p42 = scmp.eq.s32.totalorder %s16, 0
    %p43 = por %p41, %p42
    %s45 = sadd.s32 %s44, 1
    %p48 = scmp.eq.s32.totalorder %s10, 3
    %p49 = scmp.ne.s32.totalorder %s44, %s46
    %p50 = scmp.eq.s32.totalorder %s10, 0
    %p51 = por %p49, %p50
    %p52 = scmp.ne.s32.totalorder %s44, %s46
    %p53 = scmp.eq.s32.totalorder %s15, 3
    %p54 = por %p52, %p53
    %p55 = scmp.ne.s32.totalorder %s46, %s47
    %p56 = scmp.eq.s32.totalorder %s15, 0
    %p57 = por %p55, %p56
    %p58 = scmp.ne.s32.totalorder %s46, %s47
    %p59 = scmp.eq.s32.totalorder %s16, 3
    %p60 = por %p58, %p59
    %p62 = scmp.ne.s32.totalorder %s47, %s61
    %p63 = scmp.eq.s32.totalorder %s16, 0
    %p64 = por %p62, %p63
    %s66 = sadd.s32 %s65, 1
    %p69 = scmp.eq.s32.totalorder %s10, 3
    %p70 = scmp.ne.s32.totalorder %s65, %s67
    %p71 = scmp.eq.s32.totalorder %s10, 0
    %p72 = por %p70, %p71
    %p73 = scmp.ne.s32.totalorder %s65, %s67
    %p74 = scmp.eq.s32.totalorder %s15, 3
    %p75 = por %p73, %p74
    %p76 = scmp.ne.s32.totalorder %s67, %s68
    %p77 = scmp.eq.s32.totalorder %s15, 0
    %p78 = por %p76, %p77
    %p79 = scmp.ne.s32.totalorder %s67, %s68
    %p80 = scmp.eq.s32.totalorder %s16, 3
    %p81 = por %p79, %p80
    %p83 = scmp.ne.s32.totalorder %s68, %s82
    %p84 = scmp.eq.s32.totalorder %s16, 0
    %p85 = por %p83, %p84
    %s87 = sadd.s32 %s86, 1
    %p90 = scmp.eq.s32.totalorder %s10, 3
    %p91 = scmp.ne.s32.totalorder %s86, %s88
    %p92 = scmp.eq.s32.totalorder %s10, 0
    %p93 = por %p91, %p92
    %p94 = scmp.ne.s32.totalorder %s86, %s88
    %p95 = scmp.eq.s32.totalorder %s15, 3
    %p96 = por %p94, %p95
    %p97 = scmp.ne.s32.totalorder %s88, %s89
    %p98 = scmp.eq.s32.totalorder %s15, 0
    %p99 = por %p97, %p98
    %p100 = scmp.ne.s32.totalorder %s88, %s89
    %p101 = scmp.eq.s32.totalorder %s16, 3
    %p102 = por %p100, %p101
    %p104 = scmp.ne.s32.totalorder %s89, %s103
    %p105 = scmp.eq.s32.totalorder %s16, 0
    %p106 = por %p104, %p105
    %s107 = ssub.s32 %s10, %s17
    %p108 = scmp.eq.s32.totalorder %s107, 0
    %s110 = sadd.s32 %s109, 1
    %s111 = scalar_select %p108, %s109, %s110
    %p114 = pneg %p108
    %p115 = scmp.eq.s32.totalorder %s10, 3
    %p116 = por %p114, %p115
    %p117 = scmp.ne.s32.totalorder %s109, %s112
    %p118 = scmp.eq.s32.totalorder %s10, 0
    %p119 = por %p117, %p118
    %p120 = scmp.ne.s32.totalorder %s109, %s112
    %p121 = scmp.eq.s32.totalorder %s15, 3
    %p122 = por %p120, %p121
    %p123 = scmp.ne.s32.totalorder %s112, %s113
    %p124 = scmp.eq.s32.totalorder %s15, 0
    %p125 = por %p123, %p124
    %p126 = scmp.ne.s32.totalorder %s112, %s113
    %p127 = scmp.eq.s32.totalorder %s16, 3
    %p128 = por %p126, %p127
    %p130 = scmp.ne.s32.totalorder %s113, %s129
    %p131 = scmp.eq.s32.totalorder %s16, 0
    %p132 = por %p130, %p131
    %p133 = scmp.le.s32.totalorder 1, %s10
    %p134 = scmp.lt.s32.totalorder %s10, 5
    %p135 = pnand %p133, %p134
    %p136 = pneg %p135
    // Predicated region
    $region9: #{projection_head_forward.4} parent=5 // pred_check
      _
    $region10: #{projection_head_forward.4} parent=5 // pred_check_branch
      %138 = sbr.rel (%p135) target = $region12
    $region11: #{projection_head_forward.4} parent=5 // pred_region
      %s139 = ssub.s32 %s10, 1
      // Predicated region
      $region13: #{projection_head_forward.4} parent=11 // pred_check
        %p140 = pneg %p57
      $region14: #{projection_head_forward.4} parent=11 // pred_check_branch
        %142 = sbr.rel (%p140) target = $region16
      $region15: #{projection_head_forward.4} parent=11 // pred_region
        _
      $region16: #{projection_head_forward.4} parent=11 // pred_fallthru
        _
      // Predicated region
      $region17: #{projection_head_forward.4} parent=11 // pred_check
        %p143 = pneg %p78
      $region18: #{projection_head_forward.4} parent=11 // pred_check_branch
        %145 = sbr.rel (%p143) target = $region20
      $region19: #{projection_head_forward.4} parent=11 // pred_region
        _
      $region20: #{projection_head_forward.4} parent=11 // pred_fallthru
        _
      // Predicated region
      $region21: #{projection_head_forward.4} parent=11 // pred_check
        %p146 = pneg %p99
      $region22: #{projection_head_forward.4} parent=11 // pred_check_branch
        %148 = sbr.rel (%p146) target = $region24
      $region23: #{projection_head_forward.4} parent=11 // pred_region
        _
      $region24: #{projection_head_forward.4} parent=11 // pred_fallthru
        _
    $region12: #{projection_head_forward.4} parent=5 // pred_fallthru
      _
    %p149 = scmp.lt.s32.totalorder %s10, 4
    // Predicated region
    $region25: #{projection_head_forward.4} parent=5 // pred_check
      %p150 = pneg %p149
    $region26: #{projection_head_forward.4} parent=5 // pred_check_branch
      %152 = sbr.rel (%p150) target = $region28
    $region27: #{projection_head_forward.4} parent=5 // pred_region
      // Predicated region
      $region29: #{projection_head_forward.4} parent=27 // pred_check
        %p153 = pneg %p30
      $region30: #{projection_head_forward.4} parent=27 // pred_check_branch
        %155 = sbr.rel (%p153) target = $region32
      $region31: #{projection_head_forward.4} parent=27 // pred_region
        %p156 = scmp.lt.s32.totalorder %s10, 3
        %s157 = scalar_select %p156, %s10, 3
        %s158 = smul.addr %s157, 30
        %s159 = smul.addr %s158, 4
        %s160 = scalar_lea.vmem %s0, %s159
      $region32: #{projection_head_forward.4} parent=27 // pred_fallthru
        _
    $region28: #{projection_head_forward.4} parent=5 // pred_fallthru
      _
    %p161 = scmp.le.s32.totalorder 1, %s10
    %p162 = scmp.lt.s32.totalorder %s10, 5
    %p163 = pnand %p161, %p162
    %p164 = pneg %p163
    // Predicated region
    $region33: #{projection_head_forward.4} parent=5 // pred_check
      _
    $region34: #{projection_head_forward.4} parent=5 // pred_check_branch
      %166 = sbr.rel (%p163) target = $region36
    $region35: #{projection_head_forward.4} parent=5 // pred_region
      %s167 = ssub.s32 %s10, 1
      %p168 = scmp.lt.s32.totalorder %s15, 3
      %s169 = scalar_select %p168, %s15, 3
      %s170 = smul.addr %s169, 30
      %s171 = smul.addr %s170, 4
      %s172 = scalar_lea.vmem %s0, %s171
      %p173 = pneg %p36
      %p174 = pneg %p33
      %p175 = pneg %p57
      %p176 = pneg %p54
      %p177 = pneg %p78
      %p178 = pneg %p75
      %p179 = pneg %p99
      %p180 = pneg %p96
      %p181 = pneg %p125
      %p182 = pneg %p122
      %p183 = scmp.lt.s32.totalorder %s15, 3
      %s184 = scalar_select %p183, %s15, 3
      %s185 = smul.addr %s184, 2
      %s186 = scalar_lea.vmem %s4, %s185
      %p187 = scmp.lt.s32.totalorder %s15, 3
      %s188 = scalar_select %p187, %s15, 3
      %s189 = smul.addr %s188, 30
      %s190 = smul.addr %s189, 4
      %s191 = scalar_lea.vmem %s0, %s190
      %p192 = scmp.lt.s32.totalorder %s15, 3
      %s193 = scalar_select %p192, %s15, 3
      %s194 = smul.addr %s193, 2
      %s195 = scalar_lea.vmem %s4, %s194
      %v197 = vld [vmem:[%s191] sm:$0xf]
      %v198 = vld [vmem:[%s191 + $0x4] sm:$0xf]
      %v199 = vld [vmem:[%s191 + $0x8] sm:$0x1]
      %v200 = vld [vmem:[%s191 + $0xc] sm:$0xf]
      %v201 = vld [vmem:[%s191 + $0x10] sm:$0xf]
      %v202 = vld [vmem:[%s191 + $0x14] sm:$0x1]
      %v203 = vld [vmem:[%s191 + $0x18] sm:$0xf]
      %v204 = vld [vmem:[%s191 + $0x1c] sm:$0xf]
      %v205 = vld [vmem:[%s191 + $0x20] sm:$0x1]
      %v206 = vld [vmem:[%s191 + $0x24] sm:$0xf]
      %v207 = vld [vmem:[%s191 + $0x28] sm:$0xf]
      %v208 = vld [vmem:[%s191 + $0x2c] sm:$0x1]
      %v209 = vld [vmem:[%s191 + $0x30] sm:$0xf]
      %v210 = vld [vmem:[%s191 + $0x34] sm:$0xf]
      %v211 = vld [vmem:[%s191 + $0x38] sm:$0x1]
      %v212 = vld [vmem:[%s191 + $0x3c] sm:$0xf]
      %v213 = vld [vmem:[%s191 + $0x40] sm:$0xf]
      %v214 = vld [vmem:[%s191 + $0x44] sm:$0x1]
      %v215 = vld [vmem:[%s191 + $0x48] sm:$0xf]
      %v216 = vld [vmem:[%s191 + $0x4c] sm:$0xf]
      %v217 = vld [vmem:[%s191 + $0x50] sm:$0x1]
      %v218 = vld [vmem:[%s191 + $0x54] sm:$0xf]
      %v219 = vld [vmem:[%s191 + $0x58] sm:$0xf]
      %v220 = vld [vmem:[%s191 + $0x5c] sm:$0x1]
      %v221 = vld [vmem:[%s191 + $0x60] sm:$0xf]
      %v222 = vld [vmem:[%s191 + $0x64] sm:$0xf]
      %v223 = vld [vmem:[%s191 + $0x68] sm:$0x1]
      %v224 = vld [vmem:[%s191 + $0x6c] sm:$0xf]
      %v225 = vld [vmem:[%s191 + $0x70] sm:$0xf]
      %v226 = vld [vmem:[%s191 + $0x74] sm:$0x1]
      %v247 = vunpack.c.l.b16 %v197
      %v248 = vunpack.c.l.b16 %v198
      %v249 = vunpack.c.l.b16 %v200
      %v250 = vunpack.c.l.b16 %v201
      %v251 = vunpack.c.l.b16 %v203
      %v252 = vunpack.c.l.b16 %v204
      %v253 = vunpack.c.l.b16 %v206
      %v254 = vunpack.c.l.b16 %v207
      %v255 = vunpack.c.l.b16 %v209
      %v256 = vunpack.c.l.b16 %v210
      %v257 = vunpack.c.l.b16 %v212
      %v258 = vunpack.c.l.b16 %v213
      %v259 = vunpack.c.l.b16 %v215
      %v260 = vunpack.c.l.b16 %v216
      %v261 = vunpack.c.l.b16 %v218
      %v262 = vunpack.c.l.b16 %v219
      %v263 = vunpack.c.l.b16 %v221
      %v264 = vunpack.c.l.b16 %v222
      %v265 = vunpack.c.l.b16 %v224
      %v266 = vunpack.c.l.b16 %v225
      %v267 = vpack.c.b16 %v248, %v247
      %v268 = vpack.c.b16 %v250, %v249
      %v269 = vpack.c.b16 %v252, %v251
      %v270 = vpack.c.b16 %v254, %v253
      %v271 = vpack.c.b16 %v256, %v255
      %v272 = vpack.c.b16 %v258, %v257
      %v273 = vpack.c.b16 %v260, %v259
      %v274 = vpack.c.b16 %v262, %v261
      %v275 = vpack.c.b16 %v264, %v263
      %v276 = vpack.c.b16 %v266, %v265
      %v287 = vunpack.c.l.b16 %v199
      %v288 = vunpack.c.l.b16 %v202
      %v289 = vunpack.c.l.b16 %v205
      %v290 = vunpack.c.l.b16 %v208
      %v291 = vunpack.c.l.b16 %v211
      %v292 = vunpack.c.l.b16 %v214
      %v293 = vunpack.c.l.b16 %v217
      %v294 = vunpack.c.l.b16 %v220
      %v295 = vunpack.c.l.b16 %v223
      %v296 = vunpack.c.l.b16 %v226
      %v297 = vpack.c.b16 %v287, %v287
      %v298 = vpack.c.b16 %v288, %v288
      %v299 = vpack.c.b16 %v289, %v289
      %v300 = vpack.c.b16 %v290, %v290
      %v301 = vpack.c.b16 %v291, %v291
      %v302 = vpack.c.b16 %v292, %v292
      %v303 = vpack.c.b16 %v293, %v293
      %v304 = vpack.c.b16 %v294, %v294
      %v305 = vpack.c.b16 %v295, %v295
      %v306 = vpack.c.b16 %v296, %v296
      %vm307 = vsmask.f32 7424
      %v309 = vshrl.u32 %v267, 16
      %v311 = vshll.u32 %v267, 16
      %v313 = vrot.slane %v311, 1
      %v314 = vor.u32 %v309, %v313
      %v316 = vshll.u32 %v297, 16
      %v318 = vrot.slane %v316, 1
      %v319 = vsel %vm307, %v314, %v318
      %v321 = vshrl.u32 %v268, 16
      %v323 = vshll.u32 %v268, 16
      %v325 = vrot.slane %v323, 1
      %v326 = vor.u32 %v321, %v325
      %v328 = vshll.u32 %v298, 16
      %v330 = vrot.slane %v328, 1
      %v331 = vsel %vm307, %v326, %v330
      %v333 = vshrl.u32 %v269, 16
      %v335 = vshll.u32 %v269, 16
      %v337 = vrot.slane %v335, 1
      %v338 = vor.u32 %v333, %v337
      %v340 = vshll.u32 %v299, 16
      %v342 = vrot.slane %v340, 1
      %v343 = vsel %vm307, %v338, %v342
      %v345 = vshrl.u32 %v270, 16
      %v347 = vshll.u32 %v270, 16
      %v349 = vrot.slane %v347, 1
      %v350 = vor.u32 %v345, %v349
      %v352 = vshll.u32 %v300, 16
      %v354 = vrot.slane %v352, 1
      %v355 = vsel %vm307, %v350, %v354
      %v357 = vshrl.u32 %v271, 16
      %v359 = vshll.u32 %v271, 16
      %v361 = vrot.slane %v359, 1
      %v362 = vor.u32 %v357, %v361
      %v364 = vshll.u32 %v301, 16
      %v366 = vrot.slane %v364, 1
      %v367 = vsel %vm307, %v362, %v366
      %v369 = vshrl.u32 %v272, 16
      %v371 = vshll.u32 %v272, 16
      %v373 = vrot.slane %v371, 1
      %v374 = vor.u32 %v369, %v373
      %v376 = vshll.u32 %v302, 16
      %v378 = vrot.slane %v376, 1
      %v379 = vsel %vm307, %v374, %v378
      %v381 = vshrl.u32 %v273, 16
      %v383 = vshll.u32 %v273, 16
      %v385 = vrot.slane %v383, 1
      %v386 = vor.u32 %v381, %v385
      %v388 = vshll.u32 %v303, 16
      %v390 = vrot.slane %v388, 1
      %v391 = vsel %vm307, %v386, %v390
      %v393 = vshrl.u32 %v274, 16
      %v395 = vshll.u32 %v274, 16
      %v397 = vrot.slane %v395, 1
      %v398 = vor.u32 %v393, %v397
      %v400 = vshll.u32 %v304, 16
      %v402 = vrot.slane %v400, 1
      %v403 = vsel %vm307, %v398, %v402
      %v405 = vshrl.u32 %v275, 16
      %v407 = vshll.u32 %v275, 16
      %v409 = vrot.slane %v407, 1
      %v410 = vor.u32 %v405, %v409
      %v412 = vshll.u32 %v305, 16
      %v414 = vrot.slane %v412, 1
      %v415 = vsel %vm307, %v410, %v414
      %v417 = vshrl.u32 %v276, 16
      %v419 = vshll.u32 %v276, 16
      %v421 = vrot.slane %v419, 1
      %v422 = vor.u32 %v417, %v421
      %v424 = vshll.u32 %v306, 16
      %v426 = vrot.slane %v424, 1
      %v427 = vsel %vm307, %v422, %v426
      %428 = vrot.lane.b32.xlu0 %v319, 32
      %v429 = vpop.permute.xlu0 %428
      %430 = vrot.lane.b32.xlu0 %v331, 32
      %v431 = vpop.permute.xlu0 %430
      %432 = vrot.lane.b32.xlu0 %v343, 32
      %v433 = vpop.permute.xlu0 %432
      %434 = vrot.lane.b32.xlu0 %v355, 32
      %v435 = vpop.permute.xlu0 %434
      %436 = vrot.lane.b32.xlu0 %v367, 32
      %v437 = vpop.permute.xlu0 %436
      %438 = vrot.lane.b32.xlu0 %v379, 32
      %v439 = vpop.permute.xlu0 %438
      %440 = vrot.lane.b32.xlu0 %v391, 32
      %v441 = vpop.permute.xlu0 %440
      %442 = vrot.lane.b32.xlu0 %v403, 32
      %v443 = vpop.permute.xlu0 %442
      %444 = vrot.lane.b32.xlu0 %v415, 32
      %v445 = vpop.permute.xlu0 %444
      %446 = vrot.lane.b32.xlu0 %v427, 32
      %v447 = vpop.permute.xlu0 %446
      %vm448 = vcmask 1046528
      %v449 = vrot.slane %v267, 1
      %v450 = vrot.slane %v297, 1
      %v451 = vsel %vm448, %v449, %v450
      %v452 = vrot.slane %v268, 1
      %v453 = vrot.slane %v298, 1
      %v454 = vsel %vm448, %v452, %v453
      %v455 = vrot.slane %v269, 1
      %v456 = vrot.slane %v299, 1
      %v457 = vsel %vm448, %v455, %v456
      %v458 = vrot.slane %v270, 1
      %v459 = vrot.slane %v300, 1
      %v460 = vsel %vm448, %v458, %v459
      %v461 = vrot.slane %v271, 1
      %v462 = vrot.slane %v301, 1
      %v463 = vsel %vm448, %v461, %v462
      %v464 = vrot.slane %v272, 1
      %v465 = vrot.slane %v302, 1
      %v466 = vsel %vm448, %v464, %v465
      %v467 = vrot.slane %v273, 1
      %v468 = vrot.slane %v303, 1
      %v469 = vsel %vm448, %v467, %v468
      %v470 = vrot.slane %v274, 1
      %v471 = vrot.slane %v304, 1
      %v472 = vsel %vm448, %v470, %v471
      %v473 = vrot.slane %v275, 1
      %v474 = vrot.slane %v305, 1
      %v475 = vsel %vm448, %v473, %v474
      %v476 = vrot.slane %v276, 1
      %v477 = vrot.slane %v306, 1
      %v478 = vsel %vm448, %v476, %v477
      %479 = vrot.lane.b32.xlu0 %v451, 64
      %v480 = vpop.permute.xlu0 %479
      %481 = vrot.lane.b32.xlu0 %v454, 64
      %v482 = vpop.permute.xlu0 %481
      %483 = vrot.lane.b32.xlu0 %v457, 64
      %v484 = vpop.permute.xlu0 %483
      %485 = vrot.lane.b32.xlu0 %v460, 64
      %v486 = vpop.permute.xlu0 %485
      %487 = vrot.lane.b32.xlu0 %v463, 64
      %v488 = vpop.permute.xlu0 %487
      %489 = vrot.lane.b32.xlu0 %v466, 64
      %v490 = vpop.permute.xlu0 %489
      %491 = vrot.lane.b32.xlu0 %v469, 64
      %v492 = vpop.permute.xlu0 %491
      %493 = vrot.lane.b32.xlu0 %v472, 64
      %v494 = vpop.permute.xlu0 %493
      %495 = vrot.lane.b32.xlu0 %v475, 64
      %v496 = vpop.permute.xlu0 %495
      %497 = vrot.lane.b32.xlu0 %v478, 64
      %v498 = vpop.permute.xlu0 %497
      %vm499 = vcmask 261120
      %v501 = vsel %vm499, %v267, %v429
      %v503 = vsel %vm499, %v268, %v431
      %v505 = vsel %vm499, %v269, %v433
      %v507 = vsel %vm499, %v270, %v435
      %v509 = vsel %vm499, %v271, %v437
      %v511 = vsel %vm499, %v272, %v439
      %v513 = vsel %vm499, %v273, %v441
      %v515 = vsel %vm499, %v274, %v443
      %v517 = vsel %vm499, %v275, %v445
      %v519 = vsel %vm499, %v276, %v447
      %vm520 = vcmask 523264
      %v522 = vsel %vm520, %v501, %v480
      %v524 = vsel %vm520, %v503, %v482
      %v526 = vsel %vm520, %v505, %v484
      %v528 = vsel %vm520, %v507, %v486
      %v530 = vsel %vm520, %v509, %v488
      %v532 = vsel %vm520, %v511, %v490
      %v534 = vsel %vm520, %v513, %v492
      %v536 = vsel %vm520, %v515, %v494
      %v538 = vsel %vm520, %v517, %v496
      %v540 = vsel %vm520, %v519, %v498
      %549 = vrot.lane.b32.xlu0 %v524, 96
      %v550 = vpop.permute.xlu0 %549
      %551 = vrot.lane.b32.xlu0 %v526, 96
      %v552 = vpop.permute.xlu0 %551
      %553 = vrot.lane.b32.xlu0 %v528, 96
      %v554 = vpop.permute.xlu0 %553
      %555 = vrot.lane.b32.xlu0 %v530, 96
      %v556 = vpop.permute.xlu0 %555
      %557 = vrot.lane.b32.xlu0 %v532, 96
      %v558 = vpop.permute.xlu0 %557
      %559 = vrot.lane.b32.xlu0 %v534, 96
      %v560 = vpop.permute.xlu0 %559
      %561 = vrot.lane.b32.xlu0 %v536, 96
      %v562 = vpop.permute.xlu0 %561
      %563 = vrot.lane.b32.xlu0 %v538, 96
      %v564 = vpop.permute.xlu0 %563
      %566 = vrot.lane.b32.xlu0 %v526, 64
      %v567 = vpop.permute.xlu0 %566
      %568 = vrot.lane.b32.xlu0 %v528, 64
      %v569 = vpop.permute.xlu0 %568
      %570 = vrot.lane.b32.xlu0 %v530, 64
      %v571 = vpop.permute.xlu0 %570
      %572 = vrot.lane.b32.xlu0 %v532, 64
      %v573 = vpop.permute.xlu0 %572
      %574 = vrot.lane.b32.xlu0 %v534, 64
      %v575 = vpop.permute.xlu0 %574
      %576 = vrot.lane.b32.xlu0 %v536, 64
      %v577 = vpop.permute.xlu0 %576
      %578 = vrot.lane.b32.xlu0 %v538, 64
      %v579 = vpop.permute.xlu0 %578
      %580 = vrot.lane.b32.xlu0 %v540, 64
      %v581 = vpop.permute.xlu0 %580
      %vm582 = vcmask 785408
      %v584 = vsel %vm582, %v522, %v550
      %v587 = vsel %vm582, %v524, %v552
      %v590 = vsel %vm582, %v526, %v554
      %v593 = vsel %vm582, %v528, %v556
      %v596 = vsel %vm582, %v530, %v558
      %v599 = vsel %vm582, %v532, %v560
      %v602 = vsel %vm582, %v534, %v562
      %v605 = vsel %vm582, %v536, %v564
      %v608 = vsel %vm520, %v550, %v567
      %v611 = vsel %vm520, %v552, %v569
      %v614 = vsel %vm520, %v554, %v571
      %v617 = vsel %vm520, %v556, %v573
      %v620 = vsel %vm520, %v558, %v575
      %v623 = vsel %vm520, %v560, %v577
      %v626 = vsel %vm520, %v562, %v579
      %v629 = vsel %vm520, %v564, %v581
      %v632 = vsel %vm499, %v567, 0
      %v634 = vsel %vm499, %v569, 0
      %v636 = vsel %vm499, %v571, 0
      %v638 = vsel %vm499, %v573, 0
      %v640 = vsel %vm499, %v575, 0
      %v642 = vsel %vm499, %v577, 0
      %v644 = vsel %vm499, %v579, 0
      %v646 = vsel %vm499, %v581, 0
      %v648 = vld [vmem:[%s1] sm:$0xf]
      %v649 = vld [vmem:[%s1 + $0x4] sm:$0xf]
      %v650 = vld [vmem:[%s1 + $0x8] sm:$0xf]
      %v651 = vld [vmem:[%s1 + $0xc] sm:$0xf]
      %v652 = vld [vmem:[%s1 + $0x10] sm:$0xf]
      %v653 = vld [vmem:[%s1 + $0x14] sm:$0xf]
      %v654 = vld [vmem:[%s1 + $0x18] sm:$0xf]
      %v655 = vld [vmem:[%s1 + $0x1c] sm:$0xf]
      %v656 = vld [vmem:[%s1 + $0x20] sm:$0xf]
      %v657 = vld [vmem:[%s1 + $0x24] sm:$0xf]
      %v658 = vld [vmem:[%s1 + $0x28] sm:$0xf]
      %v659 = vld [vmem:[%s1 + $0x2c] sm:$0xf]
      %v660 = vld [vmem:[%s1 + $0x30] sm:$0xf]
      %v661 = vld [vmem:[%s1 + $0x34] sm:$0xf]
      %v662 = vld [vmem:[%s1 + $0x38] sm:$0xf]
      %v663 = vld [vmem:[%s1 + $0x3c] sm:$0xf]
      %v664 = vld [vmem:[%s1 + $0x40] sm:$0xf]
      %v665 = vld [vmem:[%s1 + $0x44] sm:$0xf]
      %v666 = vld [vmem:[%s1 + $0x48] sm:$0xf]
      %v667 = vld [vmem:[%s1 + $0x4c] sm:$0xf]
      %v668 = vld [vmem:[%s1 + $0x50] sm:$0xf]
      %v669 = vld [vmem:[%s1 + $0x54] sm:$0xf]
      %v670 = vld [vmem:[%s1 + $0x58] sm:$0xf]
      %v671 = vld [vmem:[%s1 + $0x5c] sm:$0xf]
      %v672 = vld [vmem:[%s1 + $0x60] sm:$0xf]
      %v673 = vld [vmem:[%s1 + $0x64] sm:$0xf]
      %v674 = vld [vmem:[%s1 + $0x68] sm:$0xf]
      %v675 = vld [vmem:[%s1 + $0x6c] sm:$0xf]
      %v676 = vld [vmem:[%s1 + $0x70] sm:$0xf]
      %v677 = vld [vmem:[%s1 + $0x74] sm:$0xf]
      %v678 = vld [vmem:[%s1 + $0x78] sm:$0xf]
      %v679 = vld [vmem:[%s1 + $0x7c] sm:$0xf]
      %v680 = vld [vmem:[%s1 + $0x80] sm:$0xf]
      %v681 = vld [vmem:[%s1 + $0x84] sm:$0xf]
      %v682 = vld [vmem:[%s1 + $0x88] sm:$0xf]
      %v683 = vld [vmem:[%s1 + $0x8c] sm:$0xf]
      %v684 = vld [vmem:[%s1 + $0x90] sm:$0xf]
      %v685 = vld [vmem:[%s1 + $0x94] sm:$0xf]
      %v686 = vld [vmem:[%s1 + $0x98] sm:$0xf]
      %v687 = vld [vmem:[%s1 + $0x9c] sm:$0xf]
      %v688 = vld [vmem:[%s1 + $0xa0] sm:$0xf]
      %v689 = vld [vmem:[%s1 + $0xa4] sm:$0xf]
      %v690 = vld [vmem:[%s1 + $0xa8] sm:$0xf]
      %v691 = vld [vmem:[%s1 + $0xac] sm:$0xf]
      %v692 = vld [vmem:[%s1 + $0xb0] sm:$0xf]
      %v693 = vld [vmem:[%s1 + $0xb4] sm:$0xf]
      %v694 = vld [vmem:[%s1 + $0xb8] sm:$0xf]
      %v695 = vld [vmem:[%s1 + $0xbc] sm:$0xf]
      %v744 = vunpack.c.l.b16 %v648
      %v745 = vunpack.c.l.b16 %v649
      %v746 = vunpack.c.l.b16 %v650
      %v747 = vunpack.c.l.b16 %v651
      %v748 = vunpack.c.l.b16 %v652
      %v749 = vunpack.c.l.b16 %v653
      %v750 = vunpack.c.l.b16 %v654
      %v751 = vunpack.c.l.b16 %v655
      %v752 = vunpack.c.l.b16 %v656
      %v753 = vunpack.c.l.b16 %v657
      %v754 = vunpack.c.l.b16 %v658
      %v755 = vunpack.c.l.b16 %v659
      %v756 = vunpack.c.l.b16 %v660
      %v757 = vunpack.c.l.b16 %v661
      %v758 = vunpack.c.l.b16 %v662
      %v759 = vunpack.c.l.b16 %v663
      %v760 = vunpack.c.l.b16 %v664
      %v761 = vunpack.c.l.b16 %v665
      %v762 = vunpack.c.l.b16 %v666
      %v763 = vunpack.c.l.b16 %v667
      %v764 = vunpack.c.l.b16 %v668
      %v765 = vunpack.c.l.b16 %v669
      %v766 = vunpack.c.l.b16 %v670
      %v767 = vunpack.c.l.b16 %v671
      %v768 = vunpack.c.l.b16 %v672
      %v769 = vunpack.c.l.b16 %v673
      %v770 = vunpack.c.l.b16 %v674
      %v771 = vunpack.c.l.b16 %v675
      %v772 = vunpack.c.l.b16 %v676
      %v773 = vunpack.c.l.b16 %v677
      %v774 = vunpack.c.l.b16 %v678
      %v775 = vunpack.c.l.b16 %v679
      %v776 = vunpack.c.l.b16 %v680
      %v777 = vunpack.c.l.b16 %v681
      %v778 = vunpack.c.l.b16 %v682
      %v779 = vunpack.c.l.b16 %v683
      %v780 = vunpack.c.l.b16 %v684
      %v781 = vunpack.c.l.b16 %v685
      %v782 = vunpack.c.l.b16 %v686
      %v783 = vunpack.c.l.b16 %v687
      %v784 = vunpack.c.l.b16 %v688
      %v785 = vunpack.c.l.b16 %v689
      %v786 = vunpack.c.l.b16 %v690
      %v787 = vunpack.c.l.b16 %v691
      %v788 = vunpack.c.l.b16 %v692
      %v789 = vunpack.c.l.b16 %v693
      %v790 = vunpack.c.l.b16 %v694
      %v791 = vunpack.c.l.b16 %v695
      %v792 = vpack.c.b16 %v745, %v744
      %v793 = vpack.c.b16 %v747, %v746
      %v794 = vpack.c.b16 %v749, %v748
      %v795 = vpack.c.b16 %v751, %v750
      %v796 = vpack.c.b16 %v753, %v752
      %v797 = vpack.c.b16 %v755, %v754
      %v798 = vpack.c.b16 %v757, %v756
      %v799 = vpack.c.b16 %v759, %v758
      %v800 = vpack.c.b16 %v761, %v760
      %v801 = vpack.c.b16 %v763, %v762
      %v802 = vpack.c.b16 %v765, %v764
      %v803 = vpack.c.b16 %v767, %v766
      %v804 = vpack.c.b16 %v769, %v768
      %v805 = vpack.c.b16 %v771, %v770
      %v806 = vpack.c.b16 %v773, %v772
      %v807 = vpack.c.b16 %v775, %v774
      %v808 = vpack.c.b16 %v777, %v776
      %v809 = vpack.c.b16 %v779, %v778
      %v810 = vpack.c.b16 %v781, %v780
      %v811 = vpack.c.b16 %v783, %v782
      %v812 = vpack.c.b16 %v785, %v784
      %v813 = vpack.c.b16 %v787, %v786
      %v814 = vpack.c.b16 %v789, %v788
      %v815 = vpack.c.b16 %v791, %v790
      %840 = vmatprep.subr.bf16.mxu0 0
      %841 = vmatpush1.bf16.msra.mxu0 %v792
      %842 = vmatprep.subr.bf16.mxu0 0
      %843 = vmatpush1.bf16.msra.mxu0 %v793
      %844 = vmatprep.subr.bf16.mxu0 0
      %845 = vmatpush1.bf16.msra.mxu0 %v794
      %846 = vmatprep.subr.bf16.mxu0 0
      %847 = vmatpush1.bf16.msra.mxu0 %v795
      %848 = vmatprep.subr.bf16.mxu0 0
      %849 = vmatpush1.bf16.msra.mxu0 %v796
      %850 = vmatprep.subr.bf16.mxu0 0
      %851 = vmatpush1.bf16.msra.mxu0 %v797
      %852 = vmatprep.subr.bf16.mxu0 0
      %853 = vmatpush1.bf16.msra.mxu0 %v798
      %854 = vmatprep.subr.bf16.mxu0 0
      %855 = vmatpush1.bf16.msra.mxu0 %v799
      %856 = vmatprep.subr.bf16.mxu0 0
      %857 = vmatpush1.bf16.msra.mxu0 %v800
      %858 = vmatprep.subr.bf16.mxu0 0
      %859 = vmatpush1.bf16.msra.mxu0 %v801
      %860 = vmatprep.subr.bf16.mxu0 0
      %861 = vmatpush1.bf16.msra.mxu0 %v802
      %862 = vmatprep.subr.bf16.mxu0 0
      %863 = vmatpush1.bf16.msra.mxu0 %v803
      %864 = vmatprep.subr.bf16.mxu0 0
      %865 = vmatpush1.bf16.msra.mxu0 %v804
      %866 = vmatprep.subr.bf16.mxu0 0
      %867 = vmatpush1.bf16.msra.mxu0 %v805
      %868 = vmatprep.subr.bf16.mxu0 0
      %869 = vmatpush1.bf16.msra.mxu0 %v806
      %870 = vmatprep.subr.bf16.mxu0 0
      %871 = vmatpush1.bf16.msra.mxu0 %v807
      %872 = vmatprep.mubr.bf16.mxu0 %v608
      %873 = vmatmul.mubr.bf16.gmra.mrb[0].mxu0 %v584
      %v874 = vpop.f32.mrb[0].mxu0
      %v875 = vadd.f32 0.0, %v874
      %v876 = vpop.f32.mrb[0].mxu0
      %v877 = vpop.f32.mrb[0].mxu0
      %v878 = vadd.f32 0.0, %v877
      %v879 = vpop.f32.mrb[0].mxu0
      %880 = vmatprep.mubr.bf16.mxu0 %v611
      %881 = vmatmul.mubr.bf16.gmra.mrb[0].mxu0 %v587
      %v882 = vpop.f32.mrb[0].mxu0
      %v883 = vadd.f32 0.0, %v882
      %v884 = vpop.f32.mrb[0].mxu0
      %v885 = vpop.f32.mrb[0].mxu0
      %v886 = vadd.f32 0.0, %v885
      %v887 = vpop.f32.mrb[0].mxu0
      %888 = vmatprep.mubr.bf16.mxu0 %v614
      %889 = vmatmul.mubr.bf16.gmra.mrb[0].mxu0 %v590
      %v890 = vpop.f32.mrb[0].mxu0
      %v891 = vadd.f32 0.0, %v890
      %v892 = vpop.f32.mrb[0].mxu0
      %v893 = vpop.f32.mrb[0].mxu0
      %v894 = vadd.f32 0.0, %v893
      %v895 = vpop.f32.mrb[0].mxu0
      %896 = vmatprep.mubr.bf16.mxu0 %v617
      %897 = vmatmul.mubr.bf16.gmra.mrb[0].mxu0 %v593
      %v898 = vpop.f32.mrb[0].mxu0
      %v899 = vadd.f32 0.0, %v898
      %v900 = vpop.f32.mrb[0].mxu0
      %v901 = vpop.f32.mrb[0].mxu0
      %v902 = vadd.f32 0.0, %v901
      %v903 = vpop.f32.mrb[0].mxu0
      %904 = vmatprep.mubr.bf16.mxu0 %v620
      %905 = vmatmul.mubr.bf16.gmra.mrb[0].mxu0 %v596
      %v906 = vpop.f32.mrb[0].mxu0
      %v907 = vadd.f32 0.0, %v906
      %v908 = vpop.f32.mrb[0].mxu0
      %v909 = vpop.f32.mrb[0].mxu0
      %v910 = vadd.f32 0.0, %v909
      %v911 = vpop.f32.mrb[0].mxu0
      %912 = vmatprep.mubr.bf16.mxu0 %v623
      %913 = vmatmul.mubr.bf16.gmra.mrb[0].mxu0 %v599
      %v914 = vpop.f32.mrb[0].mxu0
      %v915 = vadd.f32 0.0, %v914
      %v916 = vpop.f32.mrb[0].mxu0
      %v917 = vpop.f32.mrb[0].mxu0
      %v918 = vadd.f32 0.0, %v917
      %v919 = vpop.f32.mrb[0].mxu0
      %920 = vmatprep.mubr.bf16.mxu0 %v626
      %921 = vmatmul.mubr.bf16.gmra.mrb[0].mxu0 %v602
      %v922 = vpop.f32.mrb[0].mxu0
      %v923 = vadd.f32 0.0, %v922
      %v924 = vpop.f32.mrb[0].mxu0
      %v925 = vpop.f32.mrb[0].mxu0
      %v926 = vadd.f32 0.0, %v925
      %v927 = vpop.f32.mrb[0].mxu0
      %928 = vmatprep.mubr.bf16.mxu0 %v629
      %929 = vmatmul.mubr.bf16.gmra.mrb[0].mxu0 %v605
      %v930 = vpop.f32.mrb[0].mxu0
      %v931 = vadd.f32 0.0, %v930
      %v932 = vpop.f32.mrb[0].mxu0
      %v933 = vpop.f32.mrb[0].mxu0
      %v934 = vadd.f32 0.0, %v933
      %v935 = vpop.f32.mrb[0].mxu0
      %936 = vdwg.mxu0
      %937 = vmatprep.subr.bf16.mxu0 0
      %938 = vmatpush1.bf16.msra.mxu0 %v808
      %939 = vmatprep.subr.bf16.mxu0 0
      %940 = vmatpush1.bf16.msra.mxu0 %v809
      %941 = vmatprep.subr.bf16.mxu0 0
      %942 = vmatpush1.bf16.msra.mxu0 %v810
      %943 = vmatprep.subr.bf16.mxu0 0
      %944 = vmatpush1.bf16.msra.mxu0 %v811
      %945 = vmatprep.subr.bf16.mxu0 0
      %946 = vmatpush1.bf16.msra.mxu0 %v812
      %947 = vmatprep.subr.bf16.mxu0 0
      %948 = vmatpush1.bf16.msra.mxu0 %v813
      %949 = vmatprep.subr.bf16.mxu0 0
      %950 = vmatpush1.bf16.msra.mxu0 %v814
      %951 = vmatprep.subr.bf16.mxu0 0
      %952 = vmatpush1.bf16.msra.mxu0 %v815
      %953 = vmatprep.subr.bf16.mxu0 0
      %954 = vmatpush1.bf16.msra.mxu0 0
      %955 = vmatprep.subr.bf16.mxu0 0
      %956 = vmatpush1.bf16.msra.mxu0 0
      %957 = vmatprep.subr.bf16.mxu0 0
      %958 = vmatpush1.bf16.msra.mxu0 0
      %959 = vmatprep.subr.bf16.mxu0 0
      %960 = vmatpush1.bf16.msra.mxu0 0
      %961 = vmatprep.subr.bf16.mxu0 0
      %962 = vmatpush1.bf16.msra.mxu0 0
      %963 = vmatprep.subr.bf16.mxu0 0
      %964 = vmatpush1.bf16.msra.mxu0 0
      %965 = vmatprep.subr.bf16.mxu0 0
      %966 = vmatpush1.bf16.msra.mxu0 0
      %967 = vmatprep.subr.bf16.mxu0 0
      %968 = vmatpush1.bf16.msra.mxu0 0
      %969 = vmatprep.mubr.bf16.mxu0 0
      %970 = vmatmul.mubr.bf16.gmra.mrb[0].mxu0 %v632
      %v971 = vpop.f32.mrb[0].mxu0
      %v972 = vadd.f32 %v875, %v971
      %v973 = vpop.f32.mrb[0].mxu0
      %v974 = vpop.f32.mrb[0].mxu0
      %v975 = vadd.f32 %v878, %v974
      %v976 = vpop.f32.mrb[0].mxu0
      %977 = vmatprep.mubr.bf16.mxu0 0
      %978 = vmatmul.mubr.bf16.gmra.mrb[0].mxu0 %v634
      %v979 = vpop.f32.mrb[0].mxu0
      %v980 = vadd.f32 %v883, %v979
      %v981 = vpop.f32.mrb[0].mxu0
      %v982 = vpop.f32.mrb[0].mxu0
      %v983 = vadd.f32 %v886, %v982
      %v984 = vpop.f32.mrb[0].mxu0
      %985 = vmatprep.mubr.bf16.mxu0 0
      %986 = vmatmul.mubr.bf16.gmra.mrb[0].mxu0 %v636
      %v987 = vpop.f32.mrb[0].mxu0
      %v988 = vadd.f32 %v891, %v987
      %v989 = vpop.f32.mrb[0].mxu0
      %v990 = vpop.f32.mrb[0].mxu0
      %v991 = vadd.f32 %v894, %v990
      %v992 = vpop.f32.mrb[0].mxu0
      %993 = vmatprep.mubr.bf16.mxu0 0
      %994 = vmatmul.mubr.bf16.gmra.mrb[0].mxu0 %v638
      %v995 = vpop.f32.mrb[0].mxu0
      %v996 = vadd.f32 %v899, %v995
      %v997 = vpop.f32.mrb[0].mxu0
      %v998 = vpop.f32.mrb[0].mxu0
      %v999 = vadd.f32 %v902, %v998
      %v1000 = vpop.f32.mrb[0].mxu0
      %1001 = vmatprep.mubr.bf16.mxu0 0
      %1002 = vmatmul.mubr.bf16.gmra.mrb[0].mxu0 %v640
      %v1003 = vpop.f32.mrb[0].mxu0
      %v1004 = vadd.f32 %v907, %v1003
      %v1005 = vpop.f32.mrb[0].mxu0
      %v1006 = vpop.f32.mrb[0].mxu0
      %v1007 = vadd.f32 %v910, %v1006
      %v1008 = vpop.f32.mrb[0].mxu0
      %1009 = vmatprep.mubr.bf16.mxu0 0
      %1010 = vmatmul.mubr.bf16.gmra.mrb[0].mxu0 %v642
      %v1011 = vpop.f32.mrb[0].mxu0
      %v1012 = vadd.f32 %v915, %v1011
      %v1013 = vpop.f32.mrb[0].mxu0
      %v1014 = vpop.f32.mrb[0].mxu0
      %v1015 = vadd.f32 %v918, %v1014
      %v1016 = vpop.f32.mrb[0].mxu0
      %1017 = vmatprep.mubr.bf16.mxu0 0
      %1018 = vmatmul.mubr.bf16.gmra.mrb[0].mxu0 %v644
      %v1019 = vpop.f32.mrb[0].mxu0
      %v1020 = vadd.f32 %v923, %v1019
      %v1021 = vpop.f32.mrb[0].mxu0
      %v1022 = vpop.f32.mrb[0].mxu0
      %v1023 = vadd.f32 %v926, %v1022
      %v1024 = vpop.f32.mrb[0].mxu0
      %1025 = vmatprep.mubr.bf16.mxu0 0
      %1026 = vmatmul.mubr.bf16.gmra.mrb[0].mxu0 %v646
      %v1027 = vpop.f32.mrb[0].mxu0
      %v1028 = vadd.f32 %v931, %v1027
      %v1029 = vpop.f32.mrb[0].mxu0
      %v1030 = vpop.f32.mrb[0].mxu0
      %v1031 = vadd.f32 %v934, %v1030
      %v1032 = vpop.f32.mrb[0].mxu0
      %1033 = vdwg.mxu0
      %v1034 = vpack.c.bf16 %v975, %v972
      %v1035 = vpack.c.bf16 %v983, %v980
      %v1036 = vpack.c.bf16 %v991, %v988
      %v1037 = vpack.c.bf16 %v999, %v996
      %v1038 = vpack.c.bf16 %v1007, %v1004
      %v1039 = vpack.c.bf16 %v1015, %v1012
      %v1040 = vpack.c.bf16 %v1023, %v1020
      %v1041 = vpack.c.bf16 %v1031, %v1028
      %v1042 = vld [vmem:[%s2] sm:$0xf]
      %v1043 = vld [vmem:[%s2 + $0x4] sm:$0xf]
      %v1044 = vld [vmem:[%s2 + $0x8] sm:$0xf]
      %v1045 = vld [vmem:[%s2 + $0xc] sm:$0xf]
      %v1046 = vld [vmem:[%s2 + $0x10] sm:$0xf]
      %v1047 = vld [vmem:[%s2 + $0x14] sm:$0xf]
      %v1048 = vld [vmem:[%s2 + $0x18] sm:$0xf]
      %v1049 = vld [vmem:[%s2 + $0x1c] sm:$0xf]
      %v1050 = vld [vmem:[%s2 + $0x20] sm:$0xf]
      %v1051 = vld [vmem:[%s2 + $0x24] sm:$0xf]
      %v1052 = vld [vmem:[%s2 + $0x28] sm:$0xf]
      %v1053 = vld [vmem:[%s2 + $0x2c] sm:$0xf]
      %v1054 = vld [vmem:[%s2 + $0x30] sm:$0xf]
      %v1055 = vld [vmem:[%s2 + $0x34] sm:$0xf]
      %v1056 = vld [vmem:[%s2 + $0x38] sm:$0xf]
      %v1057 = vld [vmem:[%s2 + $0x3c] sm:$0xf]
      %v1058 = vld [vmem:[%s3] sm:$0x1]
      %v1060 = vlaneseq
      %v1061 = vshrl.u32 %v1060, 7
      %v1062 = vsub.s32 0, %v1061
      %v1063 = vrot.slane %v1058, %v1062
      %v1081 = vunpack.c.l.b16 %v1042
      %v1082 = vunpack.c.l.b16 %v1043
      %v1083 = vunpack.c.l.b16 %v1044
      %v1084 = vunpack.c.l.b16 %v1045
      %v1085 = vunpack.c.l.b16 %v1046
      %v1086 = vunpack.c.l.b16 %v1047
      %v1087 = vunpack.c.l.b16 %v1048
      %v1088 = vunpack.c.l.b16 %v1049
      %v1089 = vunpack.c.l.b16 %v1050
      %v1090 = vunpack.c.l.b16 %v1051
      %v1091 = vunpack.c.l.b16 %v1052
      %v1092 = vunpack.c.l.b16 %v1053
      %v1093 = vunpack.c.l.b16 %v1054
      %v1094 = vunpack.c.l.b16 %v1055
      %v1095 = vunpack.c.l.b16 %v1056
      %v1096 = vunpack.c.l.b16 %v1057
      %v1097 = vpack.c.b16 %v1082, %v1081
      %v1098 = vpack.c.b16 %v1084, %v1083
      %v1099 = vpack.c.b16 %v1086, %v1085
      %v1100 = vpack.c.b16 %v1088, %v1087
      %v1101 = vpack.c.b16 %v1090, %v1089
      %v1102 = vpack.c.b16 %v1092, %v1091
      %v1103 = vpack.c.b16 %v1094, %v1093
      %v1104 = vpack.c.b16 %v1096, %v1095
      %1113 = vmatprep.subr.bf16.mxu0 0
      %1114 = vmatpush1.bf16.msra.mxu0 %v1097
      %1115 = vmatprep.subr.bf16.mxu0 0
      %1116 = vmatpush1.bf16.msra.mxu0 %v1098
      %1117 = vmatprep.subr.bf16.mxu0 0
      %1118 = vmatpush1.bf16.msra.mxu0 %v1099
      %1119 = vmatprep.subr.bf16.mxu0 0
      %1120 = vmatpush1.bf16.msra.mxu0 %v1100
      %1121 = vmatprep.subr.bf16.mxu0 0
      %1122 = vmatpush1.bf16.msra.mxu0 %v1101
      %1123 = vmatprep.subr.bf16.mxu0 0
      %1124 = vmatpush1.bf16.msra.mxu0 %v1102
      %1125 = vmatprep.subr.bf16.mxu0 0
      %1126 = vmatpush1.bf16.msra.mxu0 %v1103
      %1127 = vmatprep.subr.bf16.mxu0 0
      %1128 = vmatpush1.bf16.msra.mxu0 %v1104
      %1129 = vmatprep.subr.bf16.mxu0 0
      %1130 = vmatpush1.bf16.msra.mxu0 0
      %1131 = vmatprep.subr.bf16.mxu0 0
      %1132 = vmatpush1.bf16.msra.mxu0 0
      %1133 = vmatprep.subr.bf16.mxu0 0
      %1134 = vmatpush1.bf16.msra.mxu0 0
      %1135 = vmatprep.subr.bf16.mxu0 0
      %1136 = vmatpush1.bf16.msra.mxu0 0
      %1137 = vmatprep.subr.bf16.mxu0 0
      %1138 = vmatpush1.bf16.msra.mxu0 0
      %1139 = vmatprep.subr.bf16.mxu0 0
      %1140 = vmatpush1.bf16.msra.mxu0 0
      %1141 = vmatprep.subr.bf16.mxu0 0
      %1142 = vmatpush1.bf16.msra.mxu0 0
      %1143 = vmatprep.subr.bf16.mxu0 0
      %1144 = vmatpush1.bf16.msra.mxu0 0
      %1145 = vmatprep.mubr.bf16.mxu0 0
      %1146 = vmatmul.mubr.bf16.gmra.mrb[0].mxu0 %v1034
      %v1147 = vpop.f32.mrb[0].mxu0
      %v1148 = vadd.f32 %v1063, %v1147
      %v1149 = vpop.f32.mrb[0].mxu0
      %v1150 = vpop.f32.mrb[0].mxu0
      %v1151 = vadd.f32 %v1063, %v1150
      %v1152 = vpop.f32.mrb[0].mxu0
      %1153 = vmatprep.mubr.bf16.mxu0 0
      %1154 = vmatmul.mubr.bf16.gmra.mrb[0].mxu0 %v1035
      %v1155 = vpop.f32.mrb[0].mxu0
      %v1156 = vadd.f32 %v1063, %v1155
      %v1157 = vpop.f32.mrb[0].mxu0
      %v1158 = vpop.f32.mrb[0].mxu0
      %v1159 = vadd.f32 %v1063, %v1158
      %v1160 = vpop.f32.mrb[0].mxu0
      %1161 = vmatprep.mubr.bf16.mxu0 0
      %1162 = vmatmul.mubr.bf16.gmra.mrb[0].mxu0 %v1036
      %v1163 = vpop.f32.mrb[0].mxu0
      %v1164 = vadd.f32 %v1063, %v1163
      %v1165 = vpop.f32.mrb[0].mxu0
      %v1166 = vpop.f32.mrb[0].mxu0
      %v1167 = vadd.f32 %v1063, %v1166
      %v1168 = vpop.f32.mrb[0].mxu0
      %1169 = vmatprep.mubr.bf16.mxu0 0
      %1170 = vmatmul.mubr.bf16.gmra.mrb[0].mxu0 %v1037
      %v1171 = vpop.f32.mrb[0].mxu0
      %v1172 = vadd.f32 %v1063, %v1171
      %v1173 = vpop.f32.mrb[0].mxu0
      %v1174 = vpop.f32.mrb[0].mxu0
      %v1175 = vadd.f32 %v1063, %v1174
      %v1176 = vpop.f32.mrb[0].mxu0
      %1177 = vmatprep.mubr.bf16.mxu0 0
      %1178 = vmatmul.mubr.bf16.gmra.mrb[0].mxu0 %v1038
      %v1179 = vpop.f32.mrb[0].mxu0
      %v1180 = vadd.f32 %v1063, %v1179
      %v1181 = vpop.f32.mrb[0].mxu0
      %v1182 = vpop.f32.mrb[0].mxu0
      %v1183 = vadd.f32 %v1063, %v1182
      %v1184 = vpop.f32.mrb[0].mxu0
      %1185 = vmatprep.mubr.bf16.mxu0 0
      %1186 = vmatmul.mubr.bf16.gmra.mrb[0].mxu0 %v1039
      %v1187 = vpop.f32.mrb[0].mxu0
      %v1188 = vadd.f32 %v1063, %v1187
      %v1189 = vpop.f32.mrb[0].mxu0
      %v1190 = vpop.f32.mrb[0].mxu0
      %v1191 = vadd.f32 %v1063, %v1190
      %v1192 = vpop.f32.mrb[0].mxu0
      %1193 = vmatprep.mubr.bf16.mxu0 0
      %1194 = vmatmul.mubr.bf16.gmra.mrb[0].mxu0 %v1040
      %v1195 = vpop.f32.mrb[0].mxu0
      %v1196 = vadd.f32 %v1063, %v1195
      %v1197 = vpop.f32.mrb[0].mxu0
      %v1198 = vpop.f32.mrb[0].mxu0
      %v1199 = vadd.f32 %v1063, %v1198
      %v1200 = vpop.f32.mrb[0].mxu0
      %1201 = vmatprep.mubr.bf16.mxu0 0
      %1202 = vmatmul.mubr.bf16.gmra.mrb[0].mxu0 %v1041
      %v1203 = vpop.f32.mrb[0].mxu0
      %v1204 = vadd.f32 %v1063, %v1203
      %v1205 = vpop.f32.mrb[0].mxu0
      %v1206 = vpop.f32.mrb[0].mxu0
      %v1207 = vadd.f32 %v1063, %v1206
      %v1208 = vpop.f32.mrb[0].mxu0
      %1209 = vdwg.mxu0
      %v1210 = vadd.f32 %v1148, %v1151
      %v1211 = vadd.f32 %v1210, %v1156
      %v1212 = vadd.f32 %v1211, %v1159
      %v1213 = vadd.f32 %v1212, %v1164
      %v1214 = vadd.f32 %v1213, %v1167
      %v1215 = vadd.f32 %v1214, %v1172
      %v1216 = vadd.f32 %v1215, %v1175
      %v1217 = vadd.f32 %v1216, %v1180
      %v1218 = vadd.f32 %v1217, %v1183
      %v1219 = vadd.f32 %v1218, %v1188
      %v1220 = vadd.f32 %v1219, %v1191
      %v1221 = vadd.f32 %v1220, %v1196
      %v1222 = vadd.f32 %v1221, %v1199
      %v1223 = vadd.f32 %v1222, %v1204
      %v1224 = vadd.f32 %v1223, %v1207
      %v1225 = vrot.slane %v1224, 4
      %v1226 = vadd.f32 %v1224, %v1225
      %v1227 = vrot.slane %v1226, 2
      %v1228 = vadd.f32 %v1226, %v1227
      %v1229 = vrot.slane %v1228, 1
      %v1230 = vadd.f32 %v1228, %v1229
      %v1231 = vmul.f32 %v1148, %v1148
      %v1232 = vmul.f32 %v1151, %v1151
      %v1233 = vmul.f32 %v1156, %v1156
      %v1234 = vmul.f32 %v1159, %v1159
      %v1235 = vmul.f32 %v1164, %v1164
      %v1236 = vmul.f32 %v1167, %v1167
      %v1237 = vmul.f32 %v1172, %v1172
      %v1238 = vmul.f32 %v1175, %v1175
      %v1239 = vmul.f32 %v1180, %v1180
      %v1240 = vmul.f32 %v1183, %v1183
      %v1241 = vmul.f32 %v1188, %v1188
      %v1242 = vmul.f32 %v1191, %v1191
      %v1243 = vmul.f32 %v1196, %v1196
      %v1244 = vmul.f32 %v1199, %v1199
      %v1245 = vmul.f32 %v1204, %v1204
      %v1246 = vmul.f32 %v1207, %v1207
      %v1247 = vadd.f32 %v1231, %v1232
      %v1248 = vadd.f32 %v1247, %v1233
      %v1249 = vadd.f32 %v1248, %v1234
      %v1250 = vadd.f32 %v1249, %v1235
      %v1251 = vadd.f32 %v1250, %v1236
      %v1252 = vadd.f32 %v1251, %v1237
      %v1253 = vadd.f32 %v1252, %v1238
      %v1254 = vadd.f32 %v1253, %v1239
      %v1255 = vadd.f32 %v1254, %v1240
      %v1256 = vadd.f32 %v1255, %v1241
      %v1257 = vadd.f32 %v1256, %v1242
      %v1258 = vadd.f32 %v1257, %v1243
      %v1259 = vadd.f32 %v1258, %v1244
      %v1260 = vadd.f32 %v1259, %v1245
      %v1261 = vadd.f32 %v1260, %v1246
      %v1262 = vrot.slane %v1261, 4
      %v1263 = vadd.f32 %v1261, %v1262
      %v1264 = vrot.slane %v1263, 2
      %v1265 = vadd.f32 %v1263, %v1264
      %v1266 = vrot.slane %v1265, 1
      %v1267 = vadd.f32 %v1265, %v1266
      %vm1268 = vcmask 1040384
      %v1269 = vsel %vm1268, %v1230, %v1267
      %1270 = vst [vmem:[%s195] sm:$0x3] %v1269
      %p1271 = scmp.lt.s32.totalorder %s15, 3
      %s1272 = scalar_select %p1271, %s15, 3
      %s1273 = smul.addr %s1272, 2
      %s1274 = scalar_lea.vmem %s4, %s1273
      // Predicated region
      $region37: #{projection_head_forward.4} parent=35 // pred_check
        %p1275 = pneg %p122
      $region38: #{projection_head_forward.4} parent=35 // pred_check_branch
        %1277 = sbr.rel (%p1275) target = $region40
      $region39: #{projection_head_forward.4} parent=35 // pred_region
        _
      $region40: #{projection_head_forward.4} parent=35 // pred_fallthru
        _
    $region36: #{projection_head_forward.4} parent=5 // pred_fallthru
      _
    %p1278 = scmp.le.s32.totalorder 2, %s10
    // Predicated region
    $region41: #{projection_head_forward.4} parent=5 // pred_check
      %p1279 = pneg %p1278
    $region42: #{projection_head_forward.4} parent=5 // pred_check_branch
      %1281 = sbr.rel (%p1279) target = $region44
    $region43: #{projection_head_forward.4} parent=5 // pred_region
      %s1282 = ssub.s32 %s10, 2
      // Predicated region
      $region45: #{projection_head_forward.4} parent=43 // pred_check
        %p1283 = pneg %p128
      $region46: #{projection_head_forward.4} parent=43 // pred_check_branch
        %1285 = sbr.rel (%p1283) target = $region48
      $region47: #{projection_head_forward.4} parent=43 // pred_region
        %p1286 = scmp.lt.s32.totalorder %s16, 3
        %s1287 = scalar_select %p1286, %s16, 3
        %s1288 = smul.addr %s1287, 2
        %s1289 = scalar_lea.vmem %s4, %s1288
      $region48: #{projection_head_forward.4} parent=43 // pred_fallthru
        _
    $region44: #{projection_head_forward.4} parent=5 // pred_fallthru
      _
  $region6: #{projection_head_forward.4} parent=0 // loop_footer
    %s14 = sadd.s32 1, %s10
  $region7: #{projection_head_forward.4} parent=0 // loop_footer_branch
    %9 = sbr.rel target = $region3
  $region8: #{projection_head_forward.4} parent=0 // loop_exit
    _

// kernel: projection_head_forward.5
$region0: #{projection_head_forward.5}
  #allocation0 [shape = 'u32[]', space=smem, size = 0x4, offset = 0x4, fixed_abs, tag = 'smem constant byte address 0x4 - core index']
  #allocation1 [shape = 'u32[144,128]{1,0:T(1,128)}', space=vmem, size = 0x12000, scoped, tag = 'internal scratch']
  %s0 = inlined_call_operand.vmem [shape: bf16[4,10,18,32], index: 0, kind: input, shape index: {}]
  %s1 = inlined_call_operand.vmem [shape: bf16[384,128], index: 1, kind: input, shape index: {}]
  %s2 = inlined_call_operand.vmem [shape: bf16[128,128], index: 2, kind: input, shape index: {}]
  %s3 = inlined_call_operand.vmem [shape: f32[1,128], index: 3, kind: input, shape index: {}]
  %s4 = inlined_call_operand.vmem [shape: bf16[128,128], index: 4, kind: input, shape index: {}]
  %s5 = inlined_call_operand.vmem [shape: f32[1,128], index: 5, kind: input, shape index: {}]
  %s6 = inlined_call_operand.hbm [shape: f32[512,128], index: 6, kind: output, shape index: {}]
  %s7 = sld [smem:[#allocation0]]
  $region57: #{projection_head_forward.5} parent=0
    _
  %s9 = ssub.s32 1, %s7
  %s10 = scalar_select 0, %s9, %s7
  $region1: #{projection_head_forward.5} parent=0
    #allocation2 [shape = 'u8[131072]{0}', space=vmem, size = 0x20000, scoped, tag = 'output window, operand 0']
    #allocation3 [shape = 's32[2]{0}', space=sflag, size = 0x8, scoped, tag = 'scoped memory for projection_head_forward.5']
    %11 = vsyncpa [#allocation3], 0
    %s12 = scalar_lea.sflag [#allocation3], 1
    %13 = vsyncpa %s12, 0
    loop: start=0, step=1, limit=6
    $region2: #{projection_head_forward.5} parent=1 // loop_pre_header
      _
    $region3: #{projection_head_forward.5} parent=1 // loop_header
      %s15 = sphi 0, %s19
      %p16 = scmp.ge.s32.totalorder %s15, 6
      %s25 = sphi 0, %s27
      %s28 = sphi 0, %s25
      %s29 = sphi 0, %s28
      %s45 = sphi 0, %s29
      %s49 = sphi 0, %s49
      %s51 = sphi 0, %s49
      %s52 = sphi 0, %s51
      %s66 = sphi 0, %s52
      %s70 = sphi 0, %s70
      %s72 = sphi 0, %s70
      %s73 = sphi 0, %s72
      %s87 = sphi 0, %s73
      %s91 = sphi 0, %s91
      %s93 = sphi 0, %s91
      %s94 = sphi 0, %s93
      %s108 = sphi 0, %s94
      %s112 = sphi 0, %s112
      %s114 = sphi 0, %s112
      %s115 = sphi 0, %s114
      %s129 = sphi 0, %s115
      %s133 = sphi 0, %s133
      %s135 = sphi 0, %s133
      %s136 = sphi 0, %s135
      %s150 = sphi 0, %s136
      %s156 = sphi 0, %s158
      %s159 = sphi 0, %s156
      %s160 = sphi 0, %s159
      %s176 = sphi 0, %s160
    $region4: #{projection_head_forward.5} parent=1 // loop_header_branch
      %18 = sbr.rel (%p16) target = $region8
    $region5: #{projection_head_forward.5} parent=1 // loop_body
      %s20 = ssub.s32 %s15, 1
      %s21 = ssub.s32 %s15, 2
      %s22 = sadd.s32 %s15, 1
      %s23 = ssub.s32 %s15, %s22
      %p24 = scmp.eq.s32.totalorder %s23, 0
      %s26 = sadd.s32 %s25, 1
      %s27 = scalar_select %p24, %s25, %s26
      %p30 = pneg %p24
      %p31 = scmp.eq.s32.totalorder %s15, 3
      %p32 = por %p30, %p31
      %p33 = scmp.ne.s32.totalorder %s25, %s28
      %p34 = scmp.eq.s32.totalorder %s15, 0
      %p35 = por %p33, %p34
      %p36 = scmp.ne.s32.totalorder %s25, %s28
      %p37 = scmp.eq.s32.totalorder %s20, 3
      %p38 = por %p36, %p37
      %p39 = scmp.ne.s32.totalorder %s28, %s29
      %p40 = scmp.eq.s32.totalorder %s20, 0
      %p41 = por %p39, %p40
      %p42 = scmp.ne.s32.totalorder %s28, %s29
      %p43 = scmp.eq.s32.totalorder %s21, 3
      %p44 = por %p42, %p43
      %p46 = scmp.ne.s32.totalorder %s29, %s45
      %p47 = scmp.eq.s32.totalorder %s21, 0
      %p48 = por %p46, %p47
      %s50 = sadd.s32 %s49, 1
      %p53 = scmp.eq.s32.totalorder %s15, 3
      %p54 = scmp.ne.s32.totalorder %s49, %s51
      %p55 = scmp.eq.s32.totalorder %s15, 0
      %p56 = por %p54, %p55
      %p57 = scmp.ne.s32.totalorder %s49, %s51
      %p58 = scmp.eq.s32.totalorder %s20, 3
      %p59 = por %p57, %p58
      %p60 = scmp.ne.s32.totalorder %s51, %s52
      %p61 = scmp.eq.s32.totalorder %s20, 0
      %p62 = por %p60, %p61
      %p63 = scmp.ne.s32.totalorder %s51, %s52
      %p64 = scmp.eq.s32.totalorder %s21, 3
      %p65 = por %p63, %p64
      %p67 = scmp.ne.s32.totalorder %s52, %s66
      %p68 = scmp.eq.s32.totalorder %s21, 0
      %p69 = por %p67, %p68
      %s71 = sadd.s32 %s70, 1
      %p74 = scmp.eq.s32.totalorder %s15, 3
      %p75 = scmp.ne.s32.totalorder %s70, %s72
      %p76 = scmp.eq.s32.totalorder %s15, 0
      %p77 = por %p75, %p76
      %p78 = scmp.ne.s32.totalorder %s70, %s72
      %p79 = scmp.eq.s32.totalorder %s20, 3
      %p80 = por %p78, %p79
      %p81 = scmp.ne.s32.totalorder %s72, %s73
      %p82 = scmp.eq.s32.totalorder %s20, 0
      %p83 = por %p81, %p82
      %p84 = scmp.ne.s32.totalorder %s72, %s73
      %p85 = scmp.eq.s32.totalorder %s21, 3
      %p86 = por %p84, %p85
      %p88 = scmp.ne.s32.totalorder %s73, %s87
      %p89 = scmp.eq.s32.totalorder %s21, 0
      %p90 = por %p88, %p89
      %s92 = sadd.s32 %s91, 1
      %p95 = scmp.eq.s32.totalorder %s15, 3
      %p96 = scmp.ne.s32.totalorder %s91, %s93
      %p97 = scmp.eq.s32.totalorder %s15, 0
      %p98 = por %p96, %p97
      %p99 = scmp.ne.s32.totalorder %s91, %s93
      %p100 = scmp.eq.s32.totalorder %s20, 3
      %p101 = por %p99, %p100
      %p102 = scmp.ne.s32.totalorder %s93, %s94
      %p103 = scmp.eq.s32.totalorder %s20, 0
      %p104 = por %p102, %p103
      %p105 = scmp.ne.s32.totalorder %s93, %s94
      %p106 = scmp.eq.s32.totalorder %s21, 3
      %p107 = por %p105, %p106
      %p109 = scmp.ne.s32.totalorder %s94, %s108
      %p110 = scmp.eq.s32.totalorder %s21, 0
      %p111 = por %p109, %p110
      %s113 = sadd.s32 %s112, 1
      %p116 = scmp.eq.s32.totalorder %s15, 3
      %p117 = scmp.ne.s32.totalorder %s112, %s114
      %p118 = scmp.eq.s32.totalorder %s15, 0
      %p119 = por %p117, %p118
      %p120 = scmp.ne.s32.totalorder %s112, %s114
      %p121 = scmp.eq.s32.totalorder %s20, 3
      %p122 = por %p120, %p121
      %p123 = scmp.ne.s32.totalorder %s114, %s115
      %p124 = scmp.eq.s32.totalorder %s20, 0
      %p125 = por %p123, %p124
      %p126 = scmp.ne.s32.totalorder %s114, %s115
      %p127 = scmp.eq.s32.totalorder %s21, 3
      %p128 = por %p126, %p127
      %p130 = scmp.ne.s32.totalorder %s115, %s129
      %p131 = scmp.eq.s32.totalorder %s21, 0
      %p132 = por %p130, %p131
      %s134 = sadd.s32 %s133, 1
      %p137 = scmp.eq.s32.totalorder %s15, 3
      %p138 = scmp.ne.s32.totalorder %s133, %s135
      %p139 = scmp.eq.s32.totalorder %s15, 0
      %p140 = por %p138, %p139
      %p141 = scmp.ne.s32.totalorder %s133, %s135
      %p142 = scmp.eq.s32.totalorder %s20, 3
      %p143 = por %p141, %p142
      %p144 = scmp.ne.s32.totalorder %s135, %s136
      %p145 = scmp.eq.s32.totalorder %s20, 0
      %p146 = por %p144, %p145
      %p147 = scmp.ne.s32.totalorder %s135, %s136
      %p148 = scmp.eq.s32.totalorder %s21, 3
      %p149 = por %p147, %p148
      %p151 = scmp.ne.s32.totalorder %s136, %s150
      %p152 = scmp.eq.s32.totalorder %s21, 0
      %p153 = por %p151, %p152
      %s154 = ssub.s32 %s15, %s22
      %p155 = scmp.eq.s32.totalorder %s154, 0
      %s157 = sadd.s32 %s156, 1
      %s158 = scalar_select %p155, %s156, %s157
      %p161 = pneg %p155
      %p162 = scmp.eq.s32.totalorder %s15, 3
      %p163 = por %p161, %p162
      %p164 = scmp.ne.s32.totalorder %s156, %s159
      %p165 = scmp.eq.s32.totalorder %s15, 0
      %p166 = por %p164, %p165
      %p167 = scmp.ne.s32.totalorder %s156, %s159
      %p168 = scmp.eq.s32.totalorder %s20, 3
      %p169 = por %p167, %p168
      %p170 = scmp.ne.s32.totalorder %s159, %s160
      %p171 = scmp.eq.s32.totalorder %s20, 0
      %p172 = por %p170, %p171
      %p173 = scmp.ne.s32.totalorder %s159, %s160
      %p174 = scmp.eq.s32.totalorder %s21, 3
      %p175 = por %p173, %p174
      %p177 = scmp.ne.s32.totalorder %s160, %s176
      %p178 = scmp.eq.s32.totalorder %s21, 0
      %p179 = por %p177, %p178
      %p180 = scmp.le.s32.totalorder 1, %s15
      %p181 = scmp.lt.s32.totalorder %s15, 5
      %p182 = pnand %p180, %p181
      %p183 = pneg %p182
      // Predicated region
      $region9: #{projection_head_forward.5} parent=5 // pred_check
        _
      $region10: #{projection_head_forward.5} parent=5 // pred_check_branch
        %185 = sbr.rel (%p182) target = $region12
      $region11: #{projection_head_forward.5} parent=5 // pred_region
        %s186 = ssub.s32 %s15, 1
        // Predicated region
        $region13: #{projection_head_forward.5} parent=11 // pred_check
          %p187 = pneg %p62
        $region14: #{projection_head_forward.5} parent=11 // pred_check_branch
          %189 = sbr.rel (%p187) target = $region16
        $region15: #{projection_head_forward.5} parent=11 // pred_region
          _
        $region16: #{projection_head_forward.5} parent=11 // pred_fallthru
          _
        // Predicated region
        $region17: #{projection_head_forward.5} parent=11 // pred_check
          %p190 = pneg %p83
        $region18: #{projection_head_forward.5} parent=11 // pred_check_branch
          %192 = sbr.rel (%p190) target = $region20
        $region19: #{projection_head_forward.5} parent=11 // pred_region
          _
        $region20: #{projection_head_forward.5} parent=11 // pred_fallthru
          _
        // Predicated region
        $region21: #{projection_head_forward.5} parent=11 // pred_check
          %p193 = pneg %p104
        $region22: #{projection_head_forward.5} parent=11 // pred_check_branch
          %195 = sbr.rel (%p193) target = $region24
        $region23: #{projection_head_forward.5} parent=11 // pred_region
          _
        $region24: #{projection_head_forward.5} parent=11 // pred_fallthru
          _
        // Predicated region
        $region25: #{projection_head_forward.5} parent=11 // pred_check
          %p196 = pneg %p125
        $region26: #{projection_head_forward.5} parent=11 // pred_check_branch
          %198 = sbr.rel (%p196) target = $region28
        $region27: #{projection_head_forward.5} parent=11 // pred_region
          _
        $region28: #{projection_head_forward.5} parent=11 // pred_fallthru
          _
        // Predicated region
        $region29: #{projection_head_forward.5} parent=11 // pred_check
          %p199 = pneg %p146
        $region30: #{projection_head_forward.5} parent=11 // pred_check_branch
          %201 = sbr.rel (%p199) target = $region32
        $region31: #{projection_head_forward.5} parent=11 // pred_region
          _
        $region32: #{projection_head_forward.5} parent=11 // pred_fallthru
          _
      $region12: #{projection_head_forward.5} parent=5 // pred_fallthru
        _
      %p202 = scmp.lt.s32.totalorder %s15, 4
      // Predicated region
      $region33: #{projection_head_forward.5} parent=5 // pred_check
        %p203 = pneg %p202
      $region34: #{projection_head_forward.5} parent=5 // pred_check_branch
        %205 = sbr.rel (%p203) target = $region36
      $region35: #{projection_head_forward.5} parent=5 // pred_region
        // Predicated region
        $region37: #{projection_head_forward.5} parent=35 // pred_check
          %p206 = pneg %p35
        $region38: #{projection_head_forward.5} parent=35 // pred_check_branch
          %208 = sbr.rel (%p206) target = $region40
        $region39: #{projection_head_forward.5} parent=35 // pred_region
          %p209 = scmp.lt.s32.totalorder %s15, 3
          %s210 = scalar_select %p209, %s15, 3
          %s211 = smul.addr %s210, 30
          %s212 = smul.addr %s211, 4
          %s213 = scalar_lea.vmem %s0, %s212
        $region40: #{projection_head_forward.5} parent=35 // pred_fallthru
          _
      $region36: #{projection_head_forward.5} parent=5 // pred_fallthru
        _
      %p214 = scmp.le.s32.totalorder 1, %s15
      %p215 = scmp.lt.s32.totalorder %s15, 5
      %p216 = pnand %p214, %p215
      %p217 = pneg %p216
      // Predicated region
      $region41: #{projection_head_forward.5} parent=5 // pred_check
        _
      $region42: #{projection_head_forward.5} parent=5 // pred_check_branch
        %219 = sbr.rel (%p216) target = $region44
      $region43: #{projection_head_forward.5} parent=5 // pred_region
        %s220 = ssub.s32 %s15, 1
        %p221 = scmp.lt.s32.totalorder %s20, 3
        %s222 = scalar_select %p221, %s20, 3
        %s223 = smul.addr %s222, 30
        %s224 = smul.addr %s223, 4
        %s225 = scalar_lea.vmem %s0, %s224
        %p226 = pneg %p41
        %p227 = pneg %p38
        %p228 = pneg %p62
        %p229 = pneg %p59
        %p230 = pneg %p83
        %p231 = pneg %p80
        %p232 = pneg %p104
        %p233 = pneg %p101
        %p234 = pneg %p125
        %p235 = pneg %p122
        %p236 = pneg %p146
        %p237 = pneg %p143
        %p238 = pneg %p172
        %p239 = pneg %p169
        %s240 = sand.u32 %s159, 1
        %s241 = scalar_lea.sflag [#allocation3], %s240
        %s242 = sand.u32 %s159, 1
        %s243 = smul.addr %s242, 128
        %s244 = scalar_lea.vmem [#allocation2], %s243
        %p245 = scmp.lt.s32.totalorder %s20, 3
        %s246 = scalar_select %p245, %s20, 3
        %s247 = smul.addr %s246, 30
        %s248 = smul.addr %s247, 4
        %s249 = scalar_lea.vmem %s0, %s248
        %s250 = smul.u32 16, %s20
        %v252 = vld [vmem:[%s249] sm:$0xf]
        %v253 = vld [vmem:[%s249 + $0x4] sm:$0xf]
        %v254 = vld [vmem:[%s249 + $0x8] sm:$0x1]
        %v255 = vld [vmem:[%s249 + $0xc] sm:$0xf]
        %v256 = vld [vmem:[%s249 + $0x10] sm:$0xf]
        %v257 = vld [vmem:[%s249 + $0x14] sm:$0x1]
        %v258 = vld [vmem:[%s249 + $0x18] sm:$0xf]
        %v259 = vld [vmem:[%s249 + $0x1c] sm:$0xf]
        %v260 = vld [vmem:[%s249 + $0x20] sm:$0x1]
        %v261 = vld [vmem:[%s249 + $0x24] sm:$0xf]
        %v262 = vld [vmem:[%s249 + $0x28] sm:$0xf]
        %v263 = vld [vmem:[%s249 + $0x2c] sm:$0x1]
        %v264 = vld [vmem:[%s249 + $0x30] sm:$0xf]
        %v265 = vld [vmem:[%s249 + $0x34] sm:$0xf]
        %v266 = vld [vmem:[%s249 + $0x38] sm:$0x1]
        %v267 = vld [vmem:[%s249 + $0x3c] sm:$0xf]
        %v268 = vld [vmem:[%s249 + $0x40] sm:$0xf]
        %v269 = vld [vmem:[%s249 + $0x44] sm:$0x1]
        %v270 = vld [vmem:[%s249 + $0x48] sm:$0xf]
        %v271 = vld [vmem:[%s249 + $0x4c] sm:$0xf]
        %v272 = vld [vmem:[%s249 + $0x50] sm:$0x1]
        %v273 = vld [vmem:[%s249 + $0x54] sm:$0xf]
        %v274 = vld [vmem:[%s249 + $0x58] sm:$0xf]
        %v275 = vld [vmem:[%s249 + $0x5c] sm:$0x1]
        %v276 = vld [vmem:[%s249 + $0x60] sm:$0xf]
        %v277 = vld [vmem:[%s249 + $0x64] sm:$0xf]
        %v278 = vld [vmem:[%s249 + $0x68] sm:$0x1]
        %v279 = vld [vmem:[%s249 + $0x6c] sm:$0xf]
        %v280 = vld [vmem:[%s249 + $0x70] sm:$0xf]
        %v281 = vld [vmem:[%s249 + $0x74] sm:$0x1]
        %v302 = vunpack.c.l.b16 %v252
        %v303 = vunpack.c.l.b16 %v253
        %v304 = vunpack.c.l.b16 %v255
        %v305 = vunpack.c.l.b16 %v256
        %v306 = vunpack.c.l.b16 %v258
        %v307 = vunpack.c.l.b16 %v259
        %v308 = vunpack.c.l.b16 %v261
        %v309 = vunpack.c.l.b16 %v262
        %v310 = vunpack.c.l.b16 %v264
        %v311 = vunpack.c.l.b16 %v265
        %v312 = vunpack.c.l.b16 %v267
        %v313 = vunpack.c.l.b16 %v268
        %v314 = vunpack.c.l.b16 %v270
        %v315 = vunpack.c.l.b16 %v271
        %v316 = vunpack.c.l.b16 %v273
        %v317 = vunpack.c.l.b16 %v274
        %v318 = vunpack.c.l.b16 %v276
        %v319 = vunpack.c.l.b16 %v277
        %v320 = vunpack.c.l.b16 %v279
        %v321 = vunpack.c.l.b16 %v280
        %v322 = vpack.c.b16 %v303, %v302
        %v323 = vpack.c.b16 %v305, %v304
        %v324 = vpack.c.b16 %v307, %v306
        %v325 = vpack.c.b16 %v309, %v308
        %v326 = vpack.c.b16 %v311, %v310
        %v327 = vpack.c.b16 %v313, %v312
        %v328 = vpack.c.b16 %v315, %v314
        %v329 = vpack.c.b16 %v317, %v316
        %v330 = vpack.c.b16 %v319, %v318
        %v331 = vpack.c.b16 %v321, %v320
        %v342 = vunpack.c.l.b16 %v254
        %v343 = vunpack.c.l.b16 %v257
        %v344 = vunpack.c.l.b16 %v260
        %v345 = vunpack.c.l.b16 %v263
        %v346 = vunpack.c.l.b16 %v266
        %v347 = vunpack.c.l.b16 %v269
        %v348 = vunpack.c.l.b16 %v272
        %v349 = vunpack.c.l.b16 %v275
        %v350 = vunpack.c.l.b16 %v278
        %v351 = vunpack.c.l.b16 %v281
        %v352 = vpack.c.b16 %v342, %v342
        %v353 = vpack.c.b16 %v343, %v343
        %v354 = vpack.c.b16 %v344, %v344
        %v355 = vpack.c.b16 %v345, %v345
        %v356 = vpack.c.b16 %v346, %v346
        %v357 = vpack.c.b16 %v347, %v347
        %v358 = vpack.c.b16 %v348, %v348
        %v359 = vpack.c.b16 %v349, %v349
        %v360 = vpack.c.b16 %v350, %v350
        %v361 = vpack.c.b16 %v351, %v351
        %vm362 = vsmask.f32 7424
        %v364 = vshrl.u32 %v322, 16
        %v366 = vshll.u32 %v322, 16
        %v368 = vrot.slane %v366, 1
        %v369 = vor.u32 %v364, %v368
        %v371 = vshll.u32 %v352, 16
        %v373 = vrot.slane %v371, 1
        %v374 = vsel %vm362, %v369, %v373
        %v376 = vshrl.u32 %v323, 16
        %v378 = vshll.u32 %v323, 16
        %v380 = vrot.slane %v378, 1
        %v381 = vor.u32 %v376, %v380
        %v383 = vshll.u32 %v353, 16
        %v385 = vrot.slane %v383, 1
        %v386 = vsel %vm362, %v381, %v385
        %v388 = vshrl.u32 %v324, 16
        %v390 = vshll.u32 %v324, 16
        %v392 = vrot.slane %v390, 1
        %v393 = vor.u32 %v388, %v392
        %v395 = vshll.u32 %v354, 16
        %v397 = vrot.slane %v395, 1
        %v398 = vsel %vm362, %v393, %v397
        %v400 = vshrl.u32 %v325, 16
        %v402 = vshll.u32 %v325, 16
        %v404 = vrot.slane %v402, 1
        %v405 = vor.u32 %v400, %v404
        %v407 = vshll.u32 %v355, 16
        %v409 = vrot.slane %v407, 1
        %v410 = vsel %vm362, %v405, %v409
        %v412 = vshrl.u32 %v326, 16
        %v414 = vshll.u32 %v326, 16
        %v416 = vrot.slane %v414, 1
        %v417 = vor.u32 %v412, %v416
        %v419 = vshll.u32 %v356, 16
        %v421 = vrot.slane %v419, 1
        %v422 = vsel %vm362, %v417, %v421
        %v424 = vshrl.u32 %v327, 16
        %v426 = vshll.u32 %v327, 16
        %v428 = vrot.slane %v426, 1
        %v429 = vor.u32 %v424, %v428
        %v431 = vshll.u32 %v357, 16
        %v433 = vrot.slane %v431, 1
        %v434 = vsel %vm362, %v429, %v433
        %v436 = vshrl.u32 %v328, 16
        %v438 = vshll.u32 %v328, 16
        %v440 = vrot.slane %v438, 1
        %v441 = vor.u32 %v436, %v440
        %v443 = vshll.u32 %v358, 16
        %v445 = vrot.slane %v443, 1
        %v446 = vsel %vm362, %v441, %v445
        %v448 = vshrl.u32 %v329, 16
        %v450 = vshll.u32 %v329, 16
        %v452 = vrot.slane %v450, 1
        %v453 = vor.u32 %v448, %v452
        %v455 = vshll.u32 %v359, 16
        %v457 = vrot.slane %v455, 1
        %v458 = vsel %vm362, %v453, %v457
        %v460 = vshrl.u32 %v330, 16
        %v462 = vshll.u32 %v330, 16
        %v464 = vrot.slane %v462, 1
        %v465 = vor.u32 %v460, %v464
        %v467 = vshll.u32 %v360, 16
        %v469 = vrot.slane %v467, 1
        %v470 = vsel %vm362, %v465, %v469
        %v472 = vshrl.u32 %v331, 16
        %v474 = vshll.u32 %v331, 16
        %v476 = vrot.slane %v474, 1
        %v477 = vor.u32 %v472, %v476
        %v479 = vshll.u32 %v361, 16
        %v481 = vrot.slane %v479, 1
        %v482 = vsel %vm362, %v477, %v481
        %483 = vrot.lane.b32.xlu0 %v374, 32
        %v484 = vpop.permute.xlu0 %483
        %485 = vrot.lane.b32.xlu0 %v386, 32
        %v486 = vpop.permute.xlu0 %485
        %487 = vrot.lane.b32.xlu0 %v398, 32
        %v488 = vpop.permute.xlu0 %487
        %489 = vrot.lane.b32.xlu0 %v410, 32
        %v490 = vpop.permute.xlu0 %489
        %491 = vrot.lane.b32.xlu0 %v422, 32
        %v492 = vpop.permute.xlu0 %491
        %493 = vrot.lane.b32.xlu0 %v434, 32
        %v494 = vpop.permute.xlu0 %493
        %495 = vrot.lane.b32.xlu0 %v446, 32
        %v496 = vpop.permute.xlu0 %495
        %497 = vrot.lane.b32.xlu0 %v458, 32
        %v498 = vpop.permute.xlu0 %497
        %499 = vrot.lane.b32.xlu0 %v470, 32
        %v500 = vpop.permute.xlu0 %499
        %501 = vrot.lane.b32.xlu0 %v482, 32
        %v502 = vpop.permute.xlu0 %501
        %vm503 = vcmask 1046528
        %v504 = vrot.slane %v322, 1
        %v505 = vrot.slane %v352, 1
        %v506 = vsel %vm503, %v504, %v505
        %v507 = vrot.slane %v323, 1
        %v508 = vrot.slane %v353, 1
        %v509 = vsel %vm503, %v507, %v508
        %v510 = vrot.slane %v324, 1
        %v511 = vrot.slane %v354, 1
        %v512 = vsel %vm503, %v510, %v511
        %v513 = vrot.slane %v325, 1
        %v514 = vrot.slane %v355, 1
        %v515 = vsel %vm503, %v513, %v514
        %v516 = vrot.slane %v326, 1
        %v517 = vrot.slane %v356, 1
        %v518 = vsel %vm503, %v516, %v517
        %v519 = vrot.slane %v327, 1
        %v520 = vrot.slane %v357, 1
        %v521 = vsel %vm503, %v519, %v520
        %v522 = vrot.slane %v328, 1
        %v523 = vrot.slane %v358, 1
        %v524 = vsel %vm503, %v522, %v523
        %v525 = vrot.slane %v329, 1
        %v526 = vrot.slane %v359, 1
        %v527 = vsel %vm503, %v525, %v526
        %v528 = vrot.slane %v330, 1
        %v529 = vrot.slane %v360, 1
        %v530 = vsel %vm503, %v528, %v529
        %v531 = vrot.slane %v331, 1
        %v532 = vrot.slane %v361, 1
        %v533 = vsel %vm503, %v531, %v532
        %534 = vrot.lane.b32.xlu0 %v506, 64
        %v535 = vpop.permute.xlu0 %534
        %536 = vrot.lane.b32.xlu0 %v509, 64
        %v537 = vpop.permute.xlu0 %536
        %538 = vrot.lane.b32.xlu0 %v512, 64
        %v539 = vpop.permute.xlu0 %538
        %540 = vrot.lane.b32.xlu0 %v515, 64
        %v541 = vpop.permute.xlu0 %540
        %542 = vrot.lane.b32.xlu0 %v518, 64
        %v543 = vpop.permute.xlu0 %542
        %544 = vrot.lane.b32.xlu0 %v521, 64
        %v545 = vpop.permute.xlu0 %544
        %546 = vrot.lane.b32.xlu0 %v524, 64
        %v547 = vpop.permute.xlu0 %546
        %548 = vrot.lane.b32.xlu0 %v527, 64
        %v549 = vpop.permute.xlu0 %548
        %550 = vrot.lane.b32.xlu0 %v530, 64
        %v551 = vpop.permute.xlu0 %550
        %552 = vrot.lane.b32.xlu0 %v533, 64
        %v553 = vpop.permute.xlu0 %552
        %vm554 = vcmask 261120
        %v556 = vsel %vm554, %v322, %v484
        %v558 = vsel %vm554, %v323, %v486
        %v560 = vsel %vm554, %v324, %v488
        %v562 = vsel %vm554, %v325, %v490
        %v564 = vsel %vm554, %v326, %v492
        %v566 = vsel %vm554, %v327, %v494
        %v568 = vsel %vm554, %v328, %v496
        %v570 = vsel %vm554, %v329, %v498
        %v572 = vsel %vm554, %v330, %v500
        %v574 = vsel %vm554, %v331, %v502
        %vm575 = vcmask 523264
        %v577 = vsel %vm575, %v556, %v535
        %v579 = vsel %vm575, %v558, %v537
        %v581 = vsel %vm575, %v560, %v539
        %v583 = vsel %vm575, %v562, %v541
        %v585 = vsel %vm575, %v564, %v543
        %v587 = vsel %vm575, %v566, %v545
        %v589 = vsel %vm575, %v568, %v547
        %v591 = vsel %vm575, %v570, %v549
        %v593 = vsel %vm575, %v572, %v551
        %v595 = vsel %vm575, %v574, %v553
        %604 = vrot.lane.b32.xlu0 %v579, 96
        %v605 = vpop.permute.xlu0 %604
        %606 = vrot.lane.b32.xlu0 %v581, 96
        %v607 = vpop.permute.xlu0 %606
        %608 = vrot.lane.b32.xlu0 %v583, 96
        %v609 = vpop.permute.xlu0 %608
        %610 = vrot.lane.b32.xlu0 %v585, 96
        %v611 = vpop.permute.xlu0 %610
        %612 = vrot.lane.b32.xlu0 %v587, 96
        %v613 = vpop.permute.xlu0 %612
        %614 = vrot.lane.b32.xlu0 %v589, 96
        %v615 = vpop.permute.xlu0 %614
        %616 = vrot.lane.b32.xlu0 %v591, 96
        %v617 = vpop.permute.xlu0 %616
        %618 = vrot.lane.b32.xlu0 %v593, 96
        %v619 = vpop.permute.xlu0 %618
        %621 = vrot.lane.b32.xlu0 %v581, 64
        %v622 = vpop.permute.xlu0 %621
        %623 = vrot.lane.b32.xlu0 %v583, 64
        %v624 = vpop.permute.xlu0 %623
        %625 = vrot.lane.b32.xlu0 %v585, 64
        %v626 = vpop.permute.xlu0 %625
        %627 = vrot.lane.b32.xlu0 %v587, 64
        %v628 = vpop.permute.xlu0 %627
        %629 = vrot.lane.b32.xlu0 %v589, 64
        %v630 = vpop.permute.xlu0 %629
        %631 = vrot.lane.b32.xlu0 %v591, 64
        %v632 = vpop.permute.xlu0 %631
        %633 = vrot.lane.b32.xlu0 %v593, 64
        %v634 = vpop.permute.xlu0 %633
        %635 = vrot.lane.b32.xlu0 %v595, 64
        %v636 = vpop.permute.xlu0 %635
        %vm637 = vcmask 785408
        %v639 = vsel %vm637, %v577, %v605
        %v642 = vsel %vm637, %v579, %v607
        %v645 = vsel %vm637, %v581, %v609
        %v648 = vsel %vm637, %v583, %v611
        %v651 = vsel %vm637, %v585, %v613
        %v654 = vsel %vm637, %v587, %v615
        %v657 = vsel %vm637, %v589, %v617
        %v660 = vsel %vm637, %v591, %v619
        %v663 = vsel %vm575, %v605, %v622
        %v666 = vsel %vm575, %v607, %v624
        %v669 = vsel %vm575, %v609, %v626
        %v672 = vsel %vm575, %v611, %v628
        %v675 = vsel %vm575, %v613, %v630
        %v678 = vsel %vm575, %v615, %v632
        %v681 = vsel %vm575, %v617, %v634
        %v684 = vsel %vm575, %v619, %v636
        %v687 = vsel %vm554, %v622, 0
        %v689 = vsel %vm554, %v624, 0
        %v691 = vsel %vm554, %v626, 0
        %v693 = vsel %vm554, %v628, 0
        %v695 = vsel %vm554, %v630, 0
        %v697 = vsel %vm554, %v632, 0
        %v699 = vsel %vm554, %v634, 0
        %v701 = vsel %vm554, %v636, 0
        %v703 = vld [vmem:[%s1] sm:$0xf]
        %v704 = vld [vmem:[%s1 + $0x4] sm:$0xf]
        %v705 = vld [vmem:[%s1 + $0x8] sm:$0xf]
        %v706 = vld [vmem:[%s1 + $0xc] sm:$0xf]
        %v707 = vld [vmem:[%s1 + $0x10] sm:$0xf]
        %v708 = vld [vmem:[%s1 + $0x14] sm:$0xf]
        %v709 = vld [vmem:[%s1 + $0x18] sm:$0xf]
        %v710 = vld [vmem:[%s1 + $0x1c] sm:$0xf]
        %v711 = vld [vmem:[%s1 + $0x20] sm:$0xf]
        %v712 = vld [vmem:[%s1 + $0x24] sm:$0xf]
        %v713 = vld [vmem:[%s1 + $0x28] sm:$0xf]
        %v714 = vld [vmem:[%s1 + $0x2c] sm:$0xf]
        %v715 = vld [vmem:[%s1 + $0x30] sm:$0xf]
        %v716 = vld [vmem:[%s1 + $0x34] sm:$0xf]
        %v717 = vld [vmem:[%s1 + $0x38] sm:$0xf]
        %v718 = vld [vmem:[%s1 + $0x3c] sm:$0xf]
        %v719 = vld [vmem:[%s1 + $0x40] sm:$0xf]
        %v720 = vld [vmem:[%s1 + $0x44] sm:$0xf]
        %v721 = vld [vmem:[%s1 + $0x48] sm:$0xf]
        %v722 = vld [vmem:[%s1 + $0x4c] sm:$0xf]
        %v723 = vld [vmem:[%s1 + $0x50] sm:$0xf]
        %v724 = vld [vmem:[%s1 + $0x54] sm:$0xf]
        %v725 = vld [vmem:[%s1 + $0x58] sm:$0xf]
        %v726 = vld [vmem:[%s1 + $0x5c] sm:$0xf]
        %v727 = vld [vmem:[%s1 + $0x60] sm:$0xf]
        %v728 = vld [vmem:[%s1 + $0x64] sm:$0xf]
        %v729 = vld [vmem:[%s1 + $0x68] sm:$0xf]
        %v730 = vld [vmem:[%s1 + $0x6c] sm:$0xf]
        %v731 = vld [vmem:[%s1 + $0x70] sm:$0xf]
        %v732 = vld [vmem:[%s1 + $0x74] sm:$0xf]
        %v733 = vld [vmem:[%s1 + $0x78] sm:$0xf]
        %v734 = vld [vmem:[%s1 + $0x7c] sm:$0xf]
        %v735 = vld [vmem:[%s1 + $0x80] sm:$0xf]
        %v736 = vld [vmem:[%s1 + $0x84] sm:$0xf]
        %v737 = vld [vmem:[%s1 + $0x88] sm:$0xf]
        %v738 = vld [vmem:[%s1 + $0x8c] sm:$0xf]
        %v739 = vld [vmem:[%s1 + $0x90] sm:$0xf]
        %v740 = vld [vmem:[%s1 + $0x94] sm:$0xf]
        %v741 = vld [vmem:[%s1 + $0x98] sm:$0xf]
        %v742 = vld [vmem:[%s1 + $0x9c] sm:$0xf]
        %v743 = vld [vmem:[%s1 + $0xa0] sm:$0xf]
        %v744 = vld [vmem:[%s1 + $0xa4] sm:$0xf]
        %v745 = vld [vmem:[%s1 + $0xa8] sm:$0xf]
        %v746 = vld [vmem:[%s1 + $0xac] sm:$0xf]
        %v747 = vld [vmem:[%s1 + $0xb0] sm:$0xf]
        %v748 = vld [vmem:[%s1 + $0xb4] sm:$0xf]
        %v749 = vld [vmem:[%s1 + $0xb8] sm:$0xf]
        %v750 = vld [vmem:[%s1 + $0xbc] sm:$0xf]
        %v799 = vunpack.c.l.b16 %v703
        %v800 = vunpack.c.l.b16 %v704
        %v801 = vunpack.c.l.b16 %v705
        %v802 = vunpack.c.l.b16 %v706
        %v803 = vunpack.c.l.b16 %v707
        %v804 = vunpack.c.l.b16 %v708
        %v805 = vunpack.c.l.b16 %v709
        %v806 = vunpack.c.l.b16 %v710
        %v807 = vunpack.c.l.b16 %v711
        %v808 = vunpack.c.l.b16 %v712
        %v809 = vunpack.c.l.b16 %v713
        %v810 = vunpack.c.l.b16 %v714
        %v811 = vunpack.c.l.b16 %v715
        %v812 = vunpack.c.l.b16 %v716
        %v813 = vunpack.c.l.b16 %v717
        %v814 = vunpack.c.l.b16 %v718
        %v815 = vunpack.c.l.b16 %v719
        %v816 = vunpack.c.l.b16 %v720
        %v817 = vunpack.c.l.b16 %v721
        %v818 = vunpack.c.l.b16 %v722
        %v819 = vunpack.c.l.b16 %v723
        %v820 = vunpack.c.l.b16 %v724
        %v821 = vunpack.c.l.b16 %v725
        %v822 = vunpack.c.l.b16 %v726
        %v823 = vunpack.c.l.b16 %v727
        %v824 = vunpack.c.l.b16 %v728
        %v825 = vunpack.c.l.b16 %v729
        %v826 = vunpack.c.l.b16 %v730
        %v827 = vunpack.c.l.b16 %v731
        %v828 = vunpack.c.l.b16 %v732
        %v829 = vunpack.c.l.b16 %v733
        %v830 = vunpack.c.l.b16 %v734
        %v831 = vunpack.c.l.b16 %v735
        %v832 = vunpack.c.l.b16 %v736
        %v833 = vunpack.c.l.b16 %v737
        %v834 = vunpack.c.l.b16 %v738
        %v835 = vunpack.c.l.b16 %v739
        %v836 = vunpack.c.l.b16 %v740
        %v837 = vunpack.c.l.b16 %v741
        %v838 = vunpack.c.l.b16 %v742
        %v839 = vunpack.c.l.b16 %v743
        %v840 = vunpack.c.l.b16 %v744
        %v841 = vunpack.c.l.b16 %v745
        %v842 = vunpack.c.l.b16 %v746
        %v843 = vunpack.c.l.b16 %v747
        %v844 = vunpack.c.l.b16 %v748
        %v845 = vunpack.c.l.b16 %v749
        %v846 = vunpack.c.l.b16 %v750
        %v847 = vpack.c.b16 %v800, %v799
        %v848 = vpack.c.b16 %v802, %v801
        %v849 = vpack.c.b16 %v804, %v803
        %v850 = vpack.c.b16 %v806, %v805
        %v851 = vpack.c.b16 %v808, %v807
        %v852 = vpack.c.b16 %v810, %v809
        %v853 = vpack.c.b16 %v812, %v811
        %v854 = vpack.c.b16 %v814, %v813
        %v855 = vpack.c.b16 %v816, %v815
        %v856 = vpack.c.b16 %v818, %v817
        %v857 = vpack.c.b16 %v820, %v819
        %v858 = vpack.c.b16 %v822, %v821
        %v859 = vpack.c.b16 %v824, %v823
        %v860 = vpack.c.b16 %v826, %v825
        %v861 = vpack.c.b16 %v828, %v827
        %v862 = vpack.c.b16 %v830, %v829
        %v863 = vpack.c.b16 %v832, %v831
        %v864 = vpack.c.b16 %v834, %v833
        %v865 = vpack.c.b16 %v836, %v835
        %v866 = vpack.c.b16 %v838, %v837
        %v867 = vpack.c.b16 %v840, %v839
        %v868 = vpack.c.b16 %v842, %v841
        %v869 = vpack.c.b16 %v844, %v843
        %v870 = vpack.c.b16 %v846, %v845
        %895 = vmatprep.subr.bf16.mxu0 0
        %896 = vmatpush1.bf16.msra.mxu0 %v847
        %897 = vmatprep.subr.bf16.mxu0 0
        %898 = vmatpush1.bf16.msra.mxu0 %v848
        %899 = vmatprep.subr.bf16.mxu0 0
        %900 = vmatpush1.bf16.msra.mxu0 %v849
        %901 = vmatprep.subr.bf16.mxu0 0
        %902 = vmatpush1.bf16.msra.mxu0 %v850
        %903 = vmatprep.subr.bf16.mxu0 0
        %904 = vmatpush1.bf16.msra.mxu0 %v851
        %905 = vmatprep.subr.bf16.mxu0 0
        %906 = vmatpush1.bf16.msra.mxu0 %v852
        %907 = vmatprep.subr.bf16.mxu0 0
        %908 = vmatpush1.bf16.msra.mxu0 %v853
        %909 = vmatprep.subr.bf16.mxu0 0
        %910 = vmatpush1.bf16.msra.mxu0 %v854
        %911 = vmatprep.subr.bf16.mxu0 0
        %912 = vmatpush1.bf16.msra.mxu0 %v855
        %913 = vmatprep.subr.bf16.mxu0 0
        %914 = vmatpush1.bf16.msra.mxu0 %v856
        %915 = vmatprep.subr.bf16.mxu0 0
        %916 = vmatpush1.bf16.msra.mxu0 %v857
        %917 = vmatprep.subr.bf16.mxu0 0
        %918 = vmatpush1.bf16.msra.mxu0 %v858
        %919 = vmatprep.subr.bf16.mxu0 0
        %920 = vmatpush1.bf16.msra.mxu0 %v859
        %921 = vmatprep.subr.bf16.mxu0 0
        %922 = vmatpush1.bf16.msra.mxu0 %v860
        %923 = vmatprep.subr.bf16.mxu0 0
        %924 = vmatpush1.bf16.msra.mxu0 %v861
        %925 = vmatprep.subr.bf16.mxu0 0
        %926 = vmatpush1.bf16.msra.mxu0 %v862
        %927 = vmatprep.mubr.bf16.mxu0 %v663
        %928 = vmatmul.mubr.bf16.gmra.mrb[0].mxu0 %v639
        %v929 = vpop.f32.mrb[0].mxu0
        %v930 = vadd.f32 0.0, %v929
        %v931 = vpop.f32.mrb[0].mxu0
        %v932 = vpop.f32.mrb[0].mxu0
        %v933 = vadd.f32 0.0, %v932
        %v934 = vpop.f32.mrb[0].mxu0
        %935 = vmatprep.mubr.bf16.mxu0 %v666
        %936 = vmatmul.mubr.bf16.gmra.mrb[0].mxu0 %v642
        %v937 = vpop.f32.mrb[0].mxu0
        %v938 = vadd.f32 0.0, %v937
        %v939 = vpop.f32.mrb[0].mxu0
        %v940 = vpop.f32.mrb[0].mxu0
        %v941 = vadd.f32 0.0, %v940
        %v942 = vpop.f32.mrb[0].mxu0
        %943 = vmatprep.mubr.bf16.mxu0 %v669
        %944 = vmatmul.mubr.bf16.gmra.mrb[0].mxu0 %v645
        %v945 = vpop.f32.mrb[0].mxu0
        %v946 = vadd.f32 0.0, %v945
        %v947 = vpop.f32.mrb[0].mxu0
        %v948 = vpop.f32.mrb[0].mxu0
        %v949 = vadd.f32 0.0, %v948
        %v950 = vpop.f32.mrb[0].mxu0
        %951 = vmatprep.mubr.bf16.mxu0 %v672
        %952 = vmatmul.mubr.bf16.gmra.mrb[0].mxu0 %v648
        %v953 = vpop.f32.mrb[0].mxu0
        %v954 = vadd.f32 0.0, %v953
        %v955 = vpop.f32.mrb[0].mxu0
        %v956 = vpop.f32.mrb[0].mxu0
        %v957 = vadd.f32 0.0, %v956
        %v958 = vpop.f32.mrb[0].mxu0
        %959 = vmatprep.mubr.bf16.mxu0 %v675
        %960 = vmatmul.mubr.bf16.gmra.mrb[0].mxu0 %v651
        %v961 = vpop.f32.mrb[0].mxu0
        %v962 = vadd.f32 0.0, %v961
        %v963 = vpop.f32.mrb[0].mxu0
        %v964 = vpop.f32.mrb[0].mxu0
        %v965 = vadd.f32 0.0, %v964
        %v966 = vpop.f32.mrb[0].mxu0
        %967 = vmatprep.mubr.bf16.mxu0 %v678
        %968 = vmatmul.mubr.bf16.gmra.mrb[0].mxu0 %v654
        %v969 = vpop.f32.mrb[0].mxu0
        %v970 = vadd.f32 0.0, %v969
        %v971 = vpop.f32.mrb[0].mxu0
        %v972 = vpop.f32.mrb[0].mxu0
        %v973 = vadd.f32 0.0, %v972
        %v974 = vpop.f32.mrb[0].mxu0
        %975 = vmatprep.mubr.bf16.mxu0 %v681
        %976 = vmatmul.mubr.bf16.gmra.mrb[0].mxu0 %v657
        %v977 = vpop.f32.mrb[0].mxu0
        %v978 = vadd.f32 0.0, %v977
        %v979 = vpop.f32.mrb[0].mxu0
        %v980 = vpop.f32.mrb[0].mxu0
        %v981 = vadd.f32 0.0, %v980
        %v982 = vpop.f32.mrb[0].mxu0
        %983 = vmatprep.mubr.bf16.mxu0 %v684
        %984 = vmatmul.mubr.bf16.gmra.mrb[0].mxu0 %v660
        %v985 = vpop.f32.mrb[0].mxu0
        %v986 = vadd.f32 0.0, %v985
        %v987 = vpop.f32.mrb[0].mxu0
        %v988 = vpop.f32.mrb[0].mxu0
        %v989 = vadd.f32 0.0, %v988
        %v990 = vpop.f32.mrb[0].mxu0
        %991 = vdwg.mxu0
        %992 = vmatprep.subr.bf16.mxu0 0
        %993 = vmatpush1.bf16.msra.mxu0 %v863
        %994 = vmatprep.subr.bf16.mxu0 0
        %995 = vmatpush1.bf16.msra.mxu0 %v864
        %996 = vmatprep.subr.bf16.mxu0 0
        %997 = vmatpush1.bf16.msra.mxu0 %v865
        %998 = vmatprep.subr.bf16.mxu0 0
        %999 = vmatpush1.bf16.msra.mxu0 %v866
        %1000 = vmatprep.subr.bf16.mxu0 0
        %1001 = vmatpush1.bf16.msra.mxu0 %v867
        %1002 = vmatprep.subr.bf16.mxu0 0
        %1003 = vmatpush1.bf16.msra.mxu0 %v868
        %1004 = vmatprep.subr.bf16.mxu0 0
        %1005 = vmatpush1.bf16.msra.mxu0 %v869
        %1006 = vmatprep.subr.bf16.mxu0 0
        %1007 = vmatpush1.bf16.msra.mxu0 %v870
        %1008 = vmatprep.subr.bf16.mxu0 0
        %1009 = vmatpush1.bf16.msra.mxu0 0
        %1010 = vmatprep.subr.bf16.mxu0 0
        %1011 = vmatpush1.bf16.msra.mxu0 0
        %1012 = vmatprep.subr.bf16.mxu0 0
        %1013 = vmatpush1.bf16.msra.mxu0 0
        %1014 = vmatprep.subr.bf16.mxu0 0
        %1015 = vmatpush1.bf16.msra.mxu0 0
        %1016 = vmatprep.subr.bf16.mxu0 0
        %1017 = vmatpush1.bf16.msra.mxu0 0
        %1018 = vmatprep.subr.bf16.mxu0 0
        %1019 = vmatpush1.bf16.msra.mxu0 0
        %1020 = vmatprep.subr.bf16.mxu0 0
        %1021 = vmatpush1.bf16.msra.mxu0 0
        %1022 = vmatprep.subr.bf16.mxu0 0
        %1023 = vmatpush1.bf16.msra.mxu0 0
        %1024 = vmatprep.mubr.bf16.mxu0 0
        %1025 = vmatmul.mubr.bf16.gmra.mrb[0].mxu0 %v687
        %v1026 = vpop.f32.mrb[0].mxu0
        %v1027 = vadd.f32 %v930, %v1026
        %v1028 = vpop.f32.mrb[0].mxu0
        %v1029 = vpop.f32.mrb[0].mxu0
        %v1030 = vadd.f32 %v933, %v1029
        %v1031 = vpop.f32.mrb[0].mxu0
        %1032 = vmatprep.mubr.bf16.mxu0 0
        %1033 = vmatmul.mubr.bf16.gmra.mrb[0].mxu0 %v689
        %v1034 = vpop.f32.mrb[0].mxu0
        %v1035 = vadd.f32 %v938, %v1034
        %v1036 = vpop.f32.mrb[0].mxu0
        %v1037 = vpop.f32.mrb[0].mxu0
        %v1038 = vadd.f32 %v941, %v1037
        %v1039 = vpop.f32.mrb[0].mxu0
        %1040 = vmatprep.mubr.bf16.mxu0 0
        %1041 = vmatmul.mubr.bf16.gmra.mrb[0].mxu0 %v691
        %v1042 = vpop.f32.mrb[0].mxu0
        %v1043 = vadd.f32 %v946, %v1042
        %v1044 = vpop.f32.mrb[0].mxu0
        %v1045 = vpop.f32.mrb[0].mxu0
        %v1046 = vadd.f32 %v949, %v1045
        %v1047 = vpop.f32.mrb[0].mxu0
        %1048 = vmatprep.mubr.bf16.mxu0 0
        %1049 = vmatmul.mubr.bf16.gmra.mrb[0].mxu0 %v693
        %v1050 = vpop.f32.mrb[0].mxu0
        %v1051 = vadd.f32 %v954, %v1050
        %v1052 = vpop.f32.mrb[0].mxu0
        %v1053 = vpop.f32.mrb[0].mxu0
        %v1054 = vadd.f32 %v957, %v1053
        %v1055 = vpop.f32.mrb[0].mxu0
        %1056 = vmatprep.mubr.bf16.mxu0 0
        %1057 = vmatmul.mubr.bf16.gmra.mrb[0].mxu0 %v695
        %v1058 = vpop.f32.mrb[0].mxu0
        %v1059 = vadd.f32 %v962, %v1058
        %v1060 = vpop.f32.mrb[0].mxu0
        %v1061 = vpop.f32.mrb[0].mxu0
        %v1062 = vadd.f32 %v965, %v1061
        %v1063 = vpop.f32.mrb[0].mxu0
        %1064 = vmatprep.mubr.bf16.mxu0 0
        %1065 = vmatmul.mubr.bf16.gmra.mrb[0].mxu0 %v697
        %v1066 = vpop.f32.mrb[0].mxu0
        %v1067 = vadd.f32 %v970, %v1066
        %v1068 = vpop.f32.mrb[0].mxu0
        %v1069 = vpop.f32.mrb[0].mxu0
        %v1070 = vadd.f32 %v973, %v1069
        %v1071 = vpop.f32.mrb[0].mxu0
        %1072 = vmatprep.mubr.bf16.mxu0 0
        %1073 = vmatmul.mubr.bf16.gmra.mrb[0].mxu0 %v699
        %v1074 = vpop.f32.mrb[0].mxu0
        %v1075 = vadd.f32 %v978, %v1074
        %v1076 = vpop.f32.mrb[0].mxu0
        %v1077 = vpop.f32.mrb[0].mxu0
        %v1078 = vadd.f32 %v981, %v1077
        %v1079 = vpop.f32.mrb[0].mxu0
        %1080 = vmatprep.mubr.bf16.mxu0 0
        %1081 = vmatmul.mubr.bf16.gmra.mrb[0].mxu0 %v701
        %v1082 = vpop.f32.mrb[0].mxu0
        %v1083 = vadd.f32 %v986, %v1082
        %v1084 = vpop.f32.mrb[0].mxu0
        %v1085 = vpop.f32.mrb[0].mxu0
        %v1086 = vadd.f32 %v989, %v1085
        %v1087 = vpop.f32.mrb[0].mxu0
        %1088 = vdwg.mxu0
        %v1089 = vpack.c.bf16 %v1030, %v1027
        %v1090 = vpack.c.bf16 %v1038, %v1035
        %v1091 = vpack.c.bf16 %v1046, %v1043
        %v1092 = vpack.c.bf16 %v1054, %v1051
        %v1093 = vpack.c.bf16 %v1062, %v1059
        %v1094 = vpack.c.bf16 %v1070, %v1067
        %v1095 = vpack.c.bf16 %v1078, %v1075
        %v1096 = vpack.c.bf16 %v1086, %v1083
        %v1097 = vld [vmem:[%s2] sm:$0xf]
        %v1098 = vld [vmem:[%s2 + $0x4] sm:$0xf]
        %v1099 = vld [vmem:[%s2 + $0x8] sm:$0xf]
        %v1100 = vld [vmem:[%s2 + $0xc] sm:$0xf]
        %v1101 = vld [vmem:[%s2 + $0x10] sm:$0xf]
        %v1102 = vld [vmem:[%s2 + $0x14] sm:$0xf]
        %v1103 = vld [vmem:[%s2 + $0x18] sm:$0xf]
        %v1104 = vld [vmem:[%s2 + $0x1c] sm:$0xf]
        %v1105 = vld [vmem:[%s2 + $0x20] sm:$0xf]
        %v1106 = vld [vmem:[%s2 + $0x24] sm:$0xf]
        %v1107 = vld [vmem:[%s2 + $0x28] sm:$0xf]
        %v1108 = vld [vmem:[%s2 + $0x2c] sm:$0xf]
        %v1109 = vld [vmem:[%s2 + $0x30] sm:$0xf]
        %v1110 = vld [vmem:[%s2 + $0x34] sm:$0xf]
        %v1111 = vld [vmem:[%s2 + $0x38] sm:$0xf]
        %v1112 = vld [vmem:[%s2 + $0x3c] sm:$0xf]
        %v1113 = vld [vmem:[%s3] sm:$0x1]
        %v1115 = vlaneseq
        %v1116 = vshrl.u32 %v1115, 7
        %v1117 = vsub.s32 0, %v1116
        %v1118 = vrot.slane %v1113, %v1117
        %v1136 = vunpack.c.l.b16 %v1097
        %v1137 = vunpack.c.l.b16 %v1098
        %v1138 = vunpack.c.l.b16 %v1099
        %v1139 = vunpack.c.l.b16 %v1100
        %v1140 = vunpack.c.l.b16 %v1101
        %v1141 = vunpack.c.l.b16 %v1102
        %v1142 = vunpack.c.l.b16 %v1103
        %v1143 = vunpack.c.l.b16 %v1104
        %v1144 = vunpack.c.l.b16 %v1105
        %v1145 = vunpack.c.l.b16 %v1106
        %v1146 = vunpack.c.l.b16 %v1107
        %v1147 = vunpack.c.l.b16 %v1108
        %v1148 = vunpack.c.l.b16 %v1109
        %v1149 = vunpack.c.l.b16 %v1110
        %v1150 = vunpack.c.l.b16 %v1111
        %v1151 = vunpack.c.l.b16 %v1112
        %v1152 = vpack.c.b16 %v1137, %v1136
        %v1153 = vpack.c.b16 %v1139, %v1138
        %v1154 = vpack.c.b16 %v1141, %v1140
        %v1155 = vpack.c.b16 %v1143, %v1142
        %v1156 = vpack.c.b16 %v1145, %v1144
        %v1157 = vpack.c.b16 %v1147, %v1146
        %v1158 = vpack.c.b16 %v1149, %v1148
        %v1159 = vpack.c.b16 %v1151, %v1150
        %1168 = vmatprep.subr.bf16.mxu0 0
        %1169 = vmatpush1.bf16.msra.mxu0 %v1152
        %1170 = vmatprep.subr.bf16.mxu0 0
        %1171 = vmatpush1.bf16.msra.mxu0 %v1153
        %1172 = vmatprep.subr.bf16.mxu0 0
        %1173 = vmatpush1.bf16.msra.mxu0 %v1154
        %1174 = vmatprep.subr.bf16.mxu0 0
        %1175 = vmatpush1.bf16.msra.mxu0 %v1155
        %1176 = vmatprep.subr.bf16.mxu0 0
        %1177 = vmatpush1.bf16.msra.mxu0 %v1156
        %1178 = vmatprep.subr.bf16.mxu0 0
        %1179 = vmatpush1.bf16.msra.mxu0 %v1157
        %1180 = vmatprep.subr.bf16.mxu0 0
        %1181 = vmatpush1.bf16.msra.mxu0 %v1158
        %1182 = vmatprep.subr.bf16.mxu0 0
        %1183 = vmatpush1.bf16.msra.mxu0 %v1159
        %1184 = vmatprep.subr.bf16.mxu0 0
        %1185 = vmatpush1.bf16.msra.mxu0 0
        %1186 = vmatprep.subr.bf16.mxu0 0
        %1187 = vmatpush1.bf16.msra.mxu0 0
        %1188 = vmatprep.subr.bf16.mxu0 0
        %1189 = vmatpush1.bf16.msra.mxu0 0
        %1190 = vmatprep.subr.bf16.mxu0 0
        %1191 = vmatpush1.bf16.msra.mxu0 0
        %1192 = vmatprep.subr.bf16.mxu0 0
        %1193 = vmatpush1.bf16.msra.mxu0 0
        %1194 = vmatprep.subr.bf16.mxu0 0
        %1195 = vmatpush1.bf16.msra.mxu0 0
        %1196 = vmatprep.subr.bf16.mxu0 0
        %1197 = vmatpush1.bf16.msra.mxu0 0
        %1198 = vmatprep.subr.bf16.mxu0 0
        %1199 = vmatpush1.bf16.msra.mxu0 0
        %1200 = vmatprep.mubr.bf16.mxu0 0
        %1201 = vmatmul.mubr.bf16.gmra.mrb[0].mxu0 %v1089
        %v1202 = vpop.f32.mrb[0].mxu0
        %v1203 = vadd.f32 %v1118, %v1202
        %v1204 = vpop.f32.mrb[0].mxu0
        %v1205 = vpop.f32.mrb[0].mxu0
        %v1206 = vadd.f32 %v1118, %v1205
        %v1207 = vpop.f32.mrb[0].mxu0
        %1208 = vmatprep.mubr.bf16.mxu0 0
        %1209 = vmatmul.mubr.bf16.gmra.mrb[0].mxu0 %v1090
        %v1210 = vpop.f32.mrb[0].mxu0
        %v1211 = vadd.f32 %v1118, %v1210
        %v1212 = vpop.f32.mrb[0].mxu0
        %v1213 = vpop.f32.mrb[0].mxu0
        %v1214 = vadd.f32 %v1118, %v1213
        %v1215 = vpop.f32.mrb[0].mxu0
        %1216 = vmatprep.mubr.bf16.mxu0 0
        %1217 = vmatmul.mubr.bf16.gmra.mrb[0].mxu0 %v1091
        %v1218 = vpop.f32.mrb[0].mxu0
        %v1219 = vadd.f32 %v1118, %v1218
        %v1220 = vpop.f32.mrb[0].mxu0
        %v1221 = vpop.f32.mrb[0].mxu0
        %v1222 = vadd.f32 %v1118, %v1221
        %v1223 = vpop.f32.mrb[0].mxu0
        %1224 = vmatprep.mubr.bf16.mxu0 0
        %1225 = vmatmul.mubr.bf16.gmra.mrb[0].mxu0 %v1092
        %v1226 = vpop.f32.mrb[0].mxu0
        %v1227 = vadd.f32 %v1118, %v1226
        %v1228 = vpop.f32.mrb[0].mxu0
        %v1229 = vpop.f32.mrb[0].mxu0
        %v1230 = vadd.f32 %v1118, %v1229
        %v1231 = vpop.f32.mrb[0].mxu0
        %1232 = vmatprep.mubr.bf16.mxu0 0
        %1233 = vmatmul.mubr.bf16.gmra.mrb[0].mxu0 %v1093
        %v1234 = vpop.f32.mrb[0].mxu0
        %v1235 = vadd.f32 %v1118, %v1234
        %v1236 = vpop.f32.mrb[0].mxu0
        %v1237 = vpop.f32.mrb[0].mxu0
        %v1238 = vadd.f32 %v1118, %v1237
        %v1239 = vpop.f32.mrb[0].mxu0
        %1240 = vmatprep.mubr.bf16.mxu0 0
        %1241 = vmatmul.mubr.bf16.gmra.mrb[0].mxu0 %v1094
        %v1242 = vpop.f32.mrb[0].mxu0
        %v1243 = vadd.f32 %v1118, %v1242
        %v1244 = vpop.f32.mrb[0].mxu0
        %v1245 = vpop.f32.mrb[0].mxu0
        %v1246 = vadd.f32 %v1118, %v1245
        %v1247 = vpop.f32.mrb[0].mxu0
        %1248 = vmatprep.mubr.bf16.mxu0 0
        %1249 = vmatmul.mubr.bf16.gmra.mrb[0].mxu0 %v1095
        %v1250 = vpop.f32.mrb[0].mxu0
        %v1251 = vadd.f32 %v1118, %v1250
        %v1252 = vpop.f32.mrb[0].mxu0
        %v1253 = vpop.f32.mrb[0].mxu0
        %v1254 = vadd.f32 %v1118, %v1253
        %v1255 = vpop.f32.mrb[0].mxu0
        %1256 = vmatprep.mubr.bf16.mxu0 0
        %1257 = vmatmul.mubr.bf16.gmra.mrb[0].mxu0 %v1096
        %v1258 = vpop.f32.mrb[0].mxu0
        %v1259 = vadd.f32 %v1118, %v1258
        %v1260 = vpop.f32.mrb[0].mxu0
        %v1261 = vpop.f32.mrb[0].mxu0
        %v1262 = vadd.f32 %v1118, %v1261
        %v1263 = vpop.f32.mrb[0].mxu0
        %1264 = vdwg.mxu0
        %v1265 = vpack.c.bf16 %v1206, %v1203
        %v1266 = vpack.c.bf16 %v1214, %v1211
        %v1267 = vpack.c.bf16 %v1222, %v1219
        %v1268 = vpack.c.bf16 %v1230, %v1227
        %v1269 = vpack.c.bf16 %v1238, %v1235
        %v1270 = vpack.c.bf16 %v1246, %v1243
        %v1271 = vpack.c.bf16 %v1254, %v1251
        %v1272 = vpack.c.bf16 %v1262, %v1259
        %v1273 = vld [vmem:[%s4] sm:$0xf]
        %v1274 = vld [vmem:[%s4 + $0x4] sm:$0xf]
        %v1275 = vld [vmem:[%s4 + $0x8] sm:$0xf]
        %v1276 = vld [vmem:[%s4 + $0xc] sm:$0xf]
        %v1277 = vld [vmem:[%s4 + $0x10] sm:$0xf]
        %v1278 = vld [vmem:[%s4 + $0x14] sm:$0xf]
        %v1279 = vld [vmem:[%s4 + $0x18] sm:$0xf]
        %v1280 = vld [vmem:[%s4 + $0x1c] sm:$0xf]
        %v1281 = vld [vmem:[%s4 + $0x20] sm:$0xf]
        %v1282 = vld [vmem:[%s4 + $0x24] sm:$0xf]
        %v1283 = vld [vmem:[%s4 + $0x28] sm:$0xf]
        %v1284 = vld [vmem:[%s4 + $0x2c] sm:$0xf]
        %v1285 = vld [vmem:[%s4 + $0x30] sm:$0xf]
        %v1286 = vld [vmem:[%s4 + $0x34] sm:$0xf]
        %v1287 = vld [vmem:[%s4 + $0x38] sm:$0xf]
        %v1288 = vld [vmem:[%s4 + $0x3c] sm:$0xf]
        %v1289 = vld [vmem:[%s5] sm:$0x1]
        %v1291 = vlaneseq
        %v1292 = vshrl.u32 %v1291, 7
        %v1293 = vsub.s32 0, %v1292
        %v1294 = vrot.slane %v1289, %v1293
        %v1312 = vunpack.c.l.b16 %v1273
        %v1313 = vunpack.c.l.b16 %v1274
        %v1314 = vunpack.c.l.b16 %v1275
        %v1315 = vunpack.c.l.b16 %v1276
        %v1316 = vunpack.c.l.b16 %v1277
        %v1317 = vunpack.c.l.b16 %v1278
        %v1318 = vunpack.c.l.b16 %v1279
        %v1319 = vunpack.c.l.b16 %v1280
        %v1320 = vunpack.c.l.b16 %v1281
        %v1321 = vunpack.c.l.b16 %v1282
        %v1322 = vunpack.c.l.b16 %v1283
        %v1323 = vunpack.c.l.b16 %v1284
        %v1324 = vunpack.c.l.b16 %v1285
        %v1325 = vunpack.c.l.b16 %v1286
        %v1326 = vunpack.c.l.b16 %v1287
        %v1327 = vunpack.c.l.b16 %v1288
        %v1328 = vpack.c.b16 %v1313, %v1312
        %v1329 = vpack.c.b16 %v1315, %v1314
        %v1330 = vpack.c.b16 %v1317, %v1316
        %v1331 = vpack.c.b16 %v1319, %v1318
        %v1332 = vpack.c.b16 %v1321, %v1320
        %v1333 = vpack.c.b16 %v1323, %v1322
        %v1334 = vpack.c.b16 %v1325, %v1324
        %v1335 = vpack.c.b16 %v1327, %v1326
        %1344 = vmatprep.subr.bf16.mxu0 0
        %1345 = vmatpush1.bf16.msra.mxu0 %v1328
        %1346 = vmatprep.subr.bf16.mxu0 0
        %1347 = vmatpush1.bf16.msra.mxu0 %v1329
        %1348 = vmatprep.subr.bf16.mxu0 0
        %1349 = vmatpush1.bf16.msra.mxu0 %v1330
        %1350 = vmatprep.subr.bf16.mxu0 0
        %1351 = vmatpush1.bf16.msra.mxu0 %v1331
        %1352 = vmatprep.subr.bf16.mxu0 0
        %1353 = vmatpush1.bf16.msra.mxu0 %v1332
        %1354 = vmatprep.subr.bf16.mxu0 0
        %1355 = vmatpush1.bf16.msra.mxu0 %v1333
        %1356 = vmatprep.subr.bf16.mxu0 0
        %1357 = vmatpush1.bf16.msra.mxu0 %v1334
        %1358 = vmatprep.subr.bf16.mxu0 0
        %1359 = vmatpush1.bf16.msra.mxu0 %v1335
        %1360 = vmatprep.subr.bf16.mxu0 0
        %1361 = vmatpush1.bf16.msra.mxu0 0
        %1362 = vmatprep.subr.bf16.mxu0 0
        %1363 = vmatpush1.bf16.msra.mxu0 0
        %1364 = vmatprep.subr.bf16.mxu0 0
        %1365 = vmatpush1.bf16.msra.mxu0 0
        %1366 = vmatprep.subr.bf16.mxu0 0
        %1367 = vmatpush1.bf16.msra.mxu0 0
        %1368 = vmatprep.subr.bf16.mxu0 0
        %1369 = vmatpush1.bf16.msra.mxu0 0
        %1370 = vmatprep.subr.bf16.mxu0 0
        %1371 = vmatpush1.bf16.msra.mxu0 0
        %1372 = vmatprep.subr.bf16.mxu0 0
        %1373 = vmatpush1.bf16.msra.mxu0 0
        %1374 = vmatprep.subr.bf16.mxu0 0
        %1375 = vmatpush1.bf16.msra.mxu0 0
        %1376 = vmatprep.mubr.bf16.mxu0 0
        %1377 = vmatmul.mubr.bf16.gmra.mrb[0].mxu0 %v1265
        %v1378 = vpop.f32.mrb[0].mxu0
        %v1379 = vadd.f32 %v1294, %v1378
        %v1380 = vpop.f32.mrb[0].mxu0
        %v1381 = vpop.f32.mrb[0].mxu0
        %v1382 = vadd.f32 %v1294, %v1381
        %v1383 = vpop.f32.mrb[0].mxu0
        %1384 = vmatprep.mubr.bf16.mxu0 0
        %1385 = vmatmul.mubr.bf16.gmra.mrb[0].mxu0 %v1266
        %v1386 = vpop.f32.mrb[0].mxu0
        %v1387 = vadd.f32 %v1294, %v1386
        %v1388 = vpop.f32.mrb[0].mxu0
        %v1389 = vpop.f32.mrb[0].mxu0
        %v1390 = vadd.f32 %v1294, %v1389
        %v1391 = vpop.f32.mrb[0].mxu0
        %1392 = vmatprep.mubr.bf16.mxu0 0
        %1393 = vmatmul.mubr.bf16.gmra.mrb[0].mxu0 %v1267
        %v1394 = vpop.f32.mrb[0].mxu0
        %v1395 = vadd.f32 %v1294, %v1394
        %v1396 = vpop.f32.mrb[0].mxu0
        %v1397 = vpop.f32.mrb[0].mxu0
        %v1398 = vadd.f32 %v1294, %v1397
        %v1399 = vpop.f32.mrb[0].mxu0
        %1400 = vmatprep.mubr.bf16.mxu0 0
        %1401 = vmatmul.mubr.bf16.gmra.mrb[0].mxu0 %v1268
        %v1402 = vpop.f32.mrb[0].mxu0
        %v1403 = vadd.f32 %v1294, %v1402
        %v1404 = vpop.f32.mrb[0].mxu0
        %v1405 = vpop.f32.mrb[0].mxu0
        %v1406 = vadd.f32 %v1294, %v1405
        %v1407 = vpop.f32.mrb[0].mxu0
        %1408 = vmatprep.mubr.bf16.mxu0 0
        %1409 = vmatmul.mubr.bf16.gmra.mrb[0].mxu0 %v1269
        %v1410 = vpop.f32.mrb[0].mxu0
        %v1411 = vadd.f32 %v1294, %v1410
        %v1412 = vpop.f32.mrb[0].mxu0
        %v1413 = vpop.f32.mrb[0].mxu0
        %v1414 = vadd.f32 %v1294, %v1413
        %v1415 = vpop.f32.mrb[0].mxu0
        %1416 = vmatprep.mubr.bf16.mxu0 0
        %1417 = vmatmul.mubr.bf16.gmra.mrb[0].mxu0 %v1270
        %v1418 = vpop.f32.mrb[0].mxu0
        %v1419 = vadd.f32 %v1294, %v1418
        %v1420 = vpop.f32.mrb[0].mxu0
        %v1421 = vpop.f32.mrb[0].mxu0
        %v1422 = vadd.f32 %v1294, %v1421
        %v1423 = vpop.f32.mrb[0].mxu0
        %1424 = vmatprep.mubr.bf16.mxu0 0
        %1425 = vmatmul.mubr.bf16.gmra.mrb[0].mxu0 %v1271
        %v1426 = vpop.f32.mrb[0].mxu0
        %v1427 = vadd.f32 %v1294, %v1426
        %v1428 = vpop.f32.mrb[0].mxu0
        %v1429 = vpop.f32.mrb[0].mxu0
        %v1430 = vadd.f32 %v1294, %v1429
        %v1431 = vpop.f32.mrb[0].mxu0
        %1432 = vmatprep.mubr.bf16.mxu0 0
        %1433 = vmatmul.mubr.bf16.gmra.mrb[0].mxu0 %v1272
        %v1434 = vpop.f32.mrb[0].mxu0
        %v1435 = vadd.f32 %v1294, %v1434
        %v1436 = vpop.f32.mrb[0].mxu0
        %v1437 = vpop.f32.mrb[0].mxu0
        %v1438 = vadd.f32 %v1294, %v1437
        %v1439 = vpop.f32.mrb[0].mxu0
        %1440 = vdwg.mxu0
        %v1441 = vmul.f32 %v1379, %v1379
        %v1442 = vmul.f32 %v1382, %v1382
        %v1443 = vmul.f32 %v1387, %v1387
        %v1444 = vmul.f32 %v1390, %v1390
        %v1445 = vmul.f32 %v1395, %v1395
        %v1446 = vmul.f32 %v1398, %v1398
        %v1447 = vmul.f32 %v1403, %v1403
        %v1448 = vmul.f32 %v1406, %v1406
        %v1449 = vmul.f32 %v1411, %v1411
        %v1450 = vmul.f32 %v1414, %v1414
        %v1451 = vmul.f32 %v1419, %v1419
        %v1452 = vmul.f32 %v1422, %v1422
        %v1453 = vmul.f32 %v1427, %v1427
        %v1454 = vmul.f32 %v1430, %v1430
        %v1455 = vmul.f32 %v1435, %v1435
        %v1456 = vmul.f32 %v1438, %v1438
        %1457 = vadd.xlane.f32.xlu0 %v1441
        %v1458 = vpop.xlane.xlu0 %1457
        %1459 = vadd.xlane.f32.xlu0 %v1442
        %v1460 = vpop.xlane.xlu0 %1459
        %1461 = vadd.xlane.f32.xlu0 %v1443
        %v1462 = vpop.xlane.xlu0 %1461
        %1463 = vadd.xlane.f32.xlu0 %v1444
        %v1464 = vpop.xlane.xlu0 %1463
        %1465 = vadd.xlane.f32.xlu0 %v1445
        %v1466 = vpop.xlane.xlu0 %1465
        %1467 = vadd.xlane.f32.xlu0 %v1446
        %v1468 = vpop.xlane.xlu0 %1467
        %1469 = vadd.xlane.f32.xlu0 %v1447
        %v1470 = vpop.xlane.xlu0 %1469
        %1471 = vadd.xlane.f32.xlu0 %v1448
        %v1472 = vpop.xlane.xlu0 %1471
        %1473 = vadd.xlane.f32.xlu0 %v1449
        %v1474 = vpop.xlane.xlu0 %1473
        %1475 = vadd.xlane.f32.xlu0 %v1450
        %v1476 = vpop.xlane.xlu0 %1475
        %1477 = vadd.xlane.f32.xlu0 %v1451
        %v1478 = vpop.xlane.xlu0 %1477
        %1479 = vadd.xlane.f32.xlu0 %v1452
        %v1480 = vpop.xlane.xlu0 %1479
        %1481 = vadd.xlane.f32.xlu0 %v1453
        %v1482 = vpop.xlane.xlu0 %1481
        %1483 = vadd.xlane.f32.xlu0 %v1454
        %v1484 = vpop.xlane.xlu0 %1483
        %1485 = vadd.xlane.f32.xlu0 %v1455
        %v1486 = vpop.xlane.xlu0 %1485
        %1487 = vadd.xlane.f32.xlu0 %v1456
        %v1488 = vpop.xlane.xlu0 %1487
        %v1489 = vmax.f32 %v1458, 1e-24
        %v1490 = vmax.f32 %v1460, 1e-24
        %v1491 = vmax.f32 %v1462, 1e-24
        %v1492 = vmax.f32 %v1464, 1e-24
        %v1493 = vmax.f32 %v1466, 1e-24
        %v1494 = vmax.f32 %v1468, 1e-24
        %v1495 = vmax.f32 %v1470, 1e-24
        %v1496 = vmax.f32 %v1472, 1e-24
        %v1497 = vmax.f32 %v1474, 1e-24
        %v1498 = vmax.f32 %v1476, 1e-24
        %v1499 = vmax.f32 %v1478, 1e-24
        %v1500 = vmax.f32 %v1480, 1e-24
        %v1501 = vmax.f32 %v1482, 1e-24
        %v1502 = vmax.f32 %v1484, 1e-24
        %v1503 = vmax.f32 %v1486, 1e-24
        %v1504 = vmax.f32 %v1488, 1e-24
        %v1505 = vrsqrt.pop %v1489
        %v1506 = vrsqrt.pop %v1490
        %v1507 = vrsqrt.pop %v1491
        %v1508 = vrsqrt.pop %v1492
        %v1509 = vrsqrt.pop %v1493
        %v1510 = vrsqrt.pop %v1494
        %v1511 = vrsqrt.pop %v1495
        %v1512 = vrsqrt.pop %v1496
        %v1513 = vrsqrt.pop %v1497
        %v1514 = vrsqrt.pop %v1498
        %v1515 = vrsqrt.pop %v1499
        %v1516 = vrsqrt.pop %v1500
        %v1517 = vrsqrt.pop %v1501
        %v1518 = vrsqrt.pop %v1502
        %v1519 = vrsqrt.pop %v1503
        %v1520 = vrsqrt.pop %v1504
        %v1521 = vmul.f32 %v1379, %v1505
        %v1522 = vmul.f32 %v1382, %v1506
        %v1523 = vmul.f32 %v1387, %v1507
        %v1524 = vmul.f32 %v1390, %v1508
        %v1525 = vmul.f32 %v1395, %v1509
        %v1526 = vmul.f32 %v1398, %v1510
        %v1527 = vmul.f32 %v1403, %v1511
        %v1528 = vmul.f32 %v1406, %v1512
        %v1529 = vmul.f32 %v1411, %v1513
        %v1530 = vmul.f32 %v1414, %v1514
        %v1531 = vmul.f32 %v1419, %v1515
        %v1532 = vmul.f32 %v1422, %v1516
        %v1533 = vmul.f32 %v1427, %v1517
        %v1534 = vmul.f32 %v1430, %v1518
        %v1535 = vmul.f32 %v1435, %v1519
        %v1536 = vmul.f32 %v1438, %v1520
        %1537 = vst [vmem:[%s244] sm:$0xff] %v1521
        %1538 = vst [vmem:[%s244 + $0x8] sm:$0xff] %v1522
        %1539 = vst [vmem:[%s244 + $0x10] sm:$0xff] %v1523
        %1540 = vst [vmem:[%s244 + $0x18] sm:$0xff] %v1524
        %1541 = vst [vmem:[%s244 + $0x20] sm:$0xff] %v1525
        %1542 = vst [vmem:[%s244 + $0x28] sm:$0xff] %v1526
        %1543 = vst [vmem:[%s244 + $0x30] sm:$0xff] %v1527
        %1544 = vst [vmem:[%s244 + $0x38] sm:$0xff] %v1528
        %1545 = vst [vmem:[%s244 + $0x40] sm:$0xff] %v1529
        %1546 = vst [vmem:[%s244 + $0x48] sm:$0xff] %v1530
        %1547 = vst [vmem:[%s244 + $0x50] sm:$0xff] %v1531
        %1548 = vst [vmem:[%s244 + $0x58] sm:$0xff] %v1532
        %1549 = vst [vmem:[%s244 + $0x60] sm:$0xff] %v1533
        %1550 = vst [vmem:[%s244 + $0x68] sm:$0xff] %v1534
        %1551 = vst [vmem:[%s244 + $0x70] sm:$0xff] %v1535
        %1552 = vst [vmem:[%s244 + $0x78] sm:$0xff] %v1536
        %s1553 = sand.u32 %s159, 1
        %s1554 = scalar_lea.sflag [#allocation3], %s1553
        %s1555 = sand.u32 %s159, 1
        %s1556 = smul.addr %s1555, 128
        %s1557 = scalar_lea.vmem [#allocation2], %s1556
        // Predicated region
        $region45: #{projection_head_forward.5} parent=43 // pred_check
          %p1558 = pneg %p169
        $region46: #{projection_head_forward.5} parent=43 // pred_check_branch
          %1560 = sbr.rel (%p1558) target = $region48
        $region47: #{projection_head_forward.5} parent=43 // pred_region
          %s1561 = smul.u32 16, %s20
          %s1563 = ssub.s32 2048, 2048
          %1564 = vsyncadd %s1554, %s1563
          %s1565 = smul.addr %s1561, 128
          %s1566 = scalar_lea.hbm %s6, %s1565
          %s1567 = sshll.u32 %s1557, 4
          %s1568 = int_to_ptr.vmem [resolvable:$true] %s1567
          %1573 = dma.vmem_to_hbm [thread:$0]  %s1568, 2048, %s1566, %s1554, 128, 128, 8
        $region48: #{projection_head_forward.5} parent=43 // pred_fallthru
          _
      $region44: #{projection_head_forward.5} parent=5 // pred_fallthru
        _
      %p1574 = scmp.le.s32.totalorder 2, %s15
      // Predicated region
      $region49: #{projection_head_forward.5} parent=5 // pred_check
        %p1575 = pneg %p1574
      $region50: #{projection_head_forward.5} parent=5 // pred_check_branch
        %1577 = sbr.rel (%p1575) target = $region52
      $region51: #{projection_head_forward.5} parent=5 // pred_region
        %s1578 = ssub.s32 %s15, 2
        // Predicated region
        $region53: #{projection_head_forward.5} parent=51 // pred_check
          %p1579 = pneg %p175
        $region54: #{projection_head_forward.5} parent=51 // pred_check_branch
          %1581 = sbr.rel (%p1579) target = $region56
        $region55: #{projection_head_forward.5} parent=51 // pred_region
          %s1582 = sand.u32 %s160, 1
          %s1583 = scalar_lea.sflag [#allocation3], %s1582
          %s1584 = sand.u32 %s160, 1
          %s1585 = smul.addr %s1584, 128
          %s1586 = scalar_lea.vmem [#allocation2], %s1585
          %1587 = dma.done %s1583, 2048
        $region56: #{projection_head_forward.5} parent=51 // pred_fallthru
          _
      $region52: #{projection_head_forward.5} parent=5 // pred_fallthru
        _
    $region6: #{projection_head_forward.5} parent=1 // loop_footer
      %s19 = sadd.s32 1, %s15
    $region7: #{projection_head_forward.5} parent=1 // loop_footer_branch
      %14 = sbr.rel target = $region3
    $region8: #{projection_head_forward.5} parent=1 // loop_exit
      _
    %1588 = vsyncpa [#allocation3], 1
    %s1589 = scalar_lea.sflag [#allocation3], 1
    %1590 = vsyncpa %s1589, 1

</llo_original>
